<compile_context>
chip_gen: v6e
topology: v6e:2x2x1
jax: 0.10.0
libtpu: 0.0.40
codegen_flags: <defaults>
</compile_context>

<pallas_src>
import jax
import jax.numpy as jnp
from jax import lax
from jax.experimental import pallas as pl
from jax.experimental.pallas import tpu as pltpu

FEAT = 78          # channel dim fixed by the module (MLP is 4*78 -> 78 -> classes)
HID_PAD = 128      # lane-dense padding of the 78-wide hidden dim
NUM_CLASSES = 4    # args.num_classes (synthetic choice for the demo)
OUT_PAD = 128      # lane-dense padding of the num_classes output dim


def _round_up(x, m):
    return ((x + m - 1) // m) * m


def _vmem_capacity_bytes():
    try:
        cap = int(getattr(pltpu.get_tpu_info(), "vmem_capacity_bytes", 0))
        if cap > 0:
            return cap
    except Exception:
        pass
    return 128 * 1024 * 1024   # v5e / v6e default


def _choose_tiles(batch, seq, itemsize, block_batch=None, block_seq=None):
    cap = _vmem_capacity_bytes()
    input_budget = (cap * 3) // 8          # ~24 MiB on 64 MiB parts, ~48 MiB on 128 MiB parts
    tb_ceiling = 1024 if cap >= (96 << 20) else 512
    c_pad = _round_up(FEAT, 8)             # physical sublane padding 78 -> 80

    def per_row_bytes(seq_tile):           # A + B, double-buffered, physical VMEM tile
        return 2 * 2 * c_pad * _round_up(seq_tile, 128) * itemsize

    if block_seq is None:
        # Prefer one full-seq block while a decent batch tile still fits VMEM.
        if input_budget // per_row_bytes(seq) >= min(256, _round_up(batch, 8)):
            block_seq = seq
        else:
            target_tb = max(8, min(256, tb_ceiling, _round_up(batch, 8)))
            st = input_budget // (2 * 2 * c_pad * itemsize * target_tb)
            block_seq = min(max(128, (st // 128) * 128), _round_up(seq, 128))

    if block_batch is None:
        tb = input_budget // per_row_bytes(block_seq)
        tb = max(8, min((tb // 8) * 8, tb_ceiling, _round_up(batch, 8)))
        # Rebalance so the clipped last batch block wastes little work.
        n_blocks = pl.cdiv(batch, tb)
        block_batch = max(8, _round_up(pl.cdiv(batch, n_blocks), 8))
    return int(block_batch), int(block_seq)


def _make_kernel(seq_len, block_seq, needs_mask):
    inv_seq = 1.0 / float(seq_len)

    def kernel(a_ref, b_ref, w1_ref, b1_ref, w2_ref, b2_ref, out_ref,
               a_sum, a_mx, b_sum, b_mx):
        # a_ref, b_ref : (TB, 78, block_seq)  native NCL layout
        # w1_ref       : (4, 78, 128)  row blocks of Linear(312, 78), out-dim zero-padded
        # b1_ref       : (1, 128)   w2_ref : (128, 128)   b2_ref : (1, 128)
        # a_sum/a_mx/b_sum/b_mx : (TB, 78) f32 running pools (VMEM scratch)
        k = pl.program_id(1)

        @pl.when(k == 0)
        def _init():
            a_sum[...] = jnp.zeros_like(a_sum)
            b_sum[...] = jnp.zeros_like(b_sum)
            a_mx[...] = jnp.full_like(a_mx, -jnp.inf)
            b_mx[...] = jnp.full_like(b_mx, -jnp.inf)

        a_blk = a_ref[...]
        b_blk = b_ref[...]
        if needs_mask:
            # Tail seq block: exclude out-of-range positions from both pools.
            pos = k * block_seq + lax.broadcasted_iota(jnp.int32, (1, 1, block_seq), 2)
            valid = pos < seq_len
            zero = jnp.asarray(0, a_blk.dtype)
            ninf = jnp.asarray(-jnp.inf, a_blk.dtype)
            a_s, a_m = jnp.where(valid, a_blk, zero), jnp.where(valid, a_blk, ninf)
            b_s, b_m = jnp.where(valid, b_blk, zero), jnp.where(valid, b_blk, ninf)
        else:
            a_s = a_m = a_blk
            b_s = b_m = b_blk

        # Running pools over the lane (seq) axis, accumulated in f32 without
        # materializing a full-tile f32 copy of the input block.
        a_sum[...] += jnp.sum(a_s, axis=2, dtype=jnp.float32)
        b_sum[...] += jnp.sum(b_s, axis=2, dtype=jnp.float32)
        a_mx[...] = jnp.maximum(a_mx[...], jnp.max(a_m, axis=2).astype(jnp.float32))
        b_mx[...] = jnp.maximum(b_mx[...], jnp.max(b_m, axis=2).astype(jnp.float32))

        @pl.when(k == pl.num_programs(1) - 1)
        def _finalize():
            a_avg = a_sum[...] * inv_seq
            b_avg = b_sum[...] * inv_seq
            # Concat-free first Linear: V @ W1 expressed as four K=78 MXU passes.
            # TODO(synk): on v6e/v7x these could fuse into one K=512 pass by packing
            # the pooled vectors into a (TB, 512) scratch; skipped since the kernel
            # is HBM-bound and the MXU is idle either way.
            h = jnp.tanh(
                jnp.dot(a_avg, w1_ref[0], preferred_element_type=jnp.float32)
                + jnp.dot(a_mx[...], w1_ref[1], preferred_element_type=jnp.float32)
                + jnp.dot(b_avg, w1_ref[2], preferred_element_type=jnp.float32)
                + jnp.dot(b_mx[...], w1_ref[3], preferred_element_type=jnp.float32)
                + b1_ref[...])
            out = jnp.dot(h, w2_ref[...], preferred_element_type=jnp.float32) + b2_ref[...]
            out_ref[...] = out.astype(out_ref.dtype)

    return kernel


def prediction_forward(A, B, w1, b1, w2, b2, *, block_batch=None, block_seq=None):
    """A, B: (batch, 78, seq) in native PyTorch NCL layout.
    w1: (312, 78), b1: (78,), w2: (78, num_classes), b2: (num_classes,)
    (weights stored as (in_features, out_features), i.e. transposed PyTorch)."""
    batch, C, seq = A.shape
    assert C == FEAT and B.shape == A.shape
    num_classes = w2.shape[1]
    itemsize = jnp.dtype(A.dtype).itemsize

    block_batch, block_seq = _choose_tiles(batch, seq, itemsize, block_batch, block_seq)
    if block_seq != seq:
        assert block_seq % 128 == 0, "seq tiles must be 128-lane aligned"
    needs_mask = (block_seq != seq) and (seq % block_seq != 0)

    nb = pl.cdiv(batch, block_batch)
    nk = pl.cdiv(seq, block_seq)
    batch_pad = nb * block_batch          # only the (tiny) output is padded

    # Weight prep (tiny, done once): split w1 into four (78, 78) row blocks and
    # zero-pad the hidden/output dims to lane-dense 128-wide tiles.  Padded
    # rows/cols are zero so they contribute nothing (tanh(0)=0, zero w2 rows).
    w1_blocks = w1.astype(jnp.float32).reshape(4, FEAT, FEAT)
    w1_p = jnp.zeros((4, FEAT, HID_PAD), jnp.float32).at[:, :, :FEAT].set(w1_blocks)
    b1_p = jnp.zeros((1, HID_PAD), jnp.float32).at[0, :FEAT].set(
        b1.reshape(-1).astype(jnp.float32))
    w2_p = jnp.zeros((HID_PAD, OUT_PAD), jnp.float32).at[:FEAT, :num_classes].set(
        w2.astype(jnp.float32))
    b2_p = jnp.zeros((1, OUT_PAD), jnp.float32).at[0, :num_classes].set(
        b2.reshape(-1).astype(jnp.float32))

    # Generation-aware VMEM accounting (physical, i.e. sublane/lane padded tiles).
    cap = _vmem_capacity_bytes()
    in_bytes = 2 * 2 * block_batch * _round_up(FEAT, 8) * _round_up(block_seq, 128) * itemsize
    scratch_bytes = 4 * block_batch * _round_up(FEAT, 128) * 4
    weight_bytes = 2 * 4 * (4 * FEAT * HID_PAD + HID_PAD * OUT_PAD + HID_PAD + OUT_PAD)
    out_bytes = 2 * block_batch * OUT_PAD * 4
    est = in_bytes + scratch_bytes + weight_bytes + out_bytes
    vmem_limit = int(min(max(2 * est, 32 << 20), (cap * 3) // 4))

    kernel = _make_kernel(seq, block_seq, needs_mask)

    # TODO(synk): on v7x (2 TensorCores/chip) the batch axis may need
    # pltpu.CORE_PARALLEL / pl.core_map to actually split across both cores.
    out_padded = pl.pallas_call(
        kernel,
        out_shape=jax.ShapeDtypeStruct((batch_pad, OUT_PAD), jnp.float32),
        grid=(nb, nk),
        in_specs=[
            pl.BlockSpec((block_batch, FEAT, block_seq), lambda i, k: (i, 0, k)),  # A
            pl.BlockSpec((block_batch, FEAT, block_seq), lambda i, k: (i, 0, k)),  # B
            pl.BlockSpec((4, FEAT, HID_PAD), lambda i, k: (0, 0, 0)),              # w1 blocks
            pl.BlockSpec((1, HID_PAD), lambda i, k: (0, 0)),                       # b1
            pl.BlockSpec((HID_PAD, OUT_PAD), lambda i, k: (0, 0)),                 # w2
            pl.BlockSpec((1, OUT_PAD), lambda i, k: (0, 0)),                       # b2
        ],
        out_specs=pl.BlockSpec((block_batch, OUT_PAD), lambda i, k: (i, 0)),
        scratch_shapes=[
            pltpu.VMEM((block_batch, FEAT), jnp.float32),   # running A sum
            pltpu.VMEM((block_batch, FEAT), jnp.float32),   # running A max
            pltpu.VMEM((block_batch, FEAT), jnp.float32),   # running B sum
            pltpu.VMEM((block_batch, FEAT), jnp.float32),   # running B max
        ],
        compiler_params=pltpu.CompilerParams(
            dimension_semantics=("parallel", "arbitrary"),
            vmem_limit_bytes=vmem_limit,
        ),
    )(A, B, w1_p, b1_p, w2_p, b2_p)

    return out_padded[:batch, :num_classes]


def init_params(key):
    # Deterministic synthetic init (PyTorch-Linear-like uniform fan-in scaling).
    k1, k2, k3, k4 = jax.random.split(key, 4)
    in1, out1 = 4 * FEAT, FEAT
    in2, out2 = FEAT, NUM_CLASSES
    bound1 = 1.0 / (in1 ** 0.5)
    bound2 = 1.0 / (in2 ** 0.5)
    # Stored as (in_features, out_features) == transposed PyTorch layout.
    w1 = jax.random.uniform(k1, (in1, out1), jnp.float32, -bound1, bound1)
    b1 = jax.random.uniform(k2, (out1,), jnp.float32, -bound1, bound1)
    w2 = jax.random.uniform(k3, (in2, out2), jnp.float32, -bound2, bound2)
    b2 = jax.random.uniform(k4, (out2,), jnp.float32, -bound2, bound2)
    return w1, b1, w2, b2


def reference_forward(A, B, w1, b1, w2, b2):
    a_avg = jnp.mean(A, axis=-1)
    a_max = jnp.max(A, axis=-1)
    b_avg = jnp.mean(B, axis=-1)
    b_max = jnp.max(B, axis=-1)
    V = jnp.concatenate([a_avg, a_max, b_avg, b_max], axis=-1)
    h = jnp.tanh(V @ w1 + b1)
    return h @ w2 + b2


if __name__ == "__main__":
    key = jax.random.PRNGKey(0)
    ka, kb, kp, kc, kd = jax.random.split(key, 5)
    w1, b1, w2, b2 = init_params(kp)

    # Case 1: tiny shapes, single full-seq block.
    batch, seq = 2, 16
    A = jax.random.normal(ka, (batch, FEAT, seq), jnp.float32)
    B = jax.random.normal(kb, (batch, FEAT, seq), jnp.float32)
    out = jax.block_until_ready(prediction_forward(A, B, w1, b1, w2, b2))
    ref = reference_forward(A, B, w1, b1, w2, b2)
    assert out.shape == (batch, NUM_CLASSES)
    assert jnp.allclose(out, ref, atol=1e-4, rtol=1e-4)

    # Case 2: ragged seq with an explicit 128-wide seq tile -> exercises the
    # running sum/max accumulator grid axis and the masked tail block.
    batch2, seq2 = 10, 272
    A2 = jax.random.normal(kc, (batch2, FEAT, seq2), jnp.float32)
    B2 = jax.random.normal(kd, (batch2, FEAT, seq2), jnp.float32)
    out2 = jax.block_until_ready(
        prediction_forward(A2, B2, w1, b1, w2, b2, block_seq=128))
    ref2 = reference_forward(A2, B2, w1, b1, w2, b2)
    assert out2.shape == (batch2, NUM_CLASSES)
    assert jnp.allclose(out2, ref2, atol=1e-4, rtol=1e-4)

    print("KERNEL_OK")
</pallas_src>

<mosaic_0001>
module attributes {stable_mosaic.version = 11 : i64} {
  func.func @kernel(%arg0: i32, %arg1: i32, %arg2: memref<8x78x16xf32, #tpu.memory_space<vmem>>, %arg3: memref<8x78x16xf32, #tpu.memory_space<vmem>>, %arg4: memref<4x78x128xf32, #tpu.memory_space<vmem>>, %arg5: memref<1x128xf32, #tpu.memory_space<vmem>>, %arg6: memref<128x128xf32, #tpu.memory_space<vmem>>, %arg7: memref<1x128xf32, #tpu.memory_space<vmem>>, %arg8: memref<8x128xf32, #tpu.memory_space<vmem>>, %arg9: memref<8x78xf32, #tpu.memory_space<vmem>>, %arg10: memref<8x78xf32, #tpu.memory_space<vmem>>, %arg11: memref<8x78xf32, #tpu.memory_space<vmem>>, %arg12: memref<8x78xf32, #tpu.memory_space<vmem>>) attributes {dimension_semantics = [#tpu.dimension_semantics<parallel>, #tpu.dimension_semantics<arbitrary>], iteration_bounds = array<i64: 1, 1>, scalar_prefetch = 0 : i64, scratch_operands = 4 : i64, tpu.core_type = #tpu.core_type<tc>, window_params = [{transform_indices = @transform_0, window_bounds = array<i64: 8, 78, 16>}, {transform_indices = @transform_1, window_bounds = array<i64: 8, 78, 16>}, {pipeline_mode = #tpu.pipeline_mode<synchronous>, transform_indices = @transform_2, window_bounds = array<i64: 4, 78, 128>}, {pipeline_mode = #tpu.pipeline_mode<synchronous>, transform_indices = @transform_3, window_bounds = array<i64: 1, 128>}, {pipeline_mode = #tpu.pipeline_mode<synchronous>, transform_indices = @transform_4, window_bounds = array<i64: 128, 128>}, {pipeline_mode = #tpu.pipeline_mode<synchronous>, transform_indices = @transform_5, window_bounds = array<i64: 1, 128>}, {transform_indices = @transform_6, window_bounds = array<i64: 8, 128>}]} {
    %c0_i32 = arith.constant 0 : i32
    %0 = arith.cmpi eq, %arg1, %c0_i32 : i32
    %1 = arith.extui %0 : i1 to i32
    %c0_i32_0 = arith.constant 0 : i32
    %2 = arith.cmpi ne, %1, %c0_i32_0 : i32
    scf.if %2 {
      %cst_27 = arith.constant 0.000000e+00 : f32
      %24 = vector.broadcast %cst_27 : f32 to vector<8x78xf32>
      %c0_28 = arith.constant 0 : index
      %c0_29 = arith.constant 0 : index
      %25 = vector.load %arg9[%c0_28, %c0_29] : memref<8x78xf32, #tpu.memory_space<vmem>>, vector<8x78xf32>
      tpu.vector_store %arg9[%c0_28, %c0_29], %24 {strides = array<i32>} : memref<8x78xf32, #tpu.memory_space<vmem>>, vector<8x78xf32>,
      %cst_30 = arith.constant 0.000000e+00 : f32
      %26 = vector.broadcast %cst_30 : f32 to vector<8x78xf32>
      %c0_31 = arith.constant 0 : index
      %c0_32 = arith.constant 0 : index
      %27 = vector.load %arg11[%c0_31, %c0_32] : memref<8x78xf32, #tpu.memory_space<vmem>>, vector<8x78xf32>
      tpu.vector_store %arg11[%c0_31, %c0_32], %26 {strides = array<i32>} : memref<8x78xf32, #tpu.memory_space<vmem>>, vector<8x78xf32>,
      %cst_33 = arith.constant 0xFF800000 : f32
      %28 = vector.broadcast %cst_33 : f32 to vector<8x78xf32>
      %c0_34 = arith.constant 0 : index
      %c0_35 = arith.constant 0 : index
      %29 = vector.load %arg10[%c0_34, %c0_35] : memref<8x78xf32, #tpu.memory_space<vmem>>, vector<8x78xf32>
      tpu.vector_store %arg10[%c0_34, %c0_35], %28 {strides = array<i32>} : memref<8x78xf32, #tpu.memory_space<vmem>>, vector<8x78xf32>,
      %cst_36 = arith.constant 0xFF800000 : f32
      %30 = vector.broadcast %cst_36 : f32 to vector<8x78xf32>
      %c0_37 = arith.constant 0 : index
      %c0_38 = arith.constant 0 : index
      %31 = vector.load %arg12[%c0_37, %c0_38] : memref<8x78xf32, #tpu.memory_space<vmem>>, vector<8x78xf32>
      tpu.vector_store %arg12[%c0_37, %c0_38], %30 {strides = array<i32>} : memref<8x78xf32, #tpu.memory_space<vmem>>, vector<8x78xf32>,
    } else {
    }
    %c0 = arith.constant 0 : index
    %c0_1 = arith.constant 0 : index
    %c0_2 = arith.constant 0 : index
    %3 = vector.load %arg2[%c0, %c0_1, %c0_2] : memref<8x78x16xf32, #tpu.memory_space<vmem>>, vector<8x78x16xf32>
    %c0_3 = arith.constant 0 : index
    %c0_4 = arith.constant 0 : index
    %c0_5 = arith.constant 0 : index
    %4 = vector.load %arg3[%c0_3, %c0_4, %c0_5] : memref<8x78x16xf32, #tpu.memory_space<vmem>>, vector<8x78x16xf32>
    %c0_6 = arith.constant 0 : index
    %c0_7 = arith.constant 0 : index
    %5 = vector.load %arg9[%c0_6, %c0_7] : memref<8x78xf32, #tpu.memory_space<vmem>>, vector<8x78xf32>
    %cst = arith.constant dense<0.000000e+00> : vector<8x78xf32>
    %6 = vector.multi_reduction <add>, %3, %cst [2] : vector<8x78x16xf32> to vector<8x78xf32>
    %7 = arith.addf %5, %6 : vector<8x78xf32>
    %c0_8 = arith.constant 0 : index
    %c0_9 = arith.constant 0 : index
    %8 = vector.load %arg9[%c0_8, %c0_9] : memref<8x78xf32, #tpu.memory_space<vmem>>, vector<8x78xf32>
    tpu.vector_store %arg9[%c0_8, %c0_9], %7 {strides = array<i32>} : memref<8x78xf32, #tpu.memory_space<vmem>>, vector<8x78xf32>,
    %c0_10 = arith.constant 0 : index
    %c0_11 = arith.constant 0 : index
    %9 = vector.load %arg11[%c0_10, %c0_11] : memref<8x78xf32, #tpu.memory_space<vmem>>, vector<8x78xf32>
    %cst_12 = arith.constant dense<0.000000e+00> : vector<8x78xf32>
    %10 = vector.multi_reduction <add>, %4, %cst_12 [2] : vector<8x78x16xf32> to vector<8x78xf32>
    %11 = arith.addf %9, %10 : vector<8x78xf32>
    %c0_13 = arith.constant 0 : index
    %c0_14 = arith.constant 0 : index
    %12 = vector.load %arg11[%c0_13, %c0_14] : memref<8x78xf32, #tpu.memory_space<vmem>>, vector<8x78xf32>
    tpu.vector_store %arg11[%c0_13, %c0_14], %11 {strides = array<i32>} : memref<8x78xf32, #tpu.memory_space<vmem>>, vector<8x78xf32>,
    %c0_15 = arith.constant 0 : index
    %c0_16 = arith.constant 0 : index
    %13 = vector.load %arg10[%c0_15, %c0_16] : memref<8x78xf32, #tpu.memory_space<vmem>>, vector<8x78xf32>
    %cst_17 = arith.constant dense<0xFF800000> : vector<8x78xf32>
    %14 = vector.multi_reduction <maximumf>, %3, %cst_17 [2] : vector<8x78x16xf32> to vector<8x78xf32>
    %15 = arith.maximumf %13, %14 : vector<8x78xf32>
    %c0_18 = arith.constant 0 : index
    %c0_19 = arith.constant 0 : index
    %16 = vector.load %arg10[%c0_18, %c0_19] : memref<8x78xf32, #tpu.memory_space<vmem>>, vector<8x78xf32>
    tpu.vector_store %arg10[%c0_18, %c0_19], %15 {strides = array<i32>} : memref<8x78xf32, #tpu.memory_space<vmem>>, vector<8x78xf32>,
    %c0_20 = arith.constant 0 : index
    %c0_21 = arith.constant 0 : index
    %17 = vector.load %arg12[%c0_20, %c0_21] : memref<8x78xf32, #tpu.memory_space<vmem>>, vector<8x78xf32>
    %cst_22 = arith.constant dense<0xFF800000> : vector<8x78xf32>
    %18 = vector.multi_reduction <maximumf>, %4, %cst_22 [2] : vector<8x78x16xf32> to vector<8x78xf32>
    %19 = arith.maximumf %17, %18 : vector<8x78xf32>
    %c0_23 = arith.constant 0 : index
    %c0_24 = arith.constant 0 : index
    %20 = vector.load %arg12[%c0_23, %c0_24] : memref<8x78xf32, #tpu.memory_space<vmem>>, vector<8x78xf32>
    tpu.vector_store %arg12[%c0_23, %c0_24], %19 {strides = array<i32>} : memref<8x78xf32, #tpu.memory_space<vmem>>, vector<8x78xf32>,
    %c0_i32_25 = arith.constant 0 : i32
    %21 = arith.cmpi eq, %arg1, %c0_i32_25 : i32
    %22 = arith.extui %21 : i1 to i32
    %c0_i32_26 = arith.constant 0 : i32
    %23 = arith.cmpi ne, %22, %c0_i32_26 : i32
    scf.if %23 {
      %c0_27 = arith.constant 0 : index
      %c0_28 = arith.constant 0 : index
      %24 = vector.load %arg9[%c0_27, %c0_28] : memref<8x78xf32, #tpu.memory_space<vmem>>, vector<8x78xf32>
      %cst_29 = arith.constant 6.250000e-02 : f32
      %25 = vector.broadcast %cst_29 : f32 to vector<8x78xf32>
      %26 = arith.mulf %24, %25 : vector<8x78xf32>
      %c0_30 = arith.constant 0 : index
      %c0_31 = arith.constant 0 : index
      %27 = vector.load %arg11[%c0_30, %c0_31] : memref<8x78xf32, #tpu.memory_space<vmem>>, vector<8x78xf32>
      %cst_32 = arith.constant 6.250000e-02 : f32
      %28 = vector.broadcast %cst_32 : f32 to vector<8x78xf32>
      %29 = arith.mulf %27, %28 : vector<8x78xf32>
      %c0_33 = arith.constant 0 : index
      %c0_34 = arith.constant 0 : index
      %c0_35 = arith.constant 0 : index
      %30 = vector.load %arg4[%c0_33, %c0_34, %c0_35] : memref<4x78x128xf32, #tpu.memory_space<vmem>>, vector<1x78x128xf32>
      %31 = vector.shape_cast %30 : vector<1x78x128xf32> to vector<78x128xf32>
      %cst_36 = arith.constant dense<0.000000e+00> : vector<8x128xf32>
      %32 = tpu.matmul %26, %31, %cst_36 {dimension_numbers = #tpu.dot_dimension_numbers<[1], [0], [0], [1], [0, 0, 1, 1], [], []>} : vector<8x78xf32>, vector<78x128xf32>, vector<8x128xf32> -> vector<8x128xf32>
      %c0_37 = arith.constant 0 : index
      %c0_38 = arith.constant 0 : index
      %33 = vector.load %arg10[%c0_37, %c0_38] : memref<8x78xf32, #tpu.memory_space<vmem>>, vector<8x78xf32>
      %c1 = arith.constant 1 : index
      %c0_39 = arith.constant 0 : index
      %c0_40 = arith.constant 0 : index
      %34 = vector.load %arg4[%c1, %c0_39, %c0_40] : memref<4x78x128xf32, #tpu.memory_space<vmem>>, vector<1x78x128xf32>
      %35 = vector.shape_cast %34 : vector<1x78x128xf32> to vector<78x128xf32>
      %cst_41 = arith.constant dense<0.000000e+00> : vector<8x128xf32>
      %36 = tpu.matmul %33, %35, %cst_41 {dimension_numbers = #tpu.dot_dimension_numbers<[1], [0], [0], [1], [0, 0, 1, 1], [], []>} : vector<8x78xf32>, vector<78x128xf32>, vector<8x128xf32> -> vector<8x128xf32>
      %37 = arith.addf %32, %36 : vector<8x128xf32>
      %c2 = arith.constant 2 : index
      %c0_42 = arith.constant 0 : index
      %c0_43 = arith.constant 0 : index
      %38 = vector.load %arg4[%c2, %c0_42, %c0_43] : memref<4x78x128xf32, #tpu.memory_space<vmem>>, vector<1x78x128xf32>
      %39 = vector.shape_cast %38 : vector<1x78x128xf32> to vector<78x128xf32>
      %cst_44 = arith.constant dense<0.000000e+00> : vector<8x128xf32>
      %40 = tpu.matmul %29, %39, %cst_44 {dimension_numbers = #tpu.dot_dimension_numbers<[1], [0], [0], [1], [0, 0, 1, 1], [], []>} : vector<8x78xf32>, vector<78x128xf32>, vector<8x128xf32> -> vector<8x128xf32>
      %41 = arith.addf %37, %40 : vector<8x128xf32>
      %c0_45 = arith.constant 0 : index
      %c0_46 = arith.constant 0 : index
      %42 = vector.load %arg12[%c0_45, %c0_46] : memref<8x78xf32, #tpu.memory_space<vmem>>, vector<8x78xf32>
      %c3 = arith.constant 3 : index
      %c0_47 = arith.constant 0 : index
      %c0_48 = arith.constant 0 : index
      %43 = vector.load %arg4[%c3, %c0_47, %c0_48] : memref<4x78x128xf32, #tpu.memory_space<vmem>>, vector<1x78x128xf32>
      %44 = vector.shape_cast %43 : vector<1x78x128xf32> to vector<78x128xf32>
      %cst_49 = arith.constant dense<0.000000e+00> : vector<8x128xf32>
      %45 = tpu.matmul %42, %44, %cst_49 {dimension_numbers = #tpu.dot_dimension_numbers<[1], [0], [0], [1], [0, 0, 1, 1], [], []>} : vector<8x78xf32>, vector<78x128xf32>, vector<8x128xf32> -> vector<8x128xf32>
      %46 = arith.addf %41, %45 : vector<8x128xf32>
      %c0_50 = arith.constant 0 : index
      %c0_51 = arith.constant 0 : index
      %47 = vector.load %arg5[%c0_50, %c0_51] : memref<1x128xf32, #tpu.memory_space<vmem>>, vector<1x128xf32>
      %48 = vector.broadcast %47 : vector<1x128xf32> to vector<8x128xf32>
      %49 = arith.addf %46, %48 : vector<8x128xf32>
      %50 = math.tanh %49 : vector<8x128xf32>
      %c0_52 = arith.constant 0 : index
      %c0_53 = arith.constant 0 : index
      %51 = vector.load %arg6[%c0_52, %c0_53] : memref<128x128xf32, #tpu.memory_space<vmem>>, vector<128x128xf32>
      %cst_54 = arith.constant dense<0.000000e+00> : vector<8x128xf32>
      %52 = tpu.matmul %50, %51, %cst_54 {dimension_numbers = #tpu.dot_dimension_numbers<[1], [0], [0], [1], [0, 0, 1, 1], [], []>} : vector<8x128xf32>, vector<128x128xf32>, vector<8x128xf32> -> vector<8x128xf32>
      %c0_55 = arith.constant 0 : index
      %c0_56 = arith.constant 0 : index
      %53 = vector.load %arg7[%c0_55, %c0_56] : memref<1x128xf32, #tpu.memory_space<vmem>>, vector<1x128xf32>
      %54 = vector.broadcast %53 : vector<1x128xf32> to vector<8x128xf32>
      %55 = arith.addf %52, %54 : vector<8x128xf32>
      %c0_57 = arith.constant 0 : index
      %c0_58 = arith.constant 0 : index
      %56 = vector.load %arg8[%c0_57, %c0_58] : memref<8x128xf32, #tpu.memory_space<vmem>>, vector<8x128xf32>
      tpu.vector_store %arg8[%c0_57, %c0_58], %55 {strides = array<i32>} : memref<8x128xf32, #tpu.memory_space<vmem>>, vector<8x128xf32>,
    } else {
    }
    return
  }
  func.func @transform_0(%arg0: i32, %arg1: i32) -> (i32, i32, i32) {
    %c0_i32 = arith.constant 0 : i32
    %c0_i32_0 = arith.constant 0 : i32
    return %arg0, %c0_i32, %arg1 : i32, i32, i32
  }
  func.func @transform_1(%arg0: i32, %arg1: i32) -> (i32, i32, i32) {
    %c0_i32 = arith.constant 0 : i32
    %c0_i32_0 = arith.constant 0 : i32
    return %arg0, %c0_i32, %arg1 : i32, i32, i32
  }
  func.func @transform_2(%arg0: i32, %arg1: i32) -> (i32, i32, i32) {
    %c0_i32 = arith.constant 0 : i32
    %c0_i32_0 = arith.constant 0 : i32
    %c0_i32_1 = arith.constant 0 : i32
    %c0_i32_2 = arith.constant 0 : i32
    return %c0_i32, %c0_i32_0, %c0_i32_1 : i32, i32, i32
  }
  func.func @transform_3(%arg0: i32, %arg1: i32) -> (i32, i32) {
    %c0_i32 = arith.constant 0 : i32
    %c0_i32_0 = arith.constant 0 : i32
    %c0_i32_1 = arith.constant 0 : i32
    return %c0_i32, %c0_i32_0 : i32, i32
  }
  func.func @transform_4(%arg0: i32, %arg1: i32) -> (i32, i32) {
    %c0_i32 = arith.constant 0 : i32
    %c0_i32_0 = arith.constant 0 : i32
    %c0_i32_1 = arith.constant 0 : i32
    return %c0_i32, %c0_i32_0 : i32, i32
  }
  func.func @transform_5(%arg0: i32, %arg1: i32) -> (i32, i32) {
    %c0_i32 = arith.constant 0 : i32
    %c0_i32_0 = arith.constant 0 : i32
    %c0_i32_1 = arith.constant 0 : i32
    return %c0_i32, %c0_i32_0 : i32, i32
  }
  func.func @transform_6(%arg0: i32, %arg1: i32) -> (i32, i32) {
    %c0_i32 = arith.constant 0 : i32
    %c0_i32_0 = arith.constant 0 : i32
    return %arg0, %c0_i32 : i32, i32
  }
}

</mosaic_0001>

<llo_original>
// kernel: tpu_custom_call.1
$region0: #{tpu_custom_call.1}
  #allocation0 [shape = 'u32[]', space=smem, size = 0x4, offset = 0x4, fixed_abs, tag = 'smem constant byte address 0x4 - core index']
  #allocation1 [shape = 'u32[144,128]{1,0:T(1,128)}', space=vmem, size = 0x12000, scoped, tag = 'internal scratch']
  #allocation2 [shape = 'f32[8,78]{1,0:T(8,128)}', space=vmem, size = 0x1000, scoped, tag = 'scratch operand']
  #allocation3 [shape = 'f32[8,78]{1,0:T(8,128)}', space=vmem, size = 0x1000, scoped, tag = 'scratch operand']
  #allocation4 [shape = 'f32[8,78]{1,0:T(8,128)}', space=vmem, size = 0x1000, scoped, tag = 'scratch operand']
  #allocation5 [shape = 'f32[8,78]{1,0:T(8,128)}', space=vmem, size = 0x1000, scoped, tag = 'scratch operand']
  %s0 = inlined_call_operand.vmem [shape: f32[2,78,16], index: 0, kind: input, shape index: {}]
  %s1 = inlined_call_operand.vmem [shape: f32[2,78,16], index: 1, kind: input, shape index: {}]
  %s2 = inlined_call_operand.vmem [shape: f32[4,78,128], index: 2, kind: input, shape index: {}]
  %s3 = inlined_call_operand.vmem [shape: f32[1,128], index: 3, kind: input, shape index: {}]
  %s4 = inlined_call_operand.vmem [shape: f32[128,128], index: 4, kind: input, shape index: {}]
  %s5 = inlined_call_operand.vmem [shape: f32[1,128], index: 5, kind: input, shape index: {}]
  %s6 = inlined_call_operand.hbm [shape: f32[8,128], index: 6, kind: output, shape index: {}]
  %s7 = sld [smem:[#allocation0]]
  $region42: #{tpu_custom_call.1} parent=0
    _
  %s9 = ssub.s32 1, %s7
  %s10 = scalar_select 0, %s9, %s7
  $region1: #{tpu_custom_call.1} parent=0
    #allocation6 [shape = 'u8[4096]{0}', space=vmem, size = 0x1000, scoped, tag = 'output window, operand 0, single buffered']
    #allocation7 [shape = 's32[1]{0}', space=sflag, size = 0x4, scoped, tag = 'scoped memory for tpu_custom_call.1']
    %11 = vsyncpa [#allocation7], 0
    // Predicated region
    $region2: #{tpu_custom_call.1} parent=1 // pred_check
      _
    $region3: #{tpu_custom_call.1} parent=1 // pred_check_branch
      %13 = sbr.rel (0) target = $region5
    $region4: #{tpu_custom_call.1} parent=1 // pred_region
      _
    $region5: #{tpu_custom_call.1} parent=1 // pred_fallthru
      _
    // Predicated region
    $region6: #{tpu_custom_call.1} parent=1 // pred_check
      _
    $region7: #{tpu_custom_call.1} parent=1 // pred_check_branch
      %15 = sbr.rel (0) target = $region9
    $region8: #{tpu_custom_call.1} parent=1 // pred_region
      _
    $region9: #{tpu_custom_call.1} parent=1 // pred_fallthru
      _
    // Predicated region
    $region10: #{tpu_custom_call.1} parent=1 // pred_check
      _
    $region11: #{tpu_custom_call.1} parent=1 // pred_check_branch
      %17 = sbr.rel (0) target = $region13
    $region12: #{tpu_custom_call.1} parent=1 // pred_region
      _
    $region13: #{tpu_custom_call.1} parent=1 // pred_fallthru
      _
    // Predicated region
    $region14: #{tpu_custom_call.1} parent=1 // pred_check
      _
    $region15: #{tpu_custom_call.1} parent=1 // pred_check_branch
      %19 = sbr.rel (0) target = $region17
    $region16: #{tpu_custom_call.1} parent=1 // pred_region
      _
    $region17: #{tpu_custom_call.1} parent=1 // pred_fallthru
      _
    // Predicated region
    $region18: #{tpu_custom_call.1} parent=1 // pred_check
      _
    $region19: #{tpu_custom_call.1} parent=1 // pred_check_branch
      %21 = sbr.rel (0) target = $region21
    $region20: #{tpu_custom_call.1} parent=1 // pred_region
      _
    $region21: #{tpu_custom_call.1} parent=1 // pred_fallthru
      _
    // Predicated region
    $region22: #{tpu_custom_call.1} parent=1 // pred_check
      _
    $region23: #{tpu_custom_call.1} parent=1 // pred_check_branch
      %23 = sbr.rel (0) target = $region25
    $region24: #{tpu_custom_call.1} parent=1 // pred_region
      _
    $region25: #{tpu_custom_call.1} parent=1 // pred_fallthru
      _
    %p24 = scmp.eq.s32.totalorder 0, 0
    // Predicated region
    $region26: #{tpu_custom_call.1} parent=1 // pred_check
      %p25 = pneg %p24
    $region27: #{tpu_custom_call.1} parent=1 // pred_check_branch
      %27 = sbr.rel (%p25) target = $region29
    $region28: #{tpu_custom_call.1} parent=1 // pred_region
      %vm28 = vcmask 637952
      %29 = vst.msk [vmem:[#allocation2] sm:$0xff] %vm28, 0.0
      %30 = vst.msk [vmem:[#allocation4] sm:$0xff] %vm28, 0.0
      %31 = vst.msk [vmem:[#allocation3] sm:$0xff] %vm28, -inf
      %32 = vst.msk [vmem:[#allocation5] sm:$0xff] %vm28, -inf
    $region29: #{tpu_custom_call.1} parent=1 // pred_fallthru
      _
    %v33 = vld [vmem:[%s0] sm:$0xff]
    %v34 = vld [vmem:[%s0 + $0x8] sm:$0xff]
    %v35 = vld [vmem:[%s0 + $0x10] sm:$0xff]
    %v36 = vld [vmem:[%s0 + $0x18] sm:$0xff]
    %v37 = vld [vmem:[%s0 + $0x20] sm:$0xff]
    %v38 = vld [vmem:[%s0 + $0x28] sm:$0xff]
    %v39 = vld [vmem:[%s0 + $0x30] sm:$0xff]
    %v40 = vld [vmem:[%s0 + $0x38] sm:$0xff]
    %v41 = vld [vmem:[%s0 + $0x40] sm:$0xff]
    %v42 = vld [vmem:[%s0 + $0x48] sm:$0x3f]
    %v43 = vld [vmem:[%s0 + $0x50] sm:$0xff]
    %v44 = vld [vmem:[%s0 + $0x58] sm:$0xff]
    %v45 = vld [vmem:[%s0 + $0x60] sm:$0xff]
    %v46 = vld [vmem:[%s0 + $0x68] sm:$0xff]
    %v47 = vld [vmem:[%s0 + $0x70] sm:$0xff]
    %v48 = vld [vmem:[%s0 + $0x78] sm:$0xff]
    %v49 = vld [vmem:[%s0 + $0x80] sm:$0xff]
    %v50 = vld [vmem:[%s0 + $0x88] sm:$0xff]
    %v51 = vld [vmem:[%s0 + $0x90] sm:$0xff]
    %v52 = vld [vmem:[%s0 + $0x98] sm:$0x3f]
    %v53 = vld [vmem:[%s0 + $0xa0] sm:$0xff]
    %v54 = vld [vmem:[%s0 + $0xa8] sm:$0xff]
    %v55 = vld [vmem:[%s0 + $0xb0] sm:$0xff]
    %v56 = vld [vmem:[%s0 + $0xb8] sm:$0xff]
    %v57 = vld [vmem:[%s0 + $0xc0] sm:$0xff]
    %v58 = vld [vmem:[%s0 + $0xc8] sm:$0xff]
    %v59 = vld [vmem:[%s0 + $0xd0] sm:$0xff]
    %v60 = vld [vmem:[%s0 + $0xd8] sm:$0xff]
    %v61 = vld [vmem:[%s0 + $0xe0] sm:$0xff]
    %v62 = vld [vmem:[%s0 + $0xe8] sm:$0x3f]
    %v63 = vld [vmem:[%s0 + $0xf0] sm:$0xff]
    %v64 = vld [vmem:[%s0 + $0xf8] sm:$0xff]
    %v65 = vld [vmem:[%s0 + $0x100] sm:$0xff]
    %v66 = vld [vmem:[%s0 + $0x108] sm:$0xff]
    %v67 = vld [vmem:[%s0 + $0x110] sm:$0xff]
    %v68 = vld [vmem:[%s0 + $0x118] sm:$0xff]
    %v69 = vld [vmem:[%s0 + $0x120] sm:$0xff]
    %v70 = vld [vmem:[%s0 + $0x128] sm:$0xff]
    %v71 = vld [vmem:[%s0 + $0x130] sm:$0xff]
    %v72 = vld [vmem:[%s0 + $0x138] sm:$0x3f]
    %v73 = vld [vmem:[%s0 + $0x140] sm:$0xff]
    %v74 = vld [vmem:[%s0 + $0x148] sm:$0xff]
    %v75 = vld [vmem:[%s0 + $0x150] sm:$0xff]
    %v76 = vld [vmem:[%s0 + $0x158] sm:$0xff]
    %v77 = vld [vmem:[%s0 + $0x160] sm:$0xff]
    %v78 = vld [vmem:[%s0 + $0x168] sm:$0xff]
    %v79 = vld [vmem:[%s0 + $0x170] sm:$0xff]
    %v80 = vld [vmem:[%s0 + $0x178] sm:$0xff]
    %v81 = vld [vmem:[%s0 + $0x180] sm:$0xff]
    %v82 = vld [vmem:[%s0 + $0x188] sm:$0x3f]
    %v83 = vld [vmem:[%s0 + $0x190] sm:$0xff]
    %v84 = vld [vmem:[%s0 + $0x198] sm:$0xff]
    %v85 = vld [vmem:[%s0 + $0x1a0] sm:$0xff]
    %v86 = vld [vmem:[%s0 + $0x1a8] sm:$0xff]
    %v87 = vld [vmem:[%s0 + $0x1b0] sm:$0xff]
    %v88 = vld [vmem:[%s0 + $0x1b8] sm:$0xff]
    %v89 = vld [vmem:[%s0 + $0x1c0] sm:$0xff]
    %v90 = vld [vmem:[%s0 + $0x1c8] sm:$0xff]
    %v91 = vld [vmem:[%s0 + $0x1d0] sm:$0xff]
    %v92 = vld [vmem:[%s0 + $0x1d8] sm:$0x3f]
    %v93 = vld [vmem:[%s0 + $0x1e0] sm:$0xff]
    %v94 = vld [vmem:[%s0 + $0x1e8] sm:$0xff]
    %v95 = vld [vmem:[%s0 + $0x1f0] sm:$0xff]
    %v96 = vld [vmem:[%s0 + $0x1f8] sm:$0xff]
    %v97 = vld [vmem:[%s0 + $0x200] sm:$0xff]
    %v98 = vld [vmem:[%s0 + $0x208] sm:$0xff]
    %v99 = vld [vmem:[%s0 + $0x210] sm:$0xff]
    %v100 = vld [vmem:[%s0 + $0x218] sm:$0xff]
    %v101 = vld [vmem:[%s0 + $0x220] sm:$0xff]
    %v102 = vld [vmem:[%s0 + $0x228] sm:$0x3f]
    %v103 = vld [vmem:[%s0 + $0x230] sm:$0xff]
    %v104 = vld [vmem:[%s0 + $0x238] sm:$0xff]
    %v105 = vld [vmem:[%s0 + $0x240] sm:$0xff]
    %v106 = vld [vmem:[%s0 + $0x248] sm:$0xff]
    %v107 = vld [vmem:[%s0 + $0x250] sm:$0xff]
    %v108 = vld [vmem:[%s0 + $0x258] sm:$0xff]
    %v109 = vld [vmem:[%s0 + $0x260] sm:$0xff]
    %v110 = vld [vmem:[%s0 + $0x268] sm:$0xff]
    %v111 = vld [vmem:[%s0 + $0x270] sm:$0xff]
    %v112 = vld [vmem:[%s0 + $0x278] sm:$0x3f]
    %v113 = vld [vmem:[%s1] sm:$0xff]
    %v114 = vld [vmem:[%s1 + $0x8] sm:$0xff]
    %v115 = vld [vmem:[%s1 + $0x10] sm:$0xff]
    %v116 = vld [vmem:[%s1 + $0x18] sm:$0xff]
    %v117 = vld [vmem:[%s1 + $0x20] sm:$0xff]
    %v118 = vld [vmem:[%s1 + $0x28] sm:$0xff]
    %v119 = vld [vmem:[%s1 + $0x30] sm:$0xff]
    %v120 = vld [vmem:[%s1 + $0x38] sm:$0xff]
    %v121 = vld [vmem:[%s1 + $0x40] sm:$0xff]
    %v122 = vld [vmem:[%s1 + $0x48] sm:$0x3f]
    %v123 = vld [vmem:[%s1 + $0x50] sm:$0xff]
    %v124 = vld [vmem:[%s1 + $0x58] sm:$0xff]
    %v125 = vld [vmem:[%s1 + $0x60] sm:$0xff]
    %v126 = vld [vmem:[%s1 + $0x68] sm:$0xff]
    %v127 = vld [vmem:[%s1 + $0x70] sm:$0xff]
    %v128 = vld [vmem:[%s1 + $0x78] sm:$0xff]
    %v129 = vld [vmem:[%s1 + $0x80] sm:$0xff]
    %v130 = vld [vmem:[%s1 + $0x88] sm:$0xff]
    %v131 = vld [vmem:[%s1 + $0x90] sm:$0xff]
    %v132 = vld [vmem:[%s1 + $0x98] sm:$0x3f]
    %v133 = vld [vmem:[%s1 + $0xa0] sm:$0xff]
    %v134 = vld [vmem:[%s1 + $0xa8] sm:$0xff]
    %v135 = vld [vmem:[%s1 + $0xb0] sm:$0xff]
    %v136 = vld [vmem:[%s1 + $0xb8] sm:$0xff]
    %v137 = vld [vmem:[%s1 + $0xc0] sm:$0xff]
    %v138 = vld [vmem:[%s1 + $0xc8] sm:$0xff]
    %v139 = vld [vmem:[%s1 + $0xd0] sm:$0xff]
    %v140 = vld [vmem:[%s1 + $0xd8] sm:$0xff]
    %v141 = vld [vmem:[%s1 + $0xe0] sm:$0xff]
    %v142 = vld [vmem:[%s1 + $0xe8] sm:$0x3f]
    %v143 = vld [vmem:[%s1 + $0xf0] sm:$0xff]
    %v144 = vld [vmem:[%s1 + $0xf8] sm:$0xff]
    %v145 = vld [vmem:[%s1 + $0x100] sm:$0xff]
    %v146 = vld [vmem:[%s1 + $0x108] sm:$0xff]
    %v147 = vld [vmem:[%s1 + $0x110] sm:$0xff]
    %v148 = vld [vmem:[%s1 + $0x118] sm:$0xff]
    %v149 = vld [vmem:[%s1 + $0x120] sm:$0xff]
    %v150 = vld [vmem:[%s1 + $0x128] sm:$0xff]
    %v151 = vld [vmem:[%s1 + $0x130] sm:$0xff]
    %v152 = vld [vmem:[%s1 + $0x138] sm:$0x3f]
    %v153 = vld [vmem:[%s1 + $0x140] sm:$0xff]
    %v154 = vld [vmem:[%s1 + $0x148] sm:$0xff]
    %v155 = vld [vmem:[%s1 + $0x150] sm:$0xff]
    %v156 = vld [vmem:[%s1 + $0x158] sm:$0xff]
    %v157 = vld [vmem:[%s1 + $0x160] sm:$0xff]
    %v158 = vld [vmem:[%s1 + $0x168] sm:$0xff]
    %v159 = vld [vmem:[%s1 + $0x170] sm:$0xff]
    %v160 = vld [vmem:[%s1 + $0x178] sm:$0xff]
    %v161 = vld [vmem:[%s1 + $0x180] sm:$0xff]
    %v162 = vld [vmem:[%s1 + $0x188] sm:$0x3f]
    %v163 = vld [vmem:[%s1 + $0x190] sm:$0xff]
    %v164 = vld [vmem:[%s1 + $0x198] sm:$0xff]
    %v165 = vld [vmem:[%s1 + $0x1a0] sm:$0xff]
    %v166 = vld [vmem:[%s1 + $0x1a8] sm:$0xff]
    %v167 = vld [vmem:[%s1 + $0x1b0] sm:$0xff]
    %v168 = vld [vmem:[%s1 + $0x1b8] sm:$0xff]
    %v169 = vld [vmem:[%s1 + $0x1c0] sm:$0xff]
    %v170 = vld [vmem:[%s1 + $0x1c8] sm:$0xff]
    %v171 = vld [vmem:[%s1 + $0x1d0] sm:$0xff]
    %v172 = vld [vmem:[%s1 + $0x1d8] sm:$0x3f]
    %v173 = vld [vmem:[%s1 + $0x1e0] sm:$0xff]
    %v174 = vld [vmem:[%s1 + $0x1e8] sm:$0xff]
    %v175 = vld [vmem:[%s1 + $0x1f0] sm:$0xff]
    %v176 = vld [vmem:[%s1 + $0x1f8] sm:$0xff]
    %v177 = vld [vmem:[%s1 + $0x200] sm:$0xff]
    %v178 = vld [vmem:[%s1 + $0x208] sm:$0xff]
    %v179 = vld [vmem:[%s1 + $0x210] sm:$0xff]
    %v180 = vld [vmem:[%s1 + $0x218] sm:$0xff]
    %v181 = vld [vmem:[%s1 + $0x220] sm:$0xff]
    %v182 = vld [vmem:[%s1 + $0x228] sm:$0x3f]
    %v183 = vld [vmem:[%s1 + $0x230] sm:$0xff]
    %v184 = vld [vmem:[%s1 + $0x238] sm:$0xff]
    %v185 = vld [vmem:[%s1 + $0x240] sm:$0xff]
    %v186 = vld [vmem:[%s1 + $0x248] sm:$0xff]
    %v187 = vld [vmem:[%s1 + $0x250] sm:$0xff]
    %v188 = vld [vmem:[%s1 + $0x258] sm:$0xff]
    %v189 = vld [vmem:[%s1 + $0x260] sm:$0xff]
    %v190 = vld [vmem:[%s1 + $0x268] sm:$0xff]
    %v191 = vld [vmem:[%s1 + $0x270] sm:$0xff]
    %v192 = vld [vmem:[%s1 + $0x278] sm:$0x3f]
    %v193 = vld [vmem:[#allocation2] sm:$0xff]
    %vm194 = vcmask 130048
    %v195 = vsel %vm194, %v33, 0.0
    %196 = vadd.xlane.f32.xlu0 %v195
    %v197 = vpop.xlane.xlu0 %196
    %v198 = vsel %vm194, %v34, 0.0
    %199 = vadd.xlane.f32.xlu0 %v198
    %v200 = vpop.xlane.xlu0 %199
    %v201 = vsel %vm194, %v35, 0.0
    %202 = vadd.xlane.f32.xlu0 %v201
    %v203 = vpop.xlane.xlu0 %202
    %v204 = vsel %vm194, %v36, 0.0
    %205 = vadd.xlane.f32.xlu0 %v204
    %v206 = vpop.xlane.xlu0 %205
    %v207 = vsel %vm194, %v37, 0.0
    %208 = vadd.xlane.f32.xlu0 %v207
    %v209 = vpop.xlane.xlu0 %208
    %v210 = vsel %vm194, %v38, 0.0
    %211 = vadd.xlane.f32.xlu0 %v210
    %v212 = vpop.xlane.xlu0 %211
    %v213 = vsel %vm194, %v39, 0.0
    %214 = vadd.xlane.f32.xlu0 %v213
    %v215 = vpop.xlane.xlu0 %214
    %v216 = vsel %vm194, %v40, 0.0
    %217 = vadd.xlane.f32.xlu0 %v216
    %v218 = vpop.xlane.xlu0 %217
    %v219 = vsel %vm194, %v41, 0.0
    %220 = vadd.xlane.f32.xlu0 %v219
    %v221 = vpop.xlane.xlu0 %220
    %vm222 = vcmask 128000
    %v223 = vsel %vm222, %v42, 0.0
    %224 = vadd.xlane.f32.xlu0 %v223
    %v225 = vpop.xlane.xlu0 %224
    %v226 = vsel %vm194, %v43, 0.0
    %227 = vadd.xlane.f32.xlu0 %v226
    %v228 = vpop.xlane.xlu0 %227
    %v229 = vsel %vm194, %v44, 0.0
    %230 = vadd.xlane.f32.xlu0 %v229
    %v231 = vpop.xlane.xlu0 %230
    %v232 = vsel %vm194, %v45, 0.0
    %233 = vadd.xlane.f32.xlu0 %v232
    %v234 = vpop.xlane.xlu0 %233
    %v235 = vsel %vm194, %v46, 0.0
    %236 = vadd.xlane.f32.xlu0 %v235
    %v237 = vpop.xlane.xlu0 %236
    %v238 = vsel %vm194, %v47, 0.0
    %239 = vadd.xlane.f32.xlu0 %v238
    %v240 = vpop.xlane.xlu0 %239
    %v241 = vsel %vm194, %v48, 0.0
    %242 = vadd.xlane.f32.xlu0 %v241
    %v243 = vpop.xlane.xlu0 %242
    %v244 = vsel %vm194, %v49, 0.0
    %245 = vadd.xlane.f32.xlu0 %v244
    %v246 = vpop.xlane.xlu0 %245
    %v247 = vsel %vm194, %v50, 0.0
    %248 = vadd.xlane.f32.xlu0 %v247
    %v249 = vpop.xlane.xlu0 %248
    %v250 = vsel %vm194, %v51, 0.0
    %251 = vadd.xlane.f32.xlu0 %v250
    %v252 = vpop.xlane.xlu0 %251
    %v253 = vsel %vm222, %v52, 0.0
    %254 = vadd.xlane.f32.xlu0 %v253
    %v255 = vpop.xlane.xlu0 %254
    %v256 = vsel %vm194, %v53, 0.0
    %257 = vadd.xlane.f32.xlu0 %v256
    %v258 = vpop.xlane.xlu0 %257
    %v259 = vsel %vm194, %v54, 0.0
    %260 = vadd.xlane.f32.xlu0 %v259
    %v261 = vpop.xlane.xlu0 %260
    %v262 = vsel %vm194, %v55, 0.0
    %263 = vadd.xlane.f32.xlu0 %v262
    %v264 = vpop.xlane.xlu0 %263
    %v265 = vsel %vm194, %v56, 0.0
    %266 = vadd.xlane.f32.xlu0 %v265
    %v267 = vpop.xlane.xlu0 %266
    %v268 = vsel %vm194, %v57, 0.0
    %269 = vadd.xlane.f32.xlu0 %v268
    %v270 = vpop.xlane.xlu0 %269
    %v271 = vsel %vm194, %v58, 0.0
    %272 = vadd.xlane.f32.xlu0 %v271
    %v273 = vpop.xlane.xlu0 %272
    %v274 = vsel %vm194, %v59, 0.0
    %275 = vadd.xlane.f32.xlu0 %v274
    %v276 = vpop.xlane.xlu0 %275
    %v277 = vsel %vm194, %v60, 0.0
    %278 = vadd.xlane.f32.xlu0 %v277
    %v279 = vpop.xlane.xlu0 %278
    %v280 = vsel %vm194, %v61, 0.0
    %281 = vadd.xlane.f32.xlu0 %v280
    %v282 = vpop.xlane.xlu0 %281
    %v283 = vsel %vm222, %v62, 0.0
    %284 = vadd.xlane.f32.xlu0 %v283
    %v285 = vpop.xlane.xlu0 %284
    %v286 = vsel %vm194, %v63, 0.0
    %287 = vadd.xlane.f32.xlu0 %v286
    %v288 = vpop.xlane.xlu0 %287
    %v289 = vsel %vm194, %v64, 0.0
    %290 = vadd.xlane.f32.xlu0 %v289
    %v291 = vpop.xlane.xlu0 %290
    %v292 = vsel %vm194, %v65, 0.0
    %293 = vadd.xlane.f32.xlu0 %v292
    %v294 = vpop.xlane.xlu0 %293
    %v295 = vsel %vm194, %v66, 0.0
    %296 = vadd.xlane.f32.xlu0 %v295
    %v297 = vpop.xlane.xlu0 %296
    %v298 = vsel %vm194, %v67, 0.0
    %299 = vadd.xlane.f32.xlu0 %v298
    %v300 = vpop.xlane.xlu0 %299
    %v301 = vsel %vm194, %v68, 0.0
    %302 = vadd.xlane.f32.xlu0 %v301
    %v303 = vpop.xlane.xlu0 %302
    %v304 = vsel %vm194, %v69, 0.0
    %305 = vadd.xlane.f32.xlu0 %v304
    %v306 = vpop.xlane.xlu0 %305
    %v307 = vsel %vm194, %v70, 0.0
    %308 = vadd.xlane.f32.xlu0 %v307
    %v309 = vpop.xlane.xlu0 %308
    %v310 = vsel %vm194, %v71, 0.0
    %311 = vadd.xlane.f32.xlu0 %v310
    %v312 = vpop.xlane.xlu0 %311
    %v313 = vsel %vm222, %v72, 0.0
    %314 = vadd.xlane.f32.xlu0 %v313
    %v315 = vpop.xlane.xlu0 %314
    %v316 = vsel %vm194, %v73, 0.0
    %317 = vadd.xlane.f32.xlu0 %v316
    %v318 = vpop.xlane.xlu0 %317
    %v319 = vsel %vm194, %v74, 0.0
    %320 = vadd.xlane.f32.xlu0 %v319
    %v321 = vpop.xlane.xlu0 %320
    %v322 = vsel %vm194, %v75, 0.0
    %323 = vadd.xlane.f32.xlu0 %v322
    %v324 = vpop.xlane.xlu0 %323
    %v325 = vsel %vm194, %v76, 0.0
    %326 = vadd.xlane.f32.xlu0 %v325
    %v327 = vpop.xlane.xlu0 %326
    %v328 = vsel %vm194, %v77, 0.0
    %329 = vadd.xlane.f32.xlu0 %v328
    %v330 = vpop.xlane.xlu0 %329
    %v331 = vsel %vm194, %v78, 0.0
    %332 = vadd.xlane.f32.xlu0 %v331
    %v333 = vpop.xlane.xlu0 %332
    %v334 = vsel %vm194, %v79, 0.0
    %335 = vadd.xlane.f32.xlu0 %v334
    %v336 = vpop.xlane.xlu0 %335
    %v337 = vsel %vm194, %v80, 0.0
    %338 = vadd.xlane.f32.xlu0 %v337
    %v339 = vpop.xlane.xlu0 %338
    %v340 = vsel %vm194, %v81, 0.0
    %341 = vadd.xlane.f32.xlu0 %v340
    %v342 = vpop.xlane.xlu0 %341
    %v343 = vsel %vm222, %v82, 0.0
    %344 = vadd.xlane.f32.xlu0 %v343
    %v345 = vpop.xlane.xlu0 %344
    %v346 = vsel %vm194, %v83, 0.0
    %347 = vadd.xlane.f32.xlu0 %v346
    %v348 = vpop.xlane.xlu0 %347
    %v349 = vsel %vm194, %v84, 0.0
    %350 = vadd.xlane.f32.xlu0 %v349
    %v351 = vpop.xlane.xlu0 %350
    %v352 = vsel %vm194, %v85, 0.0
    %353 = vadd.xlane.f32.xlu0 %v352
    %v354 = vpop.xlane.xlu0 %353
    %v355 = vsel %vm194, %v86, 0.0
    %356 = vadd.xlane.f32.xlu0 %v355
    %v357 = vpop.xlane.xlu0 %356
    %v358 = vsel %vm194, %v87, 0.0
    %359 = vadd.xlane.f32.xlu0 %v358
    %v360 = vpop.xlane.xlu0 %359
    %v361 = vsel %vm194, %v88, 0.0
    %362 = vadd.xlane.f32.xlu0 %v361
    %v363 = vpop.xlane.xlu0 %362
    %v364 = vsel %vm194, %v89, 0.0
    %365 = vadd.xlane.f32.xlu0 %v364
    %v366 = vpop.xlane.xlu0 %365
    %v367 = vsel %vm194, %v90, 0.0
    %368 = vadd.xlane.f32.xlu0 %v367
    %v369 = vpop.xlane.xlu0 %368
    %v370 = vsel %vm194, %v91, 0.0
    %371 = vadd.xlane.f32.xlu0 %v370
    %v372 = vpop.xlane.xlu0 %371
    %v373 = vsel %vm222, %v92, 0.0
    %374 = vadd.xlane.f32.xlu0 %v373
    %v375 = vpop.xlane.xlu0 %374
    %v376 = vsel %vm194, %v93, 0.0
    %377 = vadd.xlane.f32.xlu0 %v376
    %v378 = vpop.xlane.xlu0 %377
    %v379 = vsel %vm194, %v94, 0.0
    %380 = vadd.xlane.f32.xlu0 %v379
    %v381 = vpop.xlane.xlu0 %380
    %v382 = vsel %vm194, %v95, 0.0
    %383 = vadd.xlane.f32.xlu0 %v382
    %v384 = vpop.xlane.xlu0 %383
    %v385 = vsel %vm194, %v96, 0.0
    %386 = vadd.xlane.f32.xlu0 %v385
    %v387 = vpop.xlane.xlu0 %386
    %v388 = vsel %vm194, %v97, 0.0
    %389 = vadd.xlane.f32.xlu0 %v388
    %v390 = vpop.xlane.xlu0 %389
    %v391 = vsel %vm194, %v98, 0.0
    %392 = vadd.xlane.f32.xlu0 %v391
    %v393 = vpop.xlane.xlu0 %392
    %v394 = vsel %vm194, %v99, 0.0
    %395 = vadd.xlane.f32.xlu0 %v394
    %v396 = vpop.xlane.xlu0 %395
    %v397 = vsel %vm194, %v100, 0.0
    %398 = vadd.xlane.f32.xlu0 %v397
    %v399 = vpop.xlane.xlu0 %398
    %v400 = vsel %vm194, %v101, 0.0
    %401 = vadd.xlane.f32.xlu0 %v400
    %v402 = vpop.xlane.xlu0 %401
    %v403 = vsel %vm222, %v102, 0.0
    %404 = vadd.xlane.f32.xlu0 %v403
    %v405 = vpop.xlane.xlu0 %404
    %v406 = vsel %vm194, %v103, 0.0
    %407 = vadd.xlane.f32.xlu0 %v406
    %v408 = vpop.xlane.xlu0 %407
    %v409 = vsel %vm194, %v104, 0.0
    %410 = vadd.xlane.f32.xlu0 %v409
    %v411 = vpop.xlane.xlu0 %410
    %v412 = vsel %vm194, %v105, 0.0
    %413 = vadd.xlane.f32.xlu0 %v412
    %v414 = vpop.xlane.xlu0 %413
    %v415 = vsel %vm194, %v106, 0.0
    %416 = vadd.xlane.f32.xlu0 %v415
    %v417 = vpop.xlane.xlu0 %416
    %v418 = vsel %vm194, %v107, 0.0
    %419 = vadd.xlane.f32.xlu0 %v418
    %v420 = vpop.xlane.xlu0 %419
    %v421 = vsel %vm194, %v108, 0.0
    %422 = vadd.xlane.f32.xlu0 %v421
    %v423 = vpop.xlane.xlu0 %422
    %v424 = vsel %vm194, %v109, 0.0
    %425 = vadd.xlane.f32.xlu0 %v424
    %v426 = vpop.xlane.xlu0 %425
    %v427 = vsel %vm194, %v110, 0.0
    %428 = vadd.xlane.f32.xlu0 %v427
    %v429 = vpop.xlane.xlu0 %428
    %v430 = vsel %vm194, %v111, 0.0
    %431 = vadd.xlane.f32.xlu0 %v430
    %v432 = vpop.xlane.xlu0 %431
    %v433 = vsel %vm222, %v112, 0.0
    %434 = vadd.xlane.f32.xlu0 %v433
    %v435 = vpop.xlane.xlu0 %434
    %v516 = vlaneseq
    %v517 = vand.u32 %v516, 127
    %v518 = vlaneseq
    %v519 = vshrl.u32 %v518, 7
    %v520 = vsub.s32 %v517, %v519
    %v521 = vrot.slane %v197, %v520
    %v522 = vadd.s32 %v517, 4294967288
    %v523 = vlaneseq
    %v524 = vshrl.u32 %v523, 7
    %v525 = vsub.s32 %v522, %v524
    %v526 = vrot.slane %v200, %v525
    %vm527 = vcmask 130112
    %v528 = vsel %vm527, %v526, %v521
    %v529 = vadd.s32 %v517, 4294967280
    %v530 = vlaneseq
    %v531 = vshrl.u32 %v530, 7
    %v532 = vsub.s32 %v529, %v531
    %v533 = vrot.slane %v203, %v532
    %vm534 = vcmask 195712
    %v535 = vsel %vm534, %v533, %v528
    %v536 = vadd.s32 %v517, 4294967272
    %v537 = vlaneseq
    %v538 = vshrl.u32 %v537, 7
    %v539 = vsub.s32 %v536, %v538
    %v540 = vrot.slane %v206, %v539
    %vm541 = vcmask 261312
    %v542 = vsel %vm541, %v540, %v535
    %v543 = vadd.s32 %v517, 4294967264
    %v544 = vlaneseq
    %v545 = vshrl.u32 %v544, 7
    %v546 = vsub.s32 %v543, %v545
    %v547 = vrot.slane %v209, %v546
    %vm548 = vcmask 326912
    %v549 = vsel %vm548, %v547, %v542
    %v550 = vadd.s32 %v517, 4294967256
    %v551 = vlaneseq
    %v552 = vshrl.u32 %v551, 7
    %v553 = vsub.s32 %v550, %v552
    %v554 = vrot.slane %v212, %v553
    %vm555 = vcmask 392512
    %v556 = vsel %vm555, %v554, %v549
    %v557 = vadd.s32 %v517, 4294967248
    %v558 = vlaneseq
    %v559 = vshrl.u32 %v558, 7
    %v560 = vsub.s32 %v557, %v559
    %v561 = vrot.slane %v215, %v560
    %vm562 = vcmask 458112
    %v563 = vsel %vm562, %v561, %v556
    %v564 = vadd.s32 %v517, 4294967240
    %v565 = vlaneseq
    %v566 = vshrl.u32 %v565, 7
    %v567 = vsub.s32 %v564, %v566
    %v568 = vrot.slane %v218, %v567
    %vm569 = vcmask 523712
    %v570 = vsel %vm569, %v568, %v563
    %v571 = vadd.s32 %v517, 4294967232
    %v572 = vlaneseq
    %v573 = vshrl.u32 %v572, 7
    %v574 = vsub.s32 %v571, %v573
    %v575 = vrot.slane %v221, %v574
    %vm576 = vcmask 589312
    %v577 = vsel %vm576, %v575, %v570
    %v578 = vadd.s32 %v517, 4294967224
    %v579 = vlaneseq
    %v580 = vshrl.u32 %v579, 7
    %v581 = vsub.s32 %v578, %v580
    %v582 = vrot.slane %v225, %v581
    %vm583 = vcmask 654912
    %v584 = vsel %vm583, %v582, %v577
    %v585 = vlaneseq
    %v586 = vshrl.u32 %v585, 7
    %v587 = vsub.s32 %v517, %v586
    %v588 = vrot.slane %v228, %v587
    %v589 = vlaneseq
    %v590 = vshrl.u32 %v589, 7
    %v591 = vsub.s32 %v522, %v590
    %v592 = vrot.slane %v231, %v591
    %v593 = vsel %vm527, %v592, %v588
    %v594 = vlaneseq
    %v595 = vshrl.u32 %v594, 7
    %v596 = vsub.s32 %v529, %v595
    %v597 = vrot.slane %v234, %v596
    %v598 = vsel %vm534, %v597, %v593
    %v599 = vlaneseq
    %v600 = vshrl.u32 %v599, 7
    %v601 = vsub.s32 %v536, %v600
    %v602 = vrot.slane %v237, %v601
    %v603 = vsel %vm541, %v602, %v598
    %v604 = vlaneseq
    %v605 = vshrl.u32 %v604, 7
    %v606 = vsub.s32 %v543, %v605
    %v607 = vrot.slane %v240, %v606
    %v608 = vsel %vm548, %v607, %v603
    %v609 = vlaneseq
    %v610 = vshrl.u32 %v609, 7
    %v611 = vsub.s32 %v550, %v610
    %v612 = vrot.slane %v243, %v611
    %v613 = vsel %vm555, %v612, %v608
    %v614 = vlaneseq
    %v615 = vshrl.u32 %v614, 7
    %v616 = vsub.s32 %v557, %v615
    %v617 = vrot.slane %v246, %v616
    %v618 = vsel %vm562, %v617, %v613
    %v619 = vlaneseq
    %v620 = vshrl.u32 %v619, 7
    %v621 = vsub.s32 %v564, %v620
    %v622 = vrot.slane %v249, %v621
    %v623 = vsel %vm569, %v622, %v618
    %v624 = vlaneseq
    %v625 = vshrl.u32 %v624, 7
    %v626 = vsub.s32 %v571, %v625
    %v627 = vrot.slane %v252, %v626
    %v628 = vsel %vm576, %v627, %v623
    %v629 = vlaneseq
    %v630 = vshrl.u32 %v629, 7
    %v631 = vsub.s32 %v578, %v630
    %v632 = vrot.slane %v255, %v631
    %v633 = vsel %vm583, %v632, %v628
    %v634 = vlaneseq
    %v635 = vshrl.u32 %v634, 7
    %v636 = vsub.s32 %v517, %v635
    %v637 = vrot.slane %v258, %v636
    %v638 = vlaneseq
    %v639 = vshrl.u32 %v638, 7
    %v640 = vsub.s32 %v522, %v639
    %v641 = vrot.slane %v261, %v640
    %v642 = vsel %vm527, %v641, %v637
    %v643 = vlaneseq
    %v644 = vshrl.u32 %v643, 7
    %v645 = vsub.s32 %v529, %v644
    %v646 = vrot.slane %v264, %v645
    %v647 = vsel %vm534, %v646, %v642
    %v648 = vlaneseq
    %v649 = vshrl.u32 %v648, 7
    %v650 = vsub.s32 %v536, %v649
    %v651 = vrot.slane %v267, %v650
    %v652 = vsel %vm541, %v651, %v647
    %v653 = vlaneseq
    %v654 = vshrl.u32 %v653, 7
    %v655 = vsub.s32 %v543, %v654
    %v656 = vrot.slane %v270, %v655
    %v657 = vsel %vm548, %v656, %v652
    %v658 = vlaneseq
    %v659 = vshrl.u32 %v658, 7
    %v660 = vsub.s32 %v550, %v659
    %v661 = vrot.slane %v273, %v660
    %v662 = vsel %vm555, %v661, %v657
    %v663 = vlaneseq
    %v664 = vshrl.u32 %v663, 7
    %v665 = vsub.s32 %v557, %v664
    %v666 = vrot.slane %v276, %v665
    %v667 = vsel %vm562, %v666, %v662
    %v668 = vlaneseq
    %v669 = vshrl.u32 %v668, 7
    %v670 = vsub.s32 %v564, %v669
    %v671 = vrot.slane %v279, %v670
    %v672 = vsel %vm569, %v671, %v667
    %v673 = vlaneseq
    %v674 = vshrl.u32 %v673, 7
    %v675 = vsub.s32 %v571, %v674
    %v676 = vrot.slane %v282, %v675
    %v677 = vsel %vm576, %v676, %v672
    %v678 = vlaneseq
    %v679 = vshrl.u32 %v678, 7
    %v680 = vsub.s32 %v578, %v679
    %v681 = vrot.slane %v285, %v680
    %v682 = vsel %vm583, %v681, %v677
    %v683 = vlaneseq
    %v684 = vshrl.u32 %v683, 7
    %v685 = vsub.s32 %v517, %v684
    %v686 = vrot.slane %v288, %v685
    %v687 = vlaneseq
    %v688 = vshrl.u32 %v687, 7
    %v689 = vsub.s32 %v522, %v688
    %v690 = vrot.slane %v291, %v689
    %v691 = vsel %vm527, %v690, %v686
    %v692 = vlaneseq
    %v693 = vshrl.u32 %v692, 7
    %v694 = vsub.s32 %v529, %v693
    %v695 = vrot.slane %v294, %v694
    %v696 = vsel %vm534, %v695, %v691
    %v697 = vlaneseq
    %v698 = vshrl.u32 %v697, 7
    %v699 = vsub.s32 %v536, %v698
    %v700 = vrot.slane %v297, %v699
    %v701 = vsel %vm541, %v700, %v696
    %v702 = vlaneseq
    %v703 = vshrl.u32 %v702, 7
    %v704 = vsub.s32 %v543, %v703
    %v705 = vrot.slane %v300, %v704
    %v706 = vsel %vm548, %v705, %v701
    %v707 = vlaneseq
    %v708 = vshrl.u32 %v707, 7
    %v709 = vsub.s32 %v550, %v708
    %v710 = vrot.slane %v303, %v709
    %v711 = vsel %vm555, %v710, %v706
    %v712 = vlaneseq
    %v713 = vshrl.u32 %v712, 7
    %v714 = vsub.s32 %v557, %v713
    %v715 = vrot.slane %v306, %v714
    %v716 = vsel %vm562, %v715, %v711
    %v717 = vlaneseq
    %v718 = vshrl.u32 %v717, 7
    %v719 = vsub.s32 %v564, %v718
    %v720 = vrot.slane %v309, %v719
    %v721 = vsel %vm569, %v720, %v716
    %v722 = vlaneseq
    %v723 = vshrl.u32 %v722, 7
    %v724 = vsub.s32 %v571, %v723
    %v725 = vrot.slane %v312, %v724
    %v726 = vsel %vm576, %v725, %v721
    %v727 = vlaneseq
    %v728 = vshrl.u32 %v727, 7
    %v729 = vsub.s32 %v578, %v728
    %v730 = vrot.slane %v315, %v729
    %v731 = vsel %vm583, %v730, %v726
    %v732 = vlaneseq
    %v733 = vshrl.u32 %v732, 7
    %v734 = vsub.s32 %v517, %v733
    %v735 = vrot.slane %v318, %v734
    %v736 = vlaneseq
    %v737 = vshrl.u32 %v736, 7
    %v738 = vsub.s32 %v522, %v737
    %v739 = vrot.slane %v321, %v738
    %v740 = vsel %vm527, %v739, %v735
    %v741 = vlaneseq
    %v742 = vshrl.u32 %v741, 7
    %v743 = vsub.s32 %v529, %v742
    %v744 = vrot.slane %v324, %v743
    %v745 = vsel %vm534, %v744, %v740
    %v746 = vlaneseq
    %v747 = vshrl.u32 %v746, 7
    %v748 = vsub.s32 %v536, %v747
    %v749 = vrot.slane %v327, %v748
    %v750 = vsel %vm541, %v749, %v745
    %v751 = vlaneseq
    %v752 = vshrl.u32 %v751, 7
    %v753 = vsub.s32 %v543, %v752
    %v754 = vrot.slane %v330, %v753
    %v755 = vsel %vm548, %v754, %v750
    %v756 = vlaneseq
    %v757 = vshrl.u32 %v756, 7
    %v758 = vsub.s32 %v550, %v757
    %v759 = vrot.slane %v333, %v758
    %v760 = vsel %vm555, %v759, %v755
    %v761 = vlaneseq
    %v762 = vshrl.u32 %v761, 7
    %v763 = vsub.s32 %v557, %v762
    %v764 = vrot.slane %v336, %v763
    %v765 = vsel %vm562, %v764, %v760
    %v766 = vlaneseq
    %v767 = vshrl.u32 %v766, 7
    %v768 = vsub.s32 %v564, %v767
    %v769 = vrot.slane %v339, %v768
    %v770 = vsel %vm569, %v769, %v765
    %v771 = vlaneseq
    %v772 = vshrl.u32 %v771, 7
    %v773 = vsub.s32 %v571, %v772
    %v774 = vrot.slane %v342, %v773
    %v775 = vsel %vm576, %v774, %v770
    %v776 = vlaneseq
    %v777 = vshrl.u32 %v776, 7
    %v778 = vsub.s32 %v578, %v777
    %v779 = vrot.slane %v345, %v778
    %v780 = vsel %vm583, %v779, %v775
    %v781 = vlaneseq
    %v782 = vshrl.u32 %v781, 7
    %v783 = vsub.s32 %v517, %v782
    %v784 = vrot.slane %v348, %v783
    %v785 = vlaneseq
    %v786 = vshrl.u32 %v785, 7
    %v787 = vsub.s32 %v522, %v786
    %v788 = vrot.slane %v351, %v787
    %v789 = vsel %vm527, %v788, %v784
    %v790 = vlaneseq
    %v791 = vshrl.u32 %v790, 7
    %v792 = vsub.s32 %v529, %v791
    %v793 = vrot.slane %v354, %v792
    %v794 = vsel %vm534, %v793, %v789
    %v795 = vlaneseq
    %v796 = vshrl.u32 %v795, 7
    %v797 = vsub.s32 %v536, %v796
    %v798 = vrot.slane %v357, %v797
    %v799 = vsel %vm541, %v798, %v794
    %v800 = vlaneseq
    %v801 = vshrl.u32 %v800, 7
    %v802 = vsub.s32 %v543, %v801
    %v803 = vrot.slane %v360, %v802
    %v804 = vsel %vm548, %v803, %v799
    %v805 = vlaneseq
    %v806 = vshrl.u32 %v805, 7
    %v807 = vsub.s32 %v550, %v806
    %v808 = vrot.slane %v363, %v807
    %v809 = vsel %vm555, %v808, %v804
    %v810 = vlaneseq
    %v811 = vshrl.u32 %v810, 7
    %v812 = vsub.s32 %v557, %v811
    %v813 = vrot.slane %v366, %v812
    %v814 = vsel %vm562, %v813, %v809
    %v815 = vlaneseq
    %v816 = vshrl.u32 %v815, 7
    %v817 = vsub.s32 %v564, %v816
    %v818 = vrot.slane %v369, %v817
    %v819 = vsel %vm569, %v818, %v814
    %v820 = vlaneseq
    %v821 = vshrl.u32 %v820, 7
    %v822 = vsub.s32 %v571, %v821
    %v823 = vrot.slane %v372, %v822
    %v824 = vsel %vm576, %v823, %v819
    %v825 = vlaneseq
    %v826 = vshrl.u32 %v825, 7
    %v827 = vsub.s32 %v578, %v826
    %v828 = vrot.slane %v375, %v827
    %v829 = vsel %vm583, %v828, %v824
    %v830 = vlaneseq
    %v831 = vshrl.u32 %v830, 7
    %v832 = vsub.s32 %v517, %v831
    %v833 = vrot.slane %v378, %v832
    %v834 = vlaneseq
    %v835 = vshrl.u32 %v834, 7
    %v836 = vsub.s32 %v522, %v835
    %v837 = vrot.slane %v381, %v836
    %v838 = vsel %vm527, %v837, %v833
    %v839 = vlaneseq
    %v840 = vshrl.u32 %v839, 7
    %v841 = vsub.s32 %v529, %v840
    %v842 = vrot.slane %v384, %v841
    %v843 = vsel %vm534, %v842, %v838
    %v844 = vlaneseq
    %v845 = vshrl.u32 %v844, 7
    %v846 = vsub.s32 %v536, %v845
    %v847 = vrot.slane %v387, %v846
    %v848 = vsel %vm541, %v847, %v843
    %v849 = vlaneseq
    %v850 = vshrl.u32 %v849, 7
    %v851 = vsub.s32 %v543, %v850
    %v852 = vrot.slane %v390, %v851
    %v853 = vsel %vm548, %v852, %v848
    %v854 = vlaneseq
    %v855 = vshrl.u32 %v854, 7
    %v856 = vsub.s32 %v550, %v855
    %v857 = vrot.slane %v393, %v856
    %v858 = vsel %vm555, %v857, %v853
    %v859 = vlaneseq
    %v860 = vshrl.u32 %v859, 7
    %v861 = vsub.s32 %v557, %v860
    %v862 = vrot.slane %v396, %v861
    %v863 = vsel %vm562, %v862, %v858
    %v864 = vlaneseq
    %v865 = vshrl.u32 %v864, 7
    %v866 = vsub.s32 %v564, %v865
    %v867 = vrot.slane %v399, %v866
    %v868 = vsel %vm569, %v867, %v863
    %v869 = vlaneseq
    %v870 = vshrl.u32 %v869, 7
    %v871 = vsub.s32 %v571, %v870
    %v872 = vrot.slane %v402, %v871
    %v873 = vsel %vm576, %v872, %v868
    %v874 = vlaneseq
    %v875 = vshrl.u32 %v874, 7
    %v876 = vsub.s32 %v578, %v875
    %v877 = vrot.slane %v405, %v876
    %v878 = vsel %vm583, %v877, %v873
    %v879 = vlaneseq
    %v880 = vshrl.u32 %v879, 7
    %v881 = vsub.s32 %v517, %v880
    %v882 = vrot.slane %v408, %v881
    %v883 = vlaneseq
    %v884 = vshrl.u32 %v883, 7
    %v885 = vsub.s32 %v522, %v884
    %v886 = vrot.slane %v411, %v885
    %v887 = vsel %vm527, %v886, %v882
    %v888 = vlaneseq
    %v889 = vshrl.u32 %v888, 7
    %v890 = vsub.s32 %v529, %v889
    %v891 = vrot.slane %v414, %v890
    %v892 = vsel %vm534, %v891, %v887
    %v893 = vlaneseq
    %v894 = vshrl.u32 %v893, 7
    %v895 = vsub.s32 %v536, %v894
    %v896 = vrot.slane %v417, %v895
    %v897 = vsel %vm541, %v896, %v892
    %v898 = vlaneseq
    %v899 = vshrl.u32 %v898, 7
    %v900 = vsub.s32 %v543, %v899
    %v901 = vrot.slane %v420, %v900
    %v902 = vsel %vm548, %v901, %v897
    %v903 = vlaneseq
    %v904 = vshrl.u32 %v903, 7
    %v905 = vsub.s32 %v550, %v904
    %v906 = vrot.slane %v423, %v905
    %v907 = vsel %vm555, %v906, %v902
    %v908 = vlaneseq
    %v909 = vshrl.u32 %v908, 7
    %v910 = vsub.s32 %v557, %v909
    %v911 = vrot.slane %v426, %v910
    %v912 = vsel %vm562, %v911, %v907
    %v913 = vlaneseq
    %v914 = vshrl.u32 %v913, 7
    %v915 = vsub.s32 %v564, %v914
    %v916 = vrot.slane %v429, %v915
    %v917 = vsel %vm569, %v916, %v912
    %v918 = vlaneseq
    %v919 = vshrl.u32 %v918, 7
    %v920 = vsub.s32 %v571, %v919
    %v921 = vrot.slane %v432, %v920
    %v922 = vsel %vm576, %v921, %v917
    %v923 = vlaneseq
    %v924 = vshrl.u32 %v923, 7
    %v925 = vsub.s32 %v578, %v924
    %v926 = vrot.slane %v435, %v925
    %v927 = vsel %vm583, %v926, %v922
    %vm928 = vcmask 1041409
    %v929 = vsel %vm928, %v633, %v584
    %vm930 = vcmask 1042434
    %v931 = vsel %vm930, %v682, %v929
    %vm932 = vcmask 1043459
    %v933 = vsel %vm932, %v731, %v931
    %vm934 = vcmask 1044484
    %v935 = vsel %vm934, %v780, %v933
    %vm936 = vcmask 1045509
    %v937 = vsel %vm936, %v829, %v935
    %vm938 = vcmask 1046534
    %v939 = vsel %vm938, %v878, %v937
    %vm940 = vcmask 1047559
    %v941 = vsel %vm940, %v927, %v939
    %v943 = vadd.f32 %v193, %v941
    %vm944 = vcmask 637952
    %945 = vst.msk [vmem:[#allocation2] sm:$0xff] %vm944, %v943
    %v946 = vld [vmem:[#allocation4] sm:$0xff]
    %v947 = vsel %vm194, %v113, 0.0
    %948 = vadd.xlane.f32.xlu0 %v947
    %v949 = vpop.xlane.xlu0 %948
    %v950 = vsel %vm194, %v114, 0.0
    %951 = vadd.xlane.f32.xlu0 %v950
    %v952 = vpop.xlane.xlu0 %951
    %v953 = vsel %vm194, %v115, 0.0
    %954 = vadd.xlane.f32.xlu0 %v953
    %v955 = vpop.xlane.xlu0 %954
    %v956 = vsel %vm194, %v116, 0.0
    %957 = vadd.xlane.f32.xlu0 %v956
    %v958 = vpop.xlane.xlu0 %957
    %v959 = vsel %vm194, %v117, 0.0
    %960 = vadd.xlane.f32.xlu0 %v959
    %v961 = vpop.xlane.xlu0 %960
    %v962 = vsel %vm194, %v118, 0.0
    %963 = vadd.xlane.f32.xlu0 %v962
    %v964 = vpop.xlane.xlu0 %963
    %v965 = vsel %vm194, %v119, 0.0
    %966 = vadd.xlane.f32.xlu0 %v965
    %v967 = vpop.xlane.xlu0 %966
    %v968 = vsel %vm194, %v120, 0.0
    %969 = vadd.xlane.f32.xlu0 %v968
    %v970 = vpop.xlane.xlu0 %969
    %v971 = vsel %vm194, %v121, 0.0
    %972 = vadd.xlane.f32.xlu0 %v971
    %v973 = vpop.xlane.xlu0 %972
    %v974 = vsel %vm222, %v122, 0.0
    %975 = vadd.xlane.f32.xlu0 %v974
    %v976 = vpop.xlane.xlu0 %975
    %v977 = vsel %vm194, %v123, 0.0
    %978 = vadd.xlane.f32.xlu0 %v977
    %v979 = vpop.xlane.xlu0 %978
    %v980 = vsel %vm194, %v124, 0.0
    %981 = vadd.xlane.f32.xlu0 %v980
    %v982 = vpop.xlane.xlu0 %981
    %v983 = vsel %vm194, %v125, 0.0
    %984 = vadd.xlane.f32.xlu0 %v983
    %v985 = vpop.xlane.xlu0 %984
    %v986 = vsel %vm194, %v126, 0.0
    %987 = vadd.xlane.f32.xlu0 %v986
    %v988 = vpop.xlane.xlu0 %987
    %v989 = vsel %vm194, %v127, 0.0
    %990 = vadd.xlane.f32.xlu0 %v989
    %v991 = vpop.xlane.xlu0 %990
    %v992 = vsel %vm194, %v128, 0.0
    %993 = vadd.xlane.f32.xlu0 %v992
    %v994 = vpop.xlane.xlu0 %993
    %v995 = vsel %vm194, %v129, 0.0
    %996 = vadd.xlane.f32.xlu0 %v995
    %v997 = vpop.xlane.xlu0 %996
    %v998 = vsel %vm194, %v130, 0.0
    %999 = vadd.xlane.f32.xlu0 %v998
    %v1000 = vpop.xlane.xlu0 %999
    %v1001 = vsel %vm194, %v131, 0.0
    %1002 = vadd.xlane.f32.xlu0 %v1001
    %v1003 = vpop.xlane.xlu0 %1002
    %v1004 = vsel %vm222, %v132, 0.0
    %1005 = vadd.xlane.f32.xlu0 %v1004
    %v1006 = vpop.xlane.xlu0 %1005
    %v1007 = vsel %vm194, %v133, 0.0
    %1008 = vadd.xlane.f32.xlu0 %v1007
    %v1009 = vpop.xlane.xlu0 %1008
    %v1010 = vsel %vm194, %v134, 0.0
    %1011 = vadd.xlane.f32.xlu0 %v1010
    %v1012 = vpop.xlane.xlu0 %1011
    %v1013 = vsel %vm194, %v135, 0.0
    %1014 = vadd.xlane.f32.xlu0 %v1013
    %v1015 = vpop.xlane.xlu0 %1014
    %v1016 = vsel %vm194, %v136, 0.0
    %1017 = vadd.xlane.f32.xlu0 %v1016
    %v1018 = vpop.xlane.xlu0 %1017
    %v1019 = vsel %vm194, %v137, 0.0
    %1020 = vadd.xlane.f32.xlu0 %v1019
    %v1021 = vpop.xlane.xlu0 %1020
    %v1022 = vsel %vm194, %v138, 0.0
    %1023 = vadd.xlane.f32.xlu0 %v1022
    %v1024 = vpop.xlane.xlu0 %1023
    %v1025 = vsel %vm194, %v139, 0.0
    %1026 = vadd.xlane.f32.xlu0 %v1025
    %v1027 = vpop.xlane.xlu0 %1026
    %v1028 = vsel %vm194, %v140, 0.0
    %1029 = vadd.xlane.f32.xlu0 %v1028
    %v1030 = vpop.xlane.xlu0 %1029
    %v1031 = vsel %vm194, %v141, 0.0
    %1032 = vadd.xlane.f32.xlu0 %v1031
    %v1033 = vpop.xlane.xlu0 %1032
    %v1034 = vsel %vm222, %v142, 0.0
    %1035 = vadd.xlane.f32.xlu0 %v1034
    %v1036 = vpop.xlane.xlu0 %1035
    %v1037 = vsel %vm194, %v143, 0.0
    %1038 = vadd.xlane.f32.xlu0 %v1037
    %v1039 = vpop.xlane.xlu0 %1038
    %v1040 = vsel %vm194, %v144, 0.0
    %1041 = vadd.xlane.f32.xlu0 %v1040
    %v1042 = vpop.xlane.xlu0 %1041
    %v1043 = vsel %vm194, %v145, 0.0
    %1044 = vadd.xlane.f32.xlu0 %v1043
    %v1045 = vpop.xlane.xlu0 %1044
    %v1046 = vsel %vm194, %v146, 0.0
    %1047 = vadd.xlane.f32.xlu0 %v1046
    %v1048 = vpop.xlane.xlu0 %1047
    %v1049 = vsel %vm194, %v147, 0.0
    %1050 = vadd.xlane.f32.xlu0 %v1049
    %v1051 = vpop.xlane.xlu0 %1050
    %v1052 = vsel %vm194, %v148, 0.0
    %1053 = vadd.xlane.f32.xlu0 %v1052
    %v1054 = vpop.xlane.xlu0 %1053
    %v1055 = vsel %vm194, %v149, 0.0
    %1056 = vadd.xlane.f32.xlu0 %v1055
    %v1057 = vpop.xlane.xlu0 %1056
    %v1058 = vsel %vm194, %v150, 0.0
    %1059 = vadd.xlane.f32.xlu0 %v1058
    %v1060 = vpop.xlane.xlu0 %1059
    %v1061 = vsel %vm194, %v151, 0.0
    %1062 = vadd.xlane.f32.xlu0 %v1061
    %v1063 = vpop.xlane.xlu0 %1062
    %v1064 = vsel %vm222, %v152, 0.0
    %1065 = vadd.xlane.f32.xlu0 %v1064
    %v1066 = vpop.xlane.xlu0 %1065
    %v1067 = vsel %vm194, %v153, 0.0
    %1068 = vadd.xlane.f32.xlu0 %v1067
    %v1069 = vpop.xlane.xlu0 %1068
    %v1070 = vsel %vm194, %v154, 0.0
    %1071 = vadd.xlane.f32.xlu0 %v1070
    %v1072 = vpop.xlane.xlu0 %1071
    %v1073 = vsel %vm194, %v155, 0.0
    %1074 = vadd.xlane.f32.xlu0 %v1073
    %v1075 = vpop.xlane.xlu0 %1074
    %v1076 = vsel %vm194, %v156, 0.0
    %1077 = vadd.xlane.f32.xlu0 %v1076
    %v1078 = vpop.xlane.xlu0 %1077
    %v1079 = vsel %vm194, %v157, 0.0
    %1080 = vadd.xlane.f32.xlu0 %v1079
    %v1081 = vpop.xlane.xlu0 %1080
    %v1082 = vsel %vm194, %v158, 0.0
    %1083 = vadd.xlane.f32.xlu0 %v1082
    %v1084 = vpop.xlane.xlu0 %1083
    %v1085 = vsel %vm194, %v159, 0.0
    %1086 = vadd.xlane.f32.xlu0 %v1085
    %v1087 = vpop.xlane.xlu0 %1086
    %v1088 = vsel %vm194, %v160, 0.0
    %1089 = vadd.xlane.f32.xlu0 %v1088
    %v1090 = vpop.xlane.xlu0 %1089
    %v1091 = vsel %vm194, %v161, 0.0
    %1092 = vadd.xlane.f32.xlu0 %v1091
    %v1093 = vpop.xlane.xlu0 %1092
    %v1094 = vsel %vm222, %v162, 0.0
    %1095 = vadd.xlane.f32.xlu0 %v1094
    %v1096 = vpop.xlane.xlu0 %1095
    %v1097 = vsel %vm194, %v163, 0.0
    %1098 = vadd.xlane.f32.xlu0 %v1097
    %v1099 = vpop.xlane.xlu0 %1098
    %v1100 = vsel %vm194, %v164, 0.0
    %1101 = vadd.xlane.f32.xlu0 %v1100
    %v1102 = vpop.xlane.xlu0 %1101
    %v1103 = vsel %vm194, %v165, 0.0
    %1104 = vadd.xlane.f32.xlu0 %v1103
    %v1105 = vpop.xlane.xlu0 %1104
    %v1106 = vsel %vm194, %v166, 0.0
    %1107 = vadd.xlane.f32.xlu0 %v1106
    %v1108 = vpop.xlane.xlu0 %1107
    %v1109 = vsel %vm194, %v167, 0.0
    %1110 = vadd.xlane.f32.xlu0 %v1109
    %v1111 = vpop.xlane.xlu0 %1110
    %v1112 = vsel %vm194, %v168, 0.0
    %1113 = vadd.xlane.f32.xlu0 %v1112
    %v1114 = vpop.xlane.xlu0 %1113
    %v1115 = vsel %vm194, %v169, 0.0
    %1116 = vadd.xlane.f32.xlu0 %v1115
    %v1117 = vpop.xlane.xlu0 %1116
    %v1118 = vsel %vm194, %v170, 0.0
    %1119 = vadd.xlane.f32.xlu0 %v1118
    %v1120 = vpop.xlane.xlu0 %1119
    %v1121 = vsel %vm194, %v171, 0.0
    %1122 = vadd.xlane.f32.xlu0 %v1121
    %v1123 = vpop.xlane.xlu0 %1122
    %v1124 = vsel %vm222, %v172, 0.0
    %1125 = vadd.xlane.f32.xlu0 %v1124
    %v1126 = vpop.xlane.xlu0 %1125
    %v1127 = vsel %vm194, %v173, 0.0
    %1128 = vadd.xlane.f32.xlu0 %v1127
    %v1129 = vpop.xlane.xlu0 %1128
    %v1130 = vsel %vm194, %v174, 0.0
    %1131 = vadd.xlane.f32.xlu0 %v1130
    %v1132 = vpop.xlane.xlu0 %1131
    %v1133 = vsel %vm194, %v175, 0.0
    %1134 = vadd.xlane.f32.xlu0 %v1133
    %v1135 = vpop.xlane.xlu0 %1134
    %v1136 = vsel %vm194, %v176, 0.0
    %1137 = vadd.xlane.f32.xlu0 %v1136
    %v1138 = vpop.xlane.xlu0 %1137
    %v1139 = vsel %vm194, %v177, 0.0
    %1140 = vadd.xlane.f32.xlu0 %v1139
    %v1141 = vpop.xlane.xlu0 %1140
    %v1142 = vsel %vm194, %v178, 0.0
    %1143 = vadd.xlane.f32.xlu0 %v1142
    %v1144 = vpop.xlane.xlu0 %1143
    %v1145 = vsel %vm194, %v179, 0.0
    %1146 = vadd.xlane.f32.xlu0 %v1145
    %v1147 = vpop.xlane.xlu0 %1146
    %v1148 = vsel %vm194, %v180, 0.0
    %1149 = vadd.xlane.f32.xlu0 %v1148
    %v1150 = vpop.xlane.xlu0 %1149
    %v1151 = vsel %vm194, %v181, 0.0
    %1152 = vadd.xlane.f32.xlu0 %v1151
    %v1153 = vpop.xlane.xlu0 %1152
    %v1154 = vsel %vm222, %v182, 0.0
    %1155 = vadd.xlane.f32.xlu0 %v1154
    %v1156 = vpop.xlane.xlu0 %1155
    %v1157 = vsel %vm194, %v183, 0.0
    %1158 = vadd.xlane.f32.xlu0 %v1157
    %v1159 = vpop.xlane.xlu0 %1158
    %v1160 = vsel %vm194, %v184, 0.0
    %1161 = vadd.xlane.f32.xlu0 %v1160
    %v1162 = vpop.xlane.xlu0 %1161
    %v1163 = vsel %vm194, %v185, 0.0
    %1164 = vadd.xlane.f32.xlu0 %v1163
    %v1165 = vpop.xlane.xlu0 %1164
    %v1166 = vsel %vm194, %v186, 0.0
    %1167 = vadd.xlane.f32.xlu0 %v1166
    %v1168 = vpop.xlane.xlu0 %1167
    %v1169 = vsel %vm194, %v187, 0.0
    %1170 = vadd.xlane.f32.xlu0 %v1169
    %v1171 = vpop.xlane.xlu0 %1170
    %v1172 = vsel %vm194, %v188, 0.0
    %1173 = vadd.xlane.f32.xlu0 %v1172
    %v1174 = vpop.xlane.xlu0 %1173
    %v1175 = vsel %vm194, %v189, 0.0
    %1176 = vadd.xlane.f32.xlu0 %v1175
    %v1177 = vpop.xlane.xlu0 %1176
    %v1178 = vsel %vm194, %v190, 0.0
    %1179 = vadd.xlane.f32.xlu0 %v1178
    %v1180 = vpop.xlane.xlu0 %1179
    %v1181 = vsel %vm194, %v191, 0.0
    %1182 = vadd.xlane.f32.xlu0 %v1181
    %v1183 = vpop.xlane.xlu0 %1182
    %v1184 = vsel %vm222, %v192, 0.0
    %1185 = vadd.xlane.f32.xlu0 %v1184
    %v1186 = vpop.xlane.xlu0 %1185
    %v1267 = vlaneseq
    %v1268 = vshrl.u32 %v1267, 7
    %v1269 = vsub.s32 %v517, %v1268
    %v1270 = vrot.slane %v949, %v1269
    %v1271 = vlaneseq
    %v1272 = vshrl.u32 %v1271, 7
    %v1273 = vsub.s32 %v522, %v1272
    %v1274 = vrot.slane %v952, %v1273
    %v1275 = vsel %vm527, %v1274, %v1270
    %v1276 = vlaneseq
    %v1277 = vshrl.u32 %v1276, 7
    %v1278 = vsub.s32 %v529, %v1277
    %v1279 = vrot.slane %v955, %v1278
    %v1280 = vsel %vm534, %v1279, %v1275
    %v1281 = vlaneseq
    %v1282 = vshrl.u32 %v1281, 7
    %v1283 = vsub.s32 %v536, %v1282
    %v1284 = vrot.slane %v958, %v1283
    %v1285 = vsel %vm541, %v1284, %v1280
    %v1286 = vlaneseq
    %v1287 = vshrl.u32 %v1286, 7
    %v1288 = vsub.s32 %v543, %v1287
    %v1289 = vrot.slane %v961, %v1288
    %v1290 = vsel %vm548, %v1289, %v1285
    %v1291 = vlaneseq
    %v1292 = vshrl.u32 %v1291, 7
    %v1293 = vsub.s32 %v550, %v1292
    %v1294 = vrot.slane %v964, %v1293
    %v1295 = vsel %vm555, %v1294, %v1290
    %v1296 = vlaneseq
    %v1297 = vshrl.u32 %v1296, 7
    %v1298 = vsub.s32 %v557, %v1297
    %v1299 = vrot.slane %v967, %v1298
    %v1300 = vsel %vm562, %v1299, %v1295
    %v1301 = vlaneseq
    %v1302 = vshrl.u32 %v1301, 7
    %v1303 = vsub.s32 %v564, %v1302
    %v1304 = vrot.slane %v970, %v1303
    %v1305 = vsel %vm569, %v1304, %v1300
    %v1306 = vlaneseq
    %v1307 = vshrl.u32 %v1306, 7
    %v1308 = vsub.s32 %v571, %v1307
    %v1309 = vrot.slane %v973, %v1308
    %v1310 = vsel %vm576, %v1309, %v1305
    %v1311 = vlaneseq
    %v1312 = vshrl.u32 %v1311, 7
    %v1313 = vsub.s32 %v578, %v1312
    %v1314 = vrot.slane %v976, %v1313
    %v1315 = vsel %vm583, %v1314, %v1310
    %v1316 = vlaneseq
    %v1317 = vshrl.u32 %v1316, 7
    %v1318 = vsub.s32 %v517, %v1317
    %v1319 = vrot.slane %v979, %v1318
    %v1320 = vlaneseq
    %v1321 = vshrl.u32 %v1320, 7
    %v1322 = vsub.s32 %v522, %v1321
    %v1323 = vrot.slane %v982, %v1322
    %v1324 = vsel %vm527, %v1323, %v1319
    %v1325 = vlaneseq
    %v1326 = vshrl.u32 %v1325, 7
    %v1327 = vsub.s32 %v529, %v1326
    %v1328 = vrot.slane %v985, %v1327
    %v1329 = vsel %vm534, %v1328, %v1324
    %v1330 = vlaneseq
    %v1331 = vshrl.u32 %v1330, 7
    %v1332 = vsub.s32 %v536, %v1331
    %v1333 = vrot.slane %v988, %v1332
    %v1334 = vsel %vm541, %v1333, %v1329
    %v1335 = vlaneseq
    %v1336 = vshrl.u32 %v1335, 7
    %v1337 = vsub.s32 %v543, %v1336
    %v1338 = vrot.slane %v991, %v1337
    %v1339 = vsel %vm548, %v1338, %v1334
    %v1340 = vlaneseq
    %v1341 = vshrl.u32 %v1340, 7
    %v1342 = vsub.s32 %v550, %v1341
    %v1343 = vrot.slane %v994, %v1342
    %v1344 = vsel %vm555, %v1343, %v1339
    %v1345 = vlaneseq
    %v1346 = vshrl.u32 %v1345, 7
    %v1347 = vsub.s32 %v557, %v1346
    %v1348 = vrot.slane %v997, %v1347
    %v1349 = vsel %vm562, %v1348, %v1344
    %v1350 = vlaneseq
    %v1351 = vshrl.u32 %v1350, 7
    %v1352 = vsub.s32 %v564, %v1351
    %v1353 = vrot.slane %v1000, %v1352
    %v1354 = vsel %vm569, %v1353, %v1349
    %v1355 = vlaneseq
    %v1356 = vshrl.u32 %v1355, 7
    %v1357 = vsub.s32 %v571, %v1356
    %v1358 = vrot.slane %v1003, %v1357
    %v1359 = vsel %vm576, %v1358, %v1354
    %v1360 = vlaneseq
    %v1361 = vshrl.u32 %v1360, 7
    %v1362 = vsub.s32 %v578, %v1361
    %v1363 = vrot.slane %v1006, %v1362
    %v1364 = vsel %vm583, %v1363, %v1359
    %v1365 = vlaneseq
    %v1366 = vshrl.u32 %v1365, 7
    %v1367 = vsub.s32 %v517, %v1366
    %v1368 = vrot.slane %v1009, %v1367
    %v1369 = vlaneseq
    %v1370 = vshrl.u32 %v1369, 7
    %v1371 = vsub.s32 %v522, %v1370
    %v1372 = vrot.slane %v1012, %v1371
    %v1373 = vsel %vm527, %v1372, %v1368
    %v1374 = vlaneseq
    %v1375 = vshrl.u32 %v1374, 7
    %v1376 = vsub.s32 %v529, %v1375
    %v1377 = vrot.slane %v1015, %v1376
    %v1378 = vsel %vm534, %v1377, %v1373
    %v1379 = vlaneseq
    %v1380 = vshrl.u32 %v1379, 7
    %v1381 = vsub.s32 %v536, %v1380
    %v1382 = vrot.slane %v1018, %v1381
    %v1383 = vsel %vm541, %v1382, %v1378
    %v1384 = vlaneseq
    %v1385 = vshrl.u32 %v1384, 7
    %v1386 = vsub.s32 %v543, %v1385
    %v1387 = vrot.slane %v1021, %v1386
    %v1388 = vsel %vm548, %v1387, %v1383
    %v1389 = vlaneseq
    %v1390 = vshrl.u32 %v1389, 7
    %v1391 = vsub.s32 %v550, %v1390
    %v1392 = vrot.slane %v1024, %v1391
    %v1393 = vsel %vm555, %v1392, %v1388
    %v1394 = vlaneseq
    %v1395 = vshrl.u32 %v1394, 7
    %v1396 = vsub.s32 %v557, %v1395
    %v1397 = vrot.slane %v1027, %v1396
    %v1398 = vsel %vm562, %v1397, %v1393
    %v1399 = vlaneseq
    %v1400 = vshrl.u32 %v1399, 7
    %v1401 = vsub.s32 %v564, %v1400
    %v1402 = vrot.slane %v1030, %v1401
    %v1403 = vsel %vm569, %v1402, %v1398
    %v1404 = vlaneseq
    %v1405 = vshrl.u32 %v1404, 7
    %v1406 = vsub.s32 %v571, %v1405
    %v1407 = vrot.slane %v1033, %v1406
    %v1408 = vsel %vm576, %v1407, %v1403
    %v1409 = vlaneseq
    %v1410 = vshrl.u32 %v1409, 7
    %v1411 = vsub.s32 %v578, %v1410
    %v1412 = vrot.slane %v1036, %v1411
    %v1413 = vsel %vm583, %v1412, %v1408
    %v1414 = vlaneseq
    %v1415 = vshrl.u32 %v1414, 7
    %v1416 = vsub.s32 %v517, %v1415
    %v1417 = vrot.slane %v1039, %v1416
    %v1418 = vlaneseq
    %v1419 = vshrl.u32 %v1418, 7
    %v1420 = vsub.s32 %v522, %v1419
    %v1421 = vrot.slane %v1042, %v1420
    %v1422 = vsel %vm527, %v1421, %v1417
    %v1423 = vlaneseq
    %v1424 = vshrl.u32 %v1423, 7
    %v1425 = vsub.s32 %v529, %v1424
    %v1426 = vrot.slane %v1045, %v1425
    %v1427 = vsel %vm534, %v1426, %v1422
    %v1428 = vlaneseq
    %v1429 = vshrl.u32 %v1428, 7
    %v1430 = vsub.s32 %v536, %v1429
    %v1431 = vrot.slane %v1048, %v1430
    %v1432 = vsel %vm541, %v1431, %v1427
    %v1433 = vlaneseq
    %v1434 = vshrl.u32 %v1433, 7
    %v1435 = vsub.s32 %v543, %v1434
    %v1436 = vrot.slane %v1051, %v1435
    %v1437 = vsel %vm548, %v1436, %v1432
    %v1438 = vlaneseq
    %v1439 = vshrl.u32 %v1438, 7
    %v1440 = vsub.s32 %v550, %v1439
    %v1441 = vrot.slane %v1054, %v1440
    %v1442 = vsel %vm555, %v1441, %v1437
    %v1443 = vlaneseq
    %v1444 = vshrl.u32 %v1443, 7
    %v1445 = vsub.s32 %v557, %v1444
    %v1446 = vrot.slane %v1057, %v1445
    %v1447 = vsel %vm562, %v1446, %v1442
    %v1448 = vlaneseq
    %v1449 = vshrl.u32 %v1448, 7
    %v1450 = vsub.s32 %v564, %v1449
    %v1451 = vrot.slane %v1060, %v1450
    %v1452 = vsel %vm569, %v1451, %v1447
    %v1453 = vlaneseq
    %v1454 = vshrl.u32 %v1453, 7
    %v1455 = vsub.s32 %v571, %v1454
    %v1456 = vrot.slane %v1063, %v1455
    %v1457 = vsel %vm576, %v1456, %v1452
    %v1458 = vlaneseq
    %v1459 = vshrl.u32 %v1458, 7
    %v1460 = vsub.s32 %v578, %v1459
    %v1461 = vrot.slane %v1066, %v1460
    %v1462 = vsel %vm583, %v1461, %v1457
    %v1463 = vlaneseq
    %v1464 = vshrl.u32 %v1463, 7
    %v1465 = vsub.s32 %v517, %v1464
    %v1466 = vrot.slane %v1069, %v1465
    %v1467 = vlaneseq
    %v1468 = vshrl.u32 %v1467, 7
    %v1469 = vsub.s32 %v522, %v1468
    %v1470 = vrot.slane %v1072, %v1469
    %v1471 = vsel %vm527, %v1470, %v1466
    %v1472 = vlaneseq
    %v1473 = vshrl.u32 %v1472, 7
    %v1474 = vsub.s32 %v529, %v1473
    %v1475 = vrot.slane %v1075, %v1474
    %v1476 = vsel %vm534, %v1475, %v1471
    %v1477 = vlaneseq
    %v1478 = vshrl.u32 %v1477, 7
    %v1479 = vsub.s32 %v536, %v1478
    %v1480 = vrot.slane %v1078, %v1479
    %v1481 = vsel %vm541, %v1480, %v1476
    %v1482 = vlaneseq
    %v1483 = vshrl.u32 %v1482, 7
    %v1484 = vsub.s32 %v543, %v1483
    %v1485 = vrot.slane %v1081, %v1484
    %v1486 = vsel %vm548, %v1485, %v1481
    %v1487 = vlaneseq
    %v1488 = vshrl.u32 %v1487, 7
    %v1489 = vsub.s32 %v550, %v1488
    %v1490 = vrot.slane %v1084, %v1489
    %v1491 = vsel %vm555, %v1490, %v1486
    %v1492 = vlaneseq
    %v1493 = vshrl.u32 %v1492, 7
    %v1494 = vsub.s32 %v557, %v1493
    %v1495 = vrot.slane %v1087, %v1494
    %v1496 = vsel %vm562, %v1495, %v1491
    %v1497 = vlaneseq
    %v1498 = vshrl.u32 %v1497, 7
    %v1499 = vsub.s32 %v564, %v1498
    %v1500 = vrot.slane %v1090, %v1499
    %v1501 = vsel %vm569, %v1500, %v1496
    %v1502 = vlaneseq
    %v1503 = vshrl.u32 %v1502, 7
    %v1504 = vsub.s32 %v571, %v1503
    %v1505 = vrot.slane %v1093, %v1504
    %v1506 = vsel %vm576, %v1505, %v1501
    %v1507 = vlaneseq
    %v1508 = vshrl.u32 %v1507, 7
    %v1509 = vsub.s32 %v578, %v1508
    %v1510 = vrot.slane %v1096, %v1509
    %v1511 = vsel %vm583, %v1510, %v1506
    %v1512 = vlaneseq
    %v1513 = vshrl.u32 %v1512, 7
    %v1514 = vsub.s32 %v517, %v1513
    %v1515 = vrot.slane %v1099, %v1514
    %v1516 = vlaneseq
    %v1517 = vshrl.u32 %v1516, 7
    %v1518 = vsub.s32 %v522, %v1517
    %v1519 = vrot.slane %v1102, %v1518
    %v1520 = vsel %vm527, %v1519, %v1515
    %v1521 = vlaneseq
    %v1522 = vshrl.u32 %v1521, 7
    %v1523 = vsub.s32 %v529, %v1522
    %v1524 = vrot.slane %v1105, %v1523
    %v1525 = vsel %vm534, %v1524, %v1520
    %v1526 = vlaneseq
    %v1527 = vshrl.u32 %v1526, 7
    %v1528 = vsub.s32 %v536, %v1527
    %v1529 = vrot.slane %v1108, %v1528
    %v1530 = vsel %vm541, %v1529, %v1525
    %v1531 = vlaneseq
    %v1532 = vshrl.u32 %v1531, 7
    %v1533 = vsub.s32 %v543, %v1532
    %v1534 = vrot.slane %v1111, %v1533
    %v1535 = vsel %vm548, %v1534, %v1530
    %v1536 = vlaneseq
    %v1537 = vshrl.u32 %v1536, 7
    %v1538 = vsub.s32 %v550, %v1537
    %v1539 = vrot.slane %v1114, %v1538
    %v1540 = vsel %vm555, %v1539, %v1535
    %v1541 = vlaneseq
    %v1542 = vshrl.u32 %v1541, 7
    %v1543 = vsub.s32 %v557, %v1542
    %v1544 = vrot.slane %v1117, %v1543
    %v1545 = vsel %vm562, %v1544, %v1540
    %v1546 = vlaneseq
    %v1547 = vshrl.u32 %v1546, 7
    %v1548 = vsub.s32 %v564, %v1547
    %v1549 = vrot.slane %v1120, %v1548
    %v1550 = vsel %vm569, %v1549, %v1545
    %v1551 = vlaneseq
    %v1552 = vshrl.u32 %v1551, 7
    %v1553 = vsub.s32 %v571, %v1552
    %v1554 = vrot.slane %v1123, %v1553
    %v1555 = vsel %vm576, %v1554, %v1550
    %v1556 = vlaneseq
    %v1557 = vshrl.u32 %v1556, 7
    %v1558 = vsub.s32 %v578, %v1557
    %v1559 = vrot.slane %v1126, %v1558
    %v1560 = vsel %vm583, %v1559, %v1555
    %v1561 = vlaneseq
    %v1562 = vshrl.u32 %v1561, 7
    %v1563 = vsub.s32 %v517, %v1562
    %v1564 = vrot.slane %v1129, %v1563
    %v1565 = vlaneseq
    %v1566 = vshrl.u32 %v1565, 7
    %v1567 = vsub.s32 %v522, %v1566
    %v1568 = vrot.slane %v1132, %v1567
    %v1569 = vsel %vm527, %v1568, %v1564
    %v1570 = vlaneseq
    %v1571 = vshrl.u32 %v1570, 7
    %v1572 = vsub.s32 %v529, %v1571
    %v1573 = vrot.slane %v1135, %v1572
    %v1574 = vsel %vm534, %v1573, %v1569
    %v1575 = vlaneseq
    %v1576 = vshrl.u32 %v1575, 7
    %v1577 = vsub.s32 %v536, %v1576
    %v1578 = vrot.slane %v1138, %v1577
    %v1579 = vsel %vm541, %v1578, %v1574
    %v1580 = vlaneseq
    %v1581 = vshrl.u32 %v1580, 7
    %v1582 = vsub.s32 %v543, %v1581
    %v1583 = vrot.slane %v1141, %v1582
    %v1584 = vsel %vm548, %v1583, %v1579
    %v1585 = vlaneseq
    %v1586 = vshrl.u32 %v1585, 7
    %v1587 = vsub.s32 %v550, %v1586
    %v1588 = vrot.slane %v1144, %v1587
    %v1589 = vsel %vm555, %v1588, %v1584
    %v1590 = vlaneseq
    %v1591 = vshrl.u32 %v1590, 7
    %v1592 = vsub.s32 %v557, %v1591
    %v1593 = vrot.slane %v1147, %v1592
    %v1594 = vsel %vm562, %v1593, %v1589
    %v1595 = vlaneseq
    %v1596 = vshrl.u32 %v1595, 7
    %v1597 = vsub.s32 %v564, %v1596
    %v1598 = vrot.slane %v1150, %v1597
    %v1599 = vsel %vm569, %v1598, %v1594
    %v1600 = vlaneseq
    %v1601 = vshrl.u32 %v1600, 7
    %v1602 = vsub.s32 %v571, %v1601
    %v1603 = vrot.slane %v1153, %v1602
    %v1604 = vsel %vm576, %v1603, %v1599
    %v1605 = vlaneseq
    %v1606 = vshrl.u32 %v1605, 7
    %v1607 = vsub.s32 %v578, %v1606
    %v1608 = vrot.slane %v1156, %v1607
    %v1609 = vsel %vm583, %v1608, %v1604
    %v1610 = vlaneseq
    %v1611 = vshrl.u32 %v1610, 7
    %v1612 = vsub.s32 %v517, %v1611
    %v1613 = vrot.slane %v1159, %v1612
    %v1614 = vlaneseq
    %v1615 = vshrl.u32 %v1614, 7
    %v1616 = vsub.s32 %v522, %v1615
    %v1617 = vrot.slane %v1162, %v1616
    %v1618 = vsel %vm527, %v1617, %v1613
    %v1619 = vlaneseq
    %v1620 = vshrl.u32 %v1619, 7
    %v1621 = vsub.s32 %v529, %v1620
    %v1622 = vrot.slane %v1165, %v1621
    %v1623 = vsel %vm534, %v1622, %v1618
    %v1624 = vlaneseq
    %v1625 = vshrl.u32 %v1624, 7
    %v1626 = vsub.s32 %v536, %v1625
    %v1627 = vrot.slane %v1168, %v1626
    %v1628 = vsel %vm541, %v1627, %v1623
    %v1629 = vlaneseq
    %v1630 = vshrl.u32 %v1629, 7
    %v1631 = vsub.s32 %v543, %v1630
    %v1632 = vrot.slane %v1171, %v1631
    %v1633 = vsel %vm548, %v1632, %v1628
    %v1634 = vlaneseq
    %v1635 = vshrl.u32 %v1634, 7
    %v1636 = vsub.s32 %v550, %v1635
    %v1637 = vrot.slane %v1174, %v1636
    %v1638 = vsel %vm555, %v1637, %v1633
    %v1639 = vlaneseq
    %v1640 = vshrl.u32 %v1639, 7
    %v1641 = vsub.s32 %v557, %v1640
    %v1642 = vrot.slane %v1177, %v1641
    %v1643 = vsel %vm562, %v1642, %v1638
    %v1644 = vlaneseq
    %v1645 = vshrl.u32 %v1644, 7
    %v1646 = vsub.s32 %v564, %v1645
    %v1647 = vrot.slane %v1180, %v1646
    %v1648 = vsel %vm569, %v1647, %v1643
    %v1649 = vlaneseq
    %v1650 = vshrl.u32 %v1649, 7
    %v1651 = vsub.s32 %v571, %v1650
    %v1652 = vrot.slane %v1183, %v1651
    %v1653 = vsel %vm576, %v1652, %v1648
    %v1654 = vlaneseq
    %v1655 = vshrl.u32 %v1654, 7
    %v1656 = vsub.s32 %v578, %v1655
    %v1657 = vrot.slane %v1186, %v1656
    %v1658 = vsel %vm583, %v1657, %v1653
    %v1659 = vsel %vm928, %v1364, %v1315
    %v1660 = vsel %vm930, %v1413, %v1659
    %v1661 = vsel %vm932, %v1462, %v1660
    %v1662 = vsel %vm934, %v1511, %v1661
    %v1663 = vsel %vm936, %v1560, %v1662
    %v1664 = vsel %vm938, %v1609, %v1663
    %v1665 = vsel %vm940, %v1658, %v1664
    %v1667 = vadd.f32 %v946, %v1665
    %1668 = vst.msk [vmem:[#allocation4] sm:$0xff] %vm944, %v1667
    %v1669 = vld [vmem:[#allocation3] sm:$0xff]
    %v1670 = vsel %vm194, %v33, -inf
    %1671 = vmax.xlane.f32.xlu0 %v1670
    %v1672 = vpop.xlane.xlu0 %1671
    %v1673 = vsel %vm194, %v34, -inf
    %1674 = vmax.xlane.f32.xlu0 %v1673
    %v1675 = vpop.xlane.xlu0 %1674
    %v1676 = vsel %vm194, %v35, -inf
    %1677 = vmax.xlane.f32.xlu0 %v1676
    %v1678 = vpop.xlane.xlu0 %1677
    %v1679 = vsel %vm194, %v36, -inf
    %1680 = vmax.xlane.f32.xlu0 %v1679
    %v1681 = vpop.xlane.xlu0 %1680
    %v1682 = vsel %vm194, %v37, -inf
    %1683 = vmax.xlane.f32.xlu0 %v1682
    %v1684 = vpop.xlane.xlu0 %1683
    %v1685 = vsel %vm194, %v38, -inf
    %1686 = vmax.xlane.f32.xlu0 %v1685
    %v1687 = vpop.xlane.xlu0 %1686
    %v1688 = vsel %vm194, %v39, -inf
    %1689 = vmax.xlane.f32.xlu0 %v1688
    %v1690 = vpop.xlane.xlu0 %1689
    %v1691 = vsel %vm194, %v40, -inf
    %1692 = vmax.xlane.f32.xlu0 %v1691
    %v1693 = vpop.xlane.xlu0 %1692
    %v1694 = vsel %vm194, %v41, -inf
    %1695 = vmax.xlane.f32.xlu0 %v1694
    %v1696 = vpop.xlane.xlu0 %1695
    %v1697 = vsel %vm222, %v42, -inf
    %1698 = vmax.xlane.f32.xlu0 %v1697
    %v1699 = vpop.xlane.xlu0 %1698
    %v1700 = vsel %vm194, %v43, -inf
    %1701 = vmax.xlane.f32.xlu0 %v1700
    %v1702 = vpop.xlane.xlu0 %1701
    %v1703 = vsel %vm194, %v44, -inf
    %1704 = vmax.xlane.f32.xlu0 %v1703
    %v1705 = vpop.xlane.xlu0 %1704
    %v1706 = vsel %vm194, %v45, -inf
    %1707 = vmax.xlane.f32.xlu0 %v1706
    %v1708 = vpop.xlane.xlu0 %1707
    %v1709 = vsel %vm194, %v46, -inf
    %1710 = vmax.xlane.f32.xlu0 %v1709
    %v1711 = vpop.xlane.xlu0 %1710
    %v1712 = vsel %vm194, %v47, -inf
    %1713 = vmax.xlane.f32.xlu0 %v1712
    %v1714 = vpop.xlane.xlu0 %1713
    %v1715 = vsel %vm194, %v48, -inf
    %1716 = vmax.xlane.f32.xlu0 %v1715
    %v1717 = vpop.xlane.xlu0 %1716
    %v1718 = vsel %vm194, %v49, -inf
    %1719 = vmax.xlane.f32.xlu0 %v1718
    %v1720 = vpop.xlane.xlu0 %1719
    %v1721 = vsel %vm194, %v50, -inf
    %1722 = vmax.xlane.f32.xlu0 %v1721
    %v1723 = vpop.xlane.xlu0 %1722
    %v1724 = vsel %vm194, %v51, -inf
    %1725 = vmax.xlane.f32.xlu0 %v1724
    %v1726 = vpop.xlane.xlu0 %1725
    %v1727 = vsel %vm222, %v52, -inf
    %1728 = vmax.xlane.f32.xlu0 %v1727
    %v1729 = vpop.xlane.xlu0 %1728
    %v1730 = vsel %vm194, %v53, -inf
    %1731 = vmax.xlane.f32.xlu0 %v1730
    %v1732 = vpop.xlane.xlu0 %1731
    %v1733 = vsel %vm194, %v54, -inf
    %1734 = vmax.xlane.f32.xlu0 %v1733
    %v1735 = vpop.xlane.xlu0 %1734
    %v1736 = vsel %vm194, %v55, -inf
    %1737 = vmax.xlane.f32.xlu0 %v1736
    %v1738 = vpop.xlane.xlu0 %1737
    %v1739 = vsel %vm194, %v56, -inf
    %1740 = vmax.xlane.f32.xlu0 %v1739
    %v1741 = vpop.xlane.xlu0 %1740
    %v1742 = vsel %vm194, %v57, -inf
    %1743 = vmax.xlane.f32.xlu0 %v1742
    %v1744 = vpop.xlane.xlu0 %1743
    %v1745 = vsel %vm194, %v58, -inf
    %1746 = vmax.xlane.f32.xlu0 %v1745
    %v1747 = vpop.xlane.xlu0 %1746
    %v1748 = vsel %vm194, %v59, -inf
    %1749 = vmax.xlane.f32.xlu0 %v1748
    %v1750 = vpop.xlane.xlu0 %1749
    %v1751 = vsel %vm194, %v60, -inf
    %1752 = vmax.xlane.f32.xlu0 %v1751
    %v1753 = vpop.xlane.xlu0 %1752
    %v1754 = vsel %vm194, %v61, -inf
    %1755 = vmax.xlane.f32.xlu0 %v1754
    %v1756 = vpop.xlane.xlu0 %1755
    %v1757 = vsel %vm222, %v62, -inf
    %1758 = vmax.xlane.f32.xlu0 %v1757
    %v1759 = vpop.xlane.xlu0 %1758
    %v1760 = vsel %vm194, %v63, -inf
    %1761 = vmax.xlane.f32.xlu0 %v1760
    %v1762 = vpop.xlane.xlu0 %1761
    %v1763 = vsel %vm194, %v64, -inf
    %1764 = vmax.xlane.f32.xlu0 %v1763
    %v1765 = vpop.xlane.xlu0 %1764
    %v1766 = vsel %vm194, %v65, -inf
    %1767 = vmax.xlane.f32.xlu0 %v1766
    %v1768 = vpop.xlane.xlu0 %1767
    %v1769 = vsel %vm194, %v66, -inf
    %1770 = vmax.xlane.f32.xlu0 %v1769
    %v1771 = vpop.xlane.xlu0 %1770
    %v1772 = vsel %vm194, %v67, -inf
    %1773 = vmax.xlane.f32.xlu0 %v1772
    %v1774 = vpop.xlane.xlu0 %1773
    %v1775 = vsel %vm194, %v68, -inf
    %1776 = vmax.xlane.f32.xlu0 %v1775
    %v1777 = vpop.xlane.xlu0 %1776
    %v1778 = vsel %vm194, %v69, -inf
    %1779 = vmax.xlane.f32.xlu0 %v1778
    %v1780 = vpop.xlane.xlu0 %1779
    %v1781 = vsel %vm194, %v70, -inf
    %1782 = vmax.xlane.f32.xlu0 %v1781
    %v1783 = vpop.xlane.xlu0 %1782
    %v1784 = vsel %vm194, %v71, -inf
    %1785 = vmax.xlane.f32.xlu0 %v1784
    %v1786 = vpop.xlane.xlu0 %1785
    %v1787 = vsel %vm222, %v72, -inf
    %1788 = vmax.xlane.f32.xlu0 %v1787
    %v1789 = vpop.xlane.xlu0 %1788
    %v1790 = vsel %vm194, %v73, -inf
    %1791 = vmax.xlane.f32.xlu0 %v1790
    %v1792 = vpop.xlane.xlu0 %1791
    %v1793 = vsel %vm194, %v74, -inf
    %1794 = vmax.xlane.f32.xlu0 %v1793
    %v1795 = vpop.xlane.xlu0 %1794
    %v1796 = vsel %vm194, %v75, -inf
    %1797 = vmax.xlane.f32.xlu0 %v1796
    %v1798 = vpop.xlane.xlu0 %1797
    %v1799 = vsel %vm194, %v76, -inf
    %1800 = vmax.xlane.f32.xlu0 %v1799
    %v1801 = vpop.xlane.xlu0 %1800
    %v1802 = vsel %vm194, %v77, -inf
    %1803 = vmax.xlane.f32.xlu0 %v1802
    %v1804 = vpop.xlane.xlu0 %1803
    %v1805 = vsel %vm194, %v78, -inf
    %1806 = vmax.xlane.f32.xlu0 %v1805
    %v1807 = vpop.xlane.xlu0 %1806
    %v1808 = vsel %vm194, %v79, -inf
    %1809 = vmax.xlane.f32.xlu0 %v1808
    %v1810 = vpop.xlane.xlu0 %1809
    %v1811 = vsel %vm194, %v80, -inf
    %1812 = vmax.xlane.f32.xlu0 %v1811
    %v1813 = vpop.xlane.xlu0 %1812
    %v1814 = vsel %vm194, %v81, -inf
    %1815 = vmax.xlane.f32.xlu0 %v1814
    %v1816 = vpop.xlane.xlu0 %1815
    %v1817 = vsel %vm222, %v82, -inf
    %1818 = vmax.xlane.f32.xlu0 %v1817
    %v1819 = vpop.xlane.xlu0 %1818
    %v1820 = vsel %vm194, %v83, -inf
    %1821 = vmax.xlane.f32.xlu0 %v1820
    %v1822 = vpop.xlane.xlu0 %1821
    %v1823 = vsel %vm194, %v84, -inf
    %1824 = vmax.xlane.f32.xlu0 %v1823
    %v1825 = vpop.xlane.xlu0 %1824
    %v1826 = vsel %vm194, %v85, -inf
    %1827 = vmax.xlane.f32.xlu0 %v1826
    %v1828 = vpop.xlane.xlu0 %1827
    %v1829 = vsel %vm194, %v86, -inf
    %1830 = vmax.xlane.f32.xlu0 %v1829
    %v1831 = vpop.xlane.xlu0 %1830
    %v1832 = vsel %vm194, %v87, -inf
    %1833 = vmax.xlane.f32.xlu0 %v1832
    %v1834 = vpop.xlane.xlu0 %1833
    %v1835 = vsel %vm194, %v88, -inf
    %1836 = vmax.xlane.f32.xlu0 %v1835
    %v1837 = vpop.xlane.xlu0 %1836
    %v1838 = vsel %vm194, %v89, -inf
    %1839 = vmax.xlane.f32.xlu0 %v1838
    %v1840 = vpop.xlane.xlu0 %1839
    %v1841 = vsel %vm194, %v90, -inf
    %1842 = vmax.xlane.f32.xlu0 %v1841
    %v1843 = vpop.xlane.xlu0 %1842
    %v1844 = vsel %vm194, %v91, -inf
    %1845 = vmax.xlane.f32.xlu0 %v1844
    %v1846 = vpop.xlane.xlu0 %1845
    %v1847 = vsel %vm222, %v92, -inf
    %1848 = vmax.xlane.f32.xlu0 %v1847
    %v1849 = vpop.xlane.xlu0 %1848
    %v1850 = vsel %vm194, %v93, -inf
    %1851 = vmax.xlane.f32.xlu0 %v1850
    %v1852 = vpop.xlane.xlu0 %1851
    %v1853 = vsel %vm194, %v94, -inf
    %1854 = vmax.xlane.f32.xlu0 %v1853
    %v1855 = vpop.xlane.xlu0 %1854
    %v1856 = vsel %vm194, %v95, -inf
    %1857 = vmax.xlane.f32.xlu0 %v1856
    %v1858 = vpop.xlane.xlu0 %1857
    %v1859 = vsel %vm194, %v96, -inf
    %1860 = vmax.xlane.f32.xlu0 %v1859
    %v1861 = vpop.xlane.xlu0 %1860
    %v1862 = vsel %vm194, %v97, -inf
    %1863 = vmax.xlane.f32.xlu0 %v1862
    %v1864 = vpop.xlane.xlu0 %1863
    %v1865 = vsel %vm194, %v98, -inf
    %1866 = vmax.xlane.f32.xlu0 %v1865
    %v1867 = vpop.xlane.xlu0 %1866
    %v1868 = vsel %vm194, %v99, -inf
    %1869 = vmax.xlane.f32.xlu0 %v1868
    %v1870 = vpop.xlane.xlu0 %1869
    %v1871 = vsel %vm194, %v100, -inf
    %1872 = vmax.xlane.f32.xlu0 %v1871
    %v1873 = vpop.xlane.xlu0 %1872
    %v1874 = vsel %vm194, %v101, -inf
    %1875 = vmax.xlane.f32.xlu0 %v1874
    %v1876 = vpop.xlane.xlu0 %1875
    %v1877 = vsel %vm222, %v102, -inf
    %1878 = vmax.xlane.f32.xlu0 %v1877
    %v1879 = vpop.xlane.xlu0 %1878
    %v1880 = vsel %vm194, %v103, -inf
    %1881 = vmax.xlane.f32.xlu0 %v1880
    %v1882 = vpop.xlane.xlu0 %1881
    %v1883 = vsel %vm194, %v104, -inf
    %1884 = vmax.xlane.f32.xlu0 %v1883
    %v1885 = vpop.xlane.xlu0 %1884
    %v1886 = vsel %vm194, %v105, -inf
    %1887 = vmax.xlane.f32.xlu0 %v1886
    %v1888 = vpop.xlane.xlu0 %1887
    %v1889 = vsel %vm194, %v106, -inf
    %1890 = vmax.xlane.f32.xlu0 %v1889
    %v1891 = vpop.xlane.xlu0 %1890
    %v1892 = vsel %vm194, %v107, -inf
    %1893 = vmax.xlane.f32.xlu0 %v1892
    %v1894 = vpop.xlane.xlu0 %1893
    %v1895 = vsel %vm194, %v108, -inf
    %1896 = vmax.xlane.f32.xlu0 %v1895
    %v1897 = vpop.xlane.xlu0 %1896
    %v1898 = vsel %vm194, %v109, -inf
    %1899 = vmax.xlane.f32.xlu0 %v1898
    %v1900 = vpop.xlane.xlu0 %1899
    %v1901 = vsel %vm194, %v110, -inf
    %1902 = vmax.xlane.f32.xlu0 %v1901
    %v1903 = vpop.xlane.xlu0 %1902
    %v1904 = vsel %vm194, %v111, -inf
    %1905 = vmax.xlane.f32.xlu0 %v1904
    %v1906 = vpop.xlane.xlu0 %1905
    %v1907 = vsel %vm222, %v112, -inf
    %1908 = vmax.xlane.f32.xlu0 %v1907
    %v1909 = vpop.xlane.xlu0 %1908
    %v1990 = vlaneseq
    %v1991 = vshrl.u32 %v1990, 7
    %v1992 = vsub.s32 %v517, %v1991
    %v1993 = vrot.slane %v1672, %v1992
    %v1994 = vlaneseq
    %v1995 = vshrl.u32 %v1994, 7
    %v1996 = vsub.s32 %v522, %v1995
    %v1997 = vrot.slane %v1675, %v1996
    %v1998 = vsel %vm527, %v1997, %v1993
    %v1999 = vlaneseq
    %v2000 = vshrl.u32 %v1999, 7
    %v2001 = vsub.s32 %v529, %v2000
    %v2002 = vrot.slane %v1678, %v2001
    %v2003 = vsel %vm534, %v2002, %v1998
    %v2004 = vlaneseq
    %v2005 = vshrl.u32 %v2004, 7
    %v2006 = vsub.s32 %v536, %v2005
    %v2007 = vrot.slane %v1681, %v2006
    %v2008 = vsel %vm541, %v2007, %v2003
    %v2009 = vlaneseq
    %v2010 = vshrl.u32 %v2009, 7
    %v2011 = vsub.s32 %v543, %v2010
    %v2012 = vrot.slane %v1684, %v2011
    %v2013 = vsel %vm548, %v2012, %v2008
    %v2014 = vlaneseq
    %v2015 = vshrl.u32 %v2014, 7
    %v2016 = vsub.s32 %v550, %v2015
    %v2017 = vrot.slane %v1687, %v2016
    %v2018 = vsel %vm555, %v2017, %v2013
    %v2019 = vlaneseq
    %v2020 = vshrl.u32 %v2019, 7
    %v2021 = vsub.s32 %v557, %v2020
    %v2022 = vrot.slane %v1690, %v2021
    %v2023 = vsel %vm562, %v2022, %v2018
    %v2024 = vlaneseq
    %v2025 = vshrl.u32 %v2024, 7
    %v2026 = vsub.s32 %v564, %v2025
    %v2027 = vrot.slane %v1693, %v2026
    %v2028 = vsel %vm569, %v2027, %v2023
    %v2029 = vlaneseq
    %v2030 = vshrl.u32 %v2029, 7
    %v2031 = vsub.s32 %v571, %v2030
    %v2032 = vrot.slane %v1696, %v2031
    %v2033 = vsel %vm576, %v2032, %v2028
    %v2034 = vlaneseq
    %v2035 = vshrl.u32 %v2034, 7
    %v2036 = vsub.s32 %v578, %v2035
    %v2037 = vrot.slane %v1699, %v2036
    %v2038 = vsel %vm583, %v2037, %v2033
    %v2039 = vlaneseq
    %v2040 = vshrl.u32 %v2039, 7
    %v2041 = vsub.s32 %v517, %v2040
    %v2042 = vrot.slane %v1702, %v2041
    %v2043 = vlaneseq
    %v2044 = vshrl.u32 %v2043, 7
    %v2045 = vsub.s32 %v522, %v2044
    %v2046 = vrot.slane %v1705, %v2045
    %v2047 = vsel %vm527, %v2046, %v2042
    %v2048 = vlaneseq
    %v2049 = vshrl.u32 %v2048, 7
    %v2050 = vsub.s32 %v529, %v2049
    %v2051 = vrot.slane %v1708, %v2050
    %v2052 = vsel %vm534, %v2051, %v2047
    %v2053 = vlaneseq
    %v2054 = vshrl.u32 %v2053, 7
    %v2055 = vsub.s32 %v536, %v2054
    %v2056 = vrot.slane %v1711, %v2055
    %v2057 = vsel %vm541, %v2056, %v2052
    %v2058 = vlaneseq
    %v2059 = vshrl.u32 %v2058, 7
    %v2060 = vsub.s32 %v543, %v2059
    %v2061 = vrot.slane %v1714, %v2060
    %v2062 = vsel %vm548, %v2061, %v2057
    %v2063 = vlaneseq
    %v2064 = vshrl.u32 %v2063, 7
    %v2065 = vsub.s32 %v550, %v2064
    %v2066 = vrot.slane %v1717, %v2065
    %v2067 = vsel %vm555, %v2066, %v2062
    %v2068 = vlaneseq
    %v2069 = vshrl.u32 %v2068, 7
    %v2070 = vsub.s32 %v557, %v2069
    %v2071 = vrot.slane %v1720, %v2070
    %v2072 = vsel %vm562, %v2071, %v2067
    %v2073 = vlaneseq
    %v2074 = vshrl.u32 %v2073, 7
    %v2075 = vsub.s32 %v564, %v2074
    %v2076 = vrot.slane %v1723, %v2075
    %v2077 = vsel %vm569, %v2076, %v2072
    %v2078 = vlaneseq
    %v2079 = vshrl.u32 %v2078, 7
    %v2080 = vsub.s32 %v571, %v2079
    %v2081 = vrot.slane %v1726, %v2080
    %v2082 = vsel %vm576, %v2081, %v2077
    %v2083 = vlaneseq
    %v2084 = vshrl.u32 %v2083, 7
    %v2085 = vsub.s32 %v578, %v2084
    %v2086 = vrot.slane %v1729, %v2085
    %v2087 = vsel %vm583, %v2086, %v2082
    %v2088 = vlaneseq
    %v2089 = vshrl.u32 %v2088, 7
    %v2090 = vsub.s32 %v517, %v2089
    %v2091 = vrot.slane %v1732, %v2090
    %v2092 = vlaneseq
    %v2093 = vshrl.u32 %v2092, 7
    %v2094 = vsub.s32 %v522, %v2093
    %v2095 = vrot.slane %v1735, %v2094
    %v2096 = vsel %vm527, %v2095, %v2091
    %v2097 = vlaneseq
    %v2098 = vshrl.u32 %v2097, 7
    %v2099 = vsub.s32 %v529, %v2098
    %v2100 = vrot.slane %v1738, %v2099
    %v2101 = vsel %vm534, %v2100, %v2096
    %v2102 = vlaneseq
    %v2103 = vshrl.u32 %v2102, 7
    %v2104 = vsub.s32 %v536, %v2103
    %v2105 = vrot.slane %v1741, %v2104
    %v2106 = vsel %vm541, %v2105, %v2101
    %v2107 = vlaneseq
    %v2108 = vshrl.u32 %v2107, 7
    %v2109 = vsub.s32 %v543, %v2108
    %v2110 = vrot.slane %v1744, %v2109
    %v2111 = vsel %vm548, %v2110, %v2106
    %v2112 = vlaneseq
    %v2113 = vshrl.u32 %v2112, 7
    %v2114 = vsub.s32 %v550, %v2113
    %v2115 = vrot.slane %v1747, %v2114
    %v2116 = vsel %vm555, %v2115, %v2111
    %v2117 = vlaneseq
    %v2118 = vshrl.u32 %v2117, 7
    %v2119 = vsub.s32 %v557, %v2118
    %v2120 = vrot.slane %v1750, %v2119
    %v2121 = vsel %vm562, %v2120, %v2116
    %v2122 = vlaneseq
    %v2123 = vshrl.u32 %v2122, 7
    %v2124 = vsub.s32 %v564, %v2123
    %v2125 = vrot.slane %v1753, %v2124
    %v2126 = vsel %vm569, %v2125, %v2121
    %v2127 = vlaneseq
    %v2128 = vshrl.u32 %v2127, 7
    %v2129 = vsub.s32 %v571, %v2128
    %v2130 = vrot.slane %v1756, %v2129
    %v2131 = vsel %vm576, %v2130, %v2126
    %v2132 = vlaneseq
    %v2133 = vshrl.u32 %v2132, 7
    %v2134 = vsub.s32 %v578, %v2133
    %v2135 = vrot.slane %v1759, %v2134
    %v2136 = vsel %vm583, %v2135, %v2131
    %v2137 = vlaneseq
    %v2138 = vshrl.u32 %v2137, 7
    %v2139 = vsub.s32 %v517, %v2138
    %v2140 = vrot.slane %v1762, %v2139
    %v2141 = vlaneseq
    %v2142 = vshrl.u32 %v2141, 7
    %v2143 = vsub.s32 %v522, %v2142
    %v2144 = vrot.slane %v1765, %v2143
    %v2145 = vsel %vm527, %v2144, %v2140
    %v2146 = vlaneseq
    %v2147 = vshrl.u32 %v2146, 7
    %v2148 = vsub.s32 %v529, %v2147
    %v2149 = vrot.slane %v1768, %v2148
    %v2150 = vsel %vm534, %v2149, %v2145
    %v2151 = vlaneseq
    %v2152 = vshrl.u32 %v2151, 7
    %v2153 = vsub.s32 %v536, %v2152
    %v2154 = vrot.slane %v1771, %v2153
    %v2155 = vsel %vm541, %v2154, %v2150
    %v2156 = vlaneseq
    %v2157 = vshrl.u32 %v2156, 7
    %v2158 = vsub.s32 %v543, %v2157
    %v2159 = vrot.slane %v1774, %v2158
    %v2160 = vsel %vm548, %v2159, %v2155
    %v2161 = vlaneseq
    %v2162 = vshrl.u32 %v2161, 7
    %v2163 = vsub.s32 %v550, %v2162
    %v2164 = vrot.slane %v1777, %v2163
    %v2165 = vsel %vm555, %v2164, %v2160
    %v2166 = vlaneseq
    %v2167 = vshrl.u32 %v2166, 7
    %v2168 = vsub.s32 %v557, %v2167
    %v2169 = vrot.slane %v1780, %v2168
    %v2170 = vsel %vm562, %v2169, %v2165
    %v2171 = vlaneseq
    %v2172 = vshrl.u32 %v2171, 7
    %v2173 = vsub.s32 %v564, %v2172
    %v2174 = vrot.slane %v1783, %v2173
    %v2175 = vsel %vm569, %v2174, %v2170
    %v2176 = vlaneseq
    %v2177 = vshrl.u32 %v2176, 7
    %v2178 = vsub.s32 %v571, %v2177
    %v2179 = vrot.slane %v1786, %v2178
    %v2180 = vsel %vm576, %v2179, %v2175
    %v2181 = vlaneseq
    %v2182 = vshrl.u32 %v2181, 7
    %v2183 = vsub.s32 %v578, %v2182
    %v2184 = vrot.slane %v1789, %v2183
    %v2185 = vsel %vm583, %v2184, %v2180
    %v2186 = vlaneseq
    %v2187 = vshrl.u32 %v2186, 7
    %v2188 = vsub.s32 %v517, %v2187
    %v2189 = vrot.slane %v1792, %v2188
    %v2190 = vlaneseq
    %v2191 = vshrl.u32 %v2190, 7
    %v2192 = vsub.s32 %v522, %v2191
    %v2193 = vrot.slane %v1795, %v2192
    %v2194 = vsel %vm527, %v2193, %v2189
    %v2195 = vlaneseq
    %v2196 = vshrl.u32 %v2195, 7
    %v2197 = vsub.s32 %v529, %v2196
    %v2198 = vrot.slane %v1798, %v2197
    %v2199 = vsel %vm534, %v2198, %v2194
    %v2200 = vlaneseq
    %v2201 = vshrl.u32 %v2200, 7
    %v2202 = vsub.s32 %v536, %v2201
    %v2203 = vrot.slane %v1801, %v2202
    %v2204 = vsel %vm541, %v2203, %v2199
    %v2205 = vlaneseq
    %v2206 = vshrl.u32 %v2205, 7
    %v2207 = vsub.s32 %v543, %v2206
    %v2208 = vrot.slane %v1804, %v2207
    %v2209 = vsel %vm548, %v2208, %v2204
    %v2210 = vlaneseq
    %v2211 = vshrl.u32 %v2210, 7
    %v2212 = vsub.s32 %v550, %v2211
    %v2213 = vrot.slane %v1807, %v2212
    %v2214 = vsel %vm555, %v2213, %v2209
    %v2215 = vlaneseq
    %v2216 = vshrl.u32 %v2215, 7
    %v2217 = vsub.s32 %v557, %v2216
    %v2218 = vrot.slane %v1810, %v2217
    %v2219 = vsel %vm562, %v2218, %v2214
    %v2220 = vlaneseq
    %v2221 = vshrl.u32 %v2220, 7
    %v2222 = vsub.s32 %v564, %v2221
    %v2223 = vrot.slane %v1813, %v2222
    %v2224 = vsel %vm569, %v2223, %v2219
    %v2225 = vlaneseq
    %v2226 = vshrl.u32 %v2225, 7
    %v2227 = vsub.s32 %v571, %v2226
    %v2228 = vrot.slane %v1816, %v2227
    %v2229 = vsel %vm576, %v2228, %v2224
    %v2230 = vlaneseq
    %v2231 = vshrl.u32 %v2230, 7
    %v2232 = vsub.s32 %v578, %v2231
    %v2233 = vrot.slane %v1819, %v2232
    %v2234 = vsel %vm583, %v2233, %v2229
    %v2235 = vlaneseq
    %v2236 = vshrl.u32 %v2235, 7
    %v2237 = vsub.s32 %v517, %v2236
    %v2238 = vrot.slane %v1822, %v2237
    %v2239 = vlaneseq
    %v2240 = vshrl.u32 %v2239, 7
    %v2241 = vsub.s32 %v522, %v2240
    %v2242 = vrot.slane %v1825, %v2241
    %v2243 = vsel %vm527, %v2242, %v2238
    %v2244 = vlaneseq
    %v2245 = vshrl.u32 %v2244, 7
    %v2246 = vsub.s32 %v529, %v2245
    %v2247 = vrot.slane %v1828, %v2246
    %v2248 = vsel %vm534, %v2247, %v2243
    %v2249 = vlaneseq
    %v2250 = vshrl.u32 %v2249, 7
    %v2251 = vsub.s32 %v536, %v2250
    %v2252 = vrot.slane %v1831, %v2251
    %v2253 = vsel %vm541, %v2252, %v2248
    %v2254 = vlaneseq
    %v2255 = vshrl.u32 %v2254, 7
    %v2256 = vsub.s32 %v543, %v2255
    %v2257 = vrot.slane %v1834, %v2256
    %v2258 = vsel %vm548, %v2257, %v2253
    %v2259 = vlaneseq
    %v2260 = vshrl.u32 %v2259, 7
    %v2261 = vsub.s32 %v550, %v2260
    %v2262 = vrot.slane %v1837, %v2261
    %v2263 = vsel %vm555, %v2262, %v2258
    %v2264 = vlaneseq
    %v2265 = vshrl.u32 %v2264, 7
    %v2266 = vsub.s32 %v557, %v2265
    %v2267 = vrot.slane %v1840, %v2266
    %v2268 = vsel %vm562, %v2267, %v2263
    %v2269 = vlaneseq
    %v2270 = vshrl.u32 %v2269, 7
    %v2271 = vsub.s32 %v564, %v2270
    %v2272 = vrot.slane %v1843, %v2271
    %v2273 = vsel %vm569, %v2272, %v2268
    %v2274 = vlaneseq
    %v2275 = vshrl.u32 %v2274, 7
    %v2276 = vsub.s32 %v571, %v2275
    %v2277 = vrot.slane %v1846, %v2276
    %v2278 = vsel %vm576, %v2277, %v2273
    %v2279 = vlaneseq
    %v2280 = vshrl.u32 %v2279, 7
    %v2281 = vsub.s32 %v578, %v2280
    %v2282 = vrot.slane %v1849, %v2281
    %v2283 = vsel %vm583, %v2282, %v2278
    %v2284 = vlaneseq
    %v2285 = vshrl.u32 %v2284, 7
    %v2286 = vsub.s32 %v517, %v2285
    %v2287 = vrot.slane %v1852, %v2286
    %v2288 = vlaneseq
    %v2289 = vshrl.u32 %v2288, 7
    %v2290 = vsub.s32 %v522, %v2289
    %v2291 = vrot.slane %v1855, %v2290
    %v2292 = vsel %vm527, %v2291, %v2287
    %v2293 = vlaneseq
    %v2294 = vshrl.u32 %v2293, 7
    %v2295 = vsub.s32 %v529, %v2294
    %v2296 = vrot.slane %v1858, %v2295
    %v2297 = vsel %vm534, %v2296, %v2292
    %v2298 = vlaneseq
    %v2299 = vshrl.u32 %v2298, 7
    %v2300 = vsub.s32 %v536, %v2299
    %v2301 = vrot.slane %v1861, %v2300
    %v2302 = vsel %vm541, %v2301, %v2297
    %v2303 = vlaneseq
    %v2304 = vshrl.u32 %v2303, 7
    %v2305 = vsub.s32 %v543, %v2304
    %v2306 = vrot.slane %v1864, %v2305
    %v2307 = vsel %vm548, %v2306, %v2302
    %v2308 = vlaneseq
    %v2309 = vshrl.u32 %v2308, 7
    %v2310 = vsub.s32 %v550, %v2309
    %v2311 = vrot.slane %v1867, %v2310
    %v2312 = vsel %vm555, %v2311, %v2307
    %v2313 = vlaneseq
    %v2314 = vshrl.u32 %v2313, 7
    %v2315 = vsub.s32 %v557, %v2314
    %v2316 = vrot.slane %v1870, %v2315
    %v2317 = vsel %vm562, %v2316, %v2312
    %v2318 = vlaneseq
    %v2319 = vshrl.u32 %v2318, 7
    %v2320 = vsub.s32 %v564, %v2319
    %v2321 = vrot.slane %v1873, %v2320
    %v2322 = vsel %vm569, %v2321, %v2317
    %v2323 = vlaneseq
    %v2324 = vshrl.u32 %v2323, 7
    %v2325 = vsub.s32 %v571, %v2324
    %v2326 = vrot.slane %v1876, %v2325
    %v2327 = vsel %vm576, %v2326, %v2322
    %v2328 = vlaneseq
    %v2329 = vshrl.u32 %v2328, 7
    %v2330 = vsub.s32 %v578, %v2329
    %v2331 = vrot.slane %v1879, %v2330
    %v2332 = vsel %vm583, %v2331, %v2327
    %v2333 = vlaneseq
    %v2334 = vshrl.u32 %v2333, 7
    %v2335 = vsub.s32 %v517, %v2334
    %v2336 = vrot.slane %v1882, %v2335
    %v2337 = vlaneseq
    %v2338 = vshrl.u32 %v2337, 7
    %v2339 = vsub.s32 %v522, %v2338
    %v2340 = vrot.slane %v1885, %v2339
    %v2341 = vsel %vm527, %v2340, %v2336
    %v2342 = vlaneseq
    %v2343 = vshrl.u32 %v2342, 7
    %v2344 = vsub.s32 %v529, %v2343
    %v2345 = vrot.slane %v1888, %v2344
    %v2346 = vsel %vm534, %v2345, %v2341
    %v2347 = vlaneseq
    %v2348 = vshrl.u32 %v2347, 7
    %v2349 = vsub.s32 %v536, %v2348
    %v2350 = vrot.slane %v1891, %v2349
    %v2351 = vsel %vm541, %v2350, %v2346
    %v2352 = vlaneseq
    %v2353 = vshrl.u32 %v2352, 7
    %v2354 = vsub.s32 %v543, %v2353
    %v2355 = vrot.slane %v1894, %v2354
    %v2356 = vsel %vm548, %v2355, %v2351
    %v2357 = vlaneseq
    %v2358 = vshrl.u32 %v2357, 7
    %v2359 = vsub.s32 %v550, %v2358
    %v2360 = vrot.slane %v1897, %v2359
    %v2361 = vsel %vm555, %v2360, %v2356
    %v2362 = vlaneseq
    %v2363 = vshrl.u32 %v2362, 7
    %v2364 = vsub.s32 %v557, %v2363
    %v2365 = vrot.slane %v1900, %v2364
    %v2366 = vsel %vm562, %v2365, %v2361
    %v2367 = vlaneseq
    %v2368 = vshrl.u32 %v2367, 7
    %v2369 = vsub.s32 %v564, %v2368
    %v2370 = vrot.slane %v1903, %v2369
    %v2371 = vsel %vm569, %v2370, %v2366
    %v2372 = vlaneseq
    %v2373 = vshrl.u32 %v2372, 7
    %v2374 = vsub.s32 %v571, %v2373
    %v2375 = vrot.slane %v1906, %v2374
    %v2376 = vsel %vm576, %v2375, %v2371
    %v2377 = vlaneseq
    %v2378 = vshrl.u32 %v2377, 7
    %v2379 = vsub.s32 %v578, %v2378
    %v2380 = vrot.slane %v1909, %v2379
    %v2381 = vsel %vm583, %v2380, %v2376
    %v2382 = vsel %vm928, %v2087, %v2038
    %v2383 = vsel %vm930, %v2136, %v2382
    %v2384 = vsel %vm932, %v2185, %v2383
    %v2385 = vsel %vm934, %v2234, %v2384
    %v2386 = vsel %vm936, %v2283, %v2385
    %v2387 = vsel %vm938, %v2332, %v2386
    %v2388 = vsel %vm940, %v2381, %v2387
    %v2390 = vmax.f32 %v1669, %v2388
    %2391 = vst.msk [vmem:[#allocation3] sm:$0xff] %vm944, %v2390
    %v2392 = vld [vmem:[#allocation5] sm:$0xff]
    %v2393 = vsel %vm194, %v113, -inf
    %2394 = vmax.xlane.f32.xlu0 %v2393
    %v2395 = vpop.xlane.xlu0 %2394
    %v2396 = vsel %vm194, %v114, -inf
    %2397 = vmax.xlane.f32.xlu0 %v2396
    %v2398 = vpop.xlane.xlu0 %2397
    %v2399 = vsel %vm194, %v115, -inf
    %2400 = vmax.xlane.f32.xlu0 %v2399
    %v2401 = vpop.xlane.xlu0 %2400
    %v2402 = vsel %vm194, %v116, -inf
    %2403 = vmax.xlane.f32.xlu0 %v2402
    %v2404 = vpop.xlane.xlu0 %2403
    %v2405 = vsel %vm194, %v117, -inf
    %2406 = vmax.xlane.f32.xlu0 %v2405
    %v2407 = vpop.xlane.xlu0 %2406
    %v2408 = vsel %vm194, %v118, -inf
    %2409 = vmax.xlane.f32.xlu0 %v2408
    %v2410 = vpop.xlane.xlu0 %2409
    %v2411 = vsel %vm194, %v119, -inf
    %2412 = vmax.xlane.f32.xlu0 %v2411
    %v2413 = vpop.xlane.xlu0 %2412
    %v2414 = vsel %vm194, %v120, -inf
    %2415 = vmax.xlane.f32.xlu0 %v2414
    %v2416 = vpop.xlane.xlu0 %2415
    %v2417 = vsel %vm194, %v121, -inf
    %2418 = vmax.xlane.f32.xlu0 %v2417
    %v2419 = vpop.xlane.xlu0 %2418
    %v2420 = vsel %vm222, %v122, -inf
    %2421 = vmax.xlane.f32.xlu0 %v2420
    %v2422 = vpop.xlane.xlu0 %2421
    %v2423 = vsel %vm194, %v123, -inf
    %2424 = vmax.xlane.f32.xlu0 %v2423
    %v2425 = vpop.xlane.xlu0 %2424
    %v2426 = vsel %vm194, %v124, -inf
    %2427 = vmax.xlane.f32.xlu0 %v2426
    %v2428 = vpop.xlane.xlu0 %2427
    %v2429 = vsel %vm194, %v125, -inf
    %2430 = vmax.xlane.f32.xlu0 %v2429
    %v2431 = vpop.xlane.xlu0 %2430
    %v2432 = vsel %vm194, %v126, -inf
    %2433 = vmax.xlane.f32.xlu0 %v2432
    %v2434 = vpop.xlane.xlu0 %2433
    %v2435 = vsel %vm194, %v127, -inf
    %2436 = vmax.xlane.f32.xlu0 %v2435
    %v2437 = vpop.xlane.xlu0 %2436
    %v2438 = vsel %vm194, %v128, -inf
    %2439 = vmax.xlane.f32.xlu0 %v2438
    %v2440 = vpop.xlane.xlu0 %2439
    %v2441 = vsel %vm194, %v129, -inf
    %2442 = vmax.xlane.f32.xlu0 %v2441
    %v2443 = vpop.xlane.xlu0 %2442
    %v2444 = vsel %vm194, %v130, -inf
    %2445 = vmax.xlane.f32.xlu0 %v2444
    %v2446 = vpop.xlane.xlu0 %2445
    %v2447 = vsel %vm194, %v131, -inf
    %2448 = vmax.xlane.f32.xlu0 %v2447
    %v2449 = vpop.xlane.xlu0 %2448
    %v2450 = vsel %vm222, %v132, -inf
    %2451 = vmax.xlane.f32.xlu0 %v2450
    %v2452 = vpop.xlane.xlu0 %2451
    %v2453 = vsel %vm194, %v133, -inf
    %2454 = vmax.xlane.f32.xlu0 %v2453
    %v2455 = vpop.xlane.xlu0 %2454
    %v2456 = vsel %vm194, %v134, -inf
    %2457 = vmax.xlane.f32.xlu0 %v2456
    %v2458 = vpop.xlane.xlu0 %2457
    %v2459 = vsel %vm194, %v135, -inf
    %2460 = vmax.xlane.f32.xlu0 %v2459
    %v2461 = vpop.xlane.xlu0 %2460
    %v2462 = vsel %vm194, %v136, -inf
    %2463 = vmax.xlane.f32.xlu0 %v2462
    %v2464 = vpop.xlane.xlu0 %2463
    %v2465 = vsel %vm194, %v137, -inf
    %2466 = vmax.xlane.f32.xlu0 %v2465
    %v2467 = vpop.xlane.xlu0 %2466
    %v2468 = vsel %vm194, %v138, -inf
    %2469 = vmax.xlane.f32.xlu0 %v2468
    %v2470 = vpop.xlane.xlu0 %2469
    %v2471 = vsel %vm194, %v139, -inf
    %2472 = vmax.xlane.f32.xlu0 %v2471
    %v2473 = vpop.xlane.xlu0 %2472
    %v2474 = vsel %vm194, %v140, -inf
    %2475 = vmax.xlane.f32.xlu0 %v2474
    %v2476 = vpop.xlane.xlu0 %2475
    %v2477 = vsel %vm194, %v141, -inf
    %2478 = vmax.xlane.f32.xlu0 %v2477
    %v2479 = vpop.xlane.xlu0 %2478
    %v2480 = vsel %vm222, %v142, -inf
    %2481 = vmax.xlane.f32.xlu0 %v2480
    %v2482 = vpop.xlane.xlu0 %2481
    %v2483 = vsel %vm194, %v143, -inf
    %2484 = vmax.xlane.f32.xlu0 %v2483
    %v2485 = vpop.xlane.xlu0 %2484
    %v2486 = vsel %vm194, %v144, -inf
    %2487 = vmax.xlane.f32.xlu0 %v2486
    %v2488 = vpop.xlane.xlu0 %2487
    %v2489 = vsel %vm194, %v145, -inf
    %2490 = vmax.xlane.f32.xlu0 %v2489
    %v2491 = vpop.xlane.xlu0 %2490
    %v2492 = vsel %vm194, %v146, -inf
    %2493 = vmax.xlane.f32.xlu0 %v2492
    %v2494 = vpop.xlane.xlu0 %2493
    %v2495 = vsel %vm194, %v147, -inf
    %2496 = vmax.xlane.f32.xlu0 %v2495
    %v2497 = vpop.xlane.xlu0 %2496
    %v2498 = vsel %vm194, %v148, -inf
    %2499 = vmax.xlane.f32.xlu0 %v2498
    %v2500 = vpop.xlane.xlu0 %2499
    %v2501 = vsel %vm194, %v149, -inf
    %2502 = vmax.xlane.f32.xlu0 %v2501
    %v2503 = vpop.xlane.xlu0 %2502
    %v2504 = vsel %vm194, %v150, -inf
    %2505 = vmax.xlane.f32.xlu0 %v2504
    %v2506 = vpop.xlane.xlu0 %2505
    %v2507 = vsel %vm194, %v151, -inf
    %2508 = vmax.xlane.f32.xlu0 %v2507
    %v2509 = vpop.xlane.xlu0 %2508
    %v2510 = vsel %vm222, %v152, -inf
    %2511 = vmax.xlane.f32.xlu0 %v2510
    %v2512 = vpop.xlane.xlu0 %2511
    %v2513 = vsel %vm194, %v153, -inf
    %2514 = vmax.xlane.f32.xlu0 %v2513
    %v2515 = vpop.xlane.xlu0 %2514
    %v2516 = vsel %vm194, %v154, -inf
    %2517 = vmax.xlane.f32.xlu0 %v2516
    %v2518 = vpop.xlane.xlu0 %2517
    %v2519 = vsel %vm194, %v155, -inf
    %2520 = vmax.xlane.f32.xlu0 %v2519
    %v2521 = vpop.xlane.xlu0 %2520
    %v2522 = vsel %vm194, %v156, -inf
    %2523 = vmax.xlane.f32.xlu0 %v2522
    %v2524 = vpop.xlane.xlu0 %2523
    %v2525 = vsel %vm194, %v157, -inf
    %2526 = vmax.xlane.f32.xlu0 %v2525
    %v2527 = vpop.xlane.xlu0 %2526
    %v2528 = vsel %vm194, %v158, -inf
    %2529 = vmax.xlane.f32.xlu0 %v2528
    %v2530 = vpop.xlane.xlu0 %2529
    %v2531 = vsel %vm194, %v159, -inf
    %2532 = vmax.xlane.f32.xlu0 %v2531
    %v2533 = vpop.xlane.xlu0 %2532
    %v2534 = vsel %vm194, %v160, -inf
    %2535 = vmax.xlane.f32.xlu0 %v2534
    %v2536 = vpop.xlane.xlu0 %2535
    %v2537 = vsel %vm194, %v161, -inf
    %2538 = vmax.xlane.f32.xlu0 %v2537
    %v2539 = vpop.xlane.xlu0 %2538
    %v2540 = vsel %vm222, %v162, -inf
    %2541 = vmax.xlane.f32.xlu0 %v2540
    %v2542 = vpop.xlane.xlu0 %2541
    %v2543 = vsel %vm194, %v163, -inf
    %2544 = vmax.xlane.f32.xlu0 %v2543
    %v2545 = vpop.xlane.xlu0 %2544
    %v2546 = vsel %vm194, %v164, -inf
    %2547 = vmax.xlane.f32.xlu0 %v2546
    %v2548 = vpop.xlane.xlu0 %2547
    %v2549 = vsel %vm194, %v165, -inf
    %2550 = vmax.xlane.f32.xlu0 %v2549
    %v2551 = vpop.xlane.xlu0 %2550
    %v2552 = vsel %vm194, %v166, -inf
    %2553 = vmax.xlane.f32.xlu0 %v2552
    %v2554 = vpop.xlane.xlu0 %2553
    %v2555 = vsel %vm194, %v167, -inf
    %2556 = vmax.xlane.f32.xlu0 %v2555
    %v2557 = vpop.xlane.xlu0 %2556
    %v2558 = vsel %vm194, %v168, -inf
    %2559 = vmax.xlane.f32.xlu0 %v2558
    %v2560 = vpop.xlane.xlu0 %2559
    %v2561 = vsel %vm194, %v169, -inf
    %2562 = vmax.xlane.f32.xlu0 %v2561
    %v2563 = vpop.xlane.xlu0 %2562
    %v2564 = vsel %vm194, %v170, -inf
    %2565 = vmax.xlane.f32.xlu0 %v2564
    %v2566 = vpop.xlane.xlu0 %2565
    %v2567 = vsel %vm194, %v171, -inf
    %2568 = vmax.xlane.f32.xlu0 %v2567
    %v2569 = vpop.xlane.xlu0 %2568
    %v2570 = vsel %vm222, %v172, -inf
    %2571 = vmax.xlane.f32.xlu0 %v2570
    %v2572 = vpop.xlane.xlu0 %2571
    %v2573 = vsel %vm194, %v173, -inf
    %2574 = vmax.xlane.f32.xlu0 %v2573
    %v2575 = vpop.xlane.xlu0 %2574
    %v2576 = vsel %vm194, %v174, -inf
    %2577 = vmax.xlane.f32.xlu0 %v2576
    %v2578 = vpop.xlane.xlu0 %2577
    %v2579 = vsel %vm194, %v175, -inf
    %2580 = vmax.xlane.f32.xlu0 %v2579
    %v2581 = vpop.xlane.xlu0 %2580
    %v2582 = vsel %vm194, %v176, -inf
    %2583 = vmax.xlane.f32.xlu0 %v2582
    %v2584 = vpop.xlane.xlu0 %2583
    %v2585 = vsel %vm194, %v177, -inf
    %2586 = vmax.xlane.f32.xlu0 %v2585
    %v2587 = vpop.xlane.xlu0 %2586
    %v2588 = vsel %vm194, %v178, -inf
    %2589 = vmax.xlane.f32.xlu0 %v2588
    %v2590 = vpop.xlane.xlu0 %2589
    %v2591 = vsel %vm194, %v179, -inf
    %2592 = vmax.xlane.f32.xlu0 %v2591
    %v2593 = vpop.xlane.xlu0 %2592
    %v2594 = vsel %vm194, %v180, -inf
    %2595 = vmax.xlane.f32.xlu0 %v2594
    %v2596 = vpop.xlane.xlu0 %2595
    %v2597 = vsel %vm194, %v181, -inf
    %2598 = vmax.xlane.f32.xlu0 %v2597
    %v2599 = vpop.xlane.xlu0 %2598
    %v2600 = vsel %vm222, %v182, -inf
    %2601 = vmax.xlane.f32.xlu0 %v2600
    %v2602 = vpop.xlane.xlu0 %2601
    %v2603 = vsel %vm194, %v183, -inf
    %2604 = vmax.xlane.f32.xlu0 %v2603
    %v2605 = vpop.xlane.xlu0 %2604
    %v2606 = vsel %vm194, %v184, -inf
    %2607 = vmax.xlane.f32.xlu0 %v2606
    %v2608 = vpop.xlane.xlu0 %2607
    %v2609 = vsel %vm194, %v185, -inf
    %2610 = vmax.xlane.f32.xlu0 %v2609
    %v2611 = vpop.xlane.xlu0 %2610
    %v2612 = vsel %vm194, %v186, -inf
    %2613 = vmax.xlane.f32.xlu0 %v2612
    %v2614 = vpop.xlane.xlu0 %2613
    %v2615 = vsel %vm194, %v187, -inf
    %2616 = vmax.xlane.f32.xlu0 %v2615
    %v2617 = vpop.xlane.xlu0 %2616
    %v2618 = vsel %vm194, %v188, -inf
    %2619 = vmax.xlane.f32.xlu0 %v2618
    %v2620 = vpop.xlane.xlu0 %2619
    %v2621 = vsel %vm194, %v189, -inf
    %2622 = vmax.xlane.f32.xlu0 %v2621
    %v2623 = vpop.xlane.xlu0 %2622
    %v2624 = vsel %vm194, %v190, -inf
    %2625 = vmax.xlane.f32.xlu0 %v2624
    %v2626 = vpop.xlane.xlu0 %2625
    %v2627 = vsel %vm194, %v191, -inf
    %2628 = vmax.xlane.f32.xlu0 %v2627
    %v2629 = vpop.xlane.xlu0 %2628
    %v2630 = vsel %vm222, %v192, -inf
    %2631 = vmax.xlane.f32.xlu0 %v2630
    %v2632 = vpop.xlane.xlu0 %2631
    %v2713 = vlaneseq
    %v2714 = vshrl.u32 %v2713, 7
    %v2715 = vsub.s32 %v517, %v2714
    %v2716 = vrot.slane %v2395, %v2715
    %v2717 = vlaneseq
    %v2718 = vshrl.u32 %v2717, 7
    %v2719 = vsub.s32 %v522, %v2718
    %v2720 = vrot.slane %v2398, %v2719
    %v2721 = vsel %vm527, %v2720, %v2716
    %v2722 = vlaneseq
    %v2723 = vshrl.u32 %v2722, 7
    %v2724 = vsub.s32 %v529, %v2723
    %v2725 = vrot.slane %v2401, %v2724
    %v2726 = vsel %vm534, %v2725, %v2721
    %v2727 = vlaneseq
    %v2728 = vshrl.u32 %v2727, 7
    %v2729 = vsub.s32 %v536, %v2728
    %v2730 = vrot.slane %v2404, %v2729
    %v2731 = vsel %vm541, %v2730, %v2726
    %v2732 = vlaneseq
    %v2733 = vshrl.u32 %v2732, 7
    %v2734 = vsub.s32 %v543, %v2733
    %v2735 = vrot.slane %v2407, %v2734
    %v2736 = vsel %vm548, %v2735, %v2731
    %v2737 = vlaneseq
    %v2738 = vshrl.u32 %v2737, 7
    %v2739 = vsub.s32 %v550, %v2738
    %v2740 = vrot.slane %v2410, %v2739
    %v2741 = vsel %vm555, %v2740, %v2736
    %v2742 = vlaneseq
    %v2743 = vshrl.u32 %v2742, 7
    %v2744 = vsub.s32 %v557, %v2743
    %v2745 = vrot.slane %v2413, %v2744
    %v2746 = vsel %vm562, %v2745, %v2741
    %v2747 = vlaneseq
    %v2748 = vshrl.u32 %v2747, 7
    %v2749 = vsub.s32 %v564, %v2748
    %v2750 = vrot.slane %v2416, %v2749
    %v2751 = vsel %vm569, %v2750, %v2746
    %v2752 = vlaneseq
    %v2753 = vshrl.u32 %v2752, 7
    %v2754 = vsub.s32 %v571, %v2753
    %v2755 = vrot.slane %v2419, %v2754
    %v2756 = vsel %vm576, %v2755, %v2751
    %v2757 = vlaneseq
    %v2758 = vshrl.u32 %v2757, 7
    %v2759 = vsub.s32 %v578, %v2758
    %v2760 = vrot.slane %v2422, %v2759
    %v2761 = vsel %vm583, %v2760, %v2756
    %v2762 = vlaneseq
    %v2763 = vshrl.u32 %v2762, 7
    %v2764 = vsub.s32 %v517, %v2763
    %v2765 = vrot.slane %v2425, %v2764
    %v2766 = vlaneseq
    %v2767 = vshrl.u32 %v2766, 7
    %v2768 = vsub.s32 %v522, %v2767
    %v2769 = vrot.slane %v2428, %v2768
    %v2770 = vsel %vm527, %v2769, %v2765
    %v2771 = vlaneseq
    %v2772 = vshrl.u32 %v2771, 7
    %v2773 = vsub.s32 %v529, %v2772
    %v2774 = vrot.slane %v2431, %v2773
    %v2775 = vsel %vm534, %v2774, %v2770
    %v2776 = vlaneseq
    %v2777 = vshrl.u32 %v2776, 7
    %v2778 = vsub.s32 %v536, %v2777
    %v2779 = vrot.slane %v2434, %v2778
    %v2780 = vsel %vm541, %v2779, %v2775
    %v2781 = vlaneseq
    %v2782 = vshrl.u32 %v2781, 7
    %v2783 = vsub.s32 %v543, %v2782
    %v2784 = vrot.slane %v2437, %v2783
    %v2785 = vsel %vm548, %v2784, %v2780
    %v2786 = vlaneseq
    %v2787 = vshrl.u32 %v2786, 7
    %v2788 = vsub.s32 %v550, %v2787
    %v2789 = vrot.slane %v2440, %v2788
    %v2790 = vsel %vm555, %v2789, %v2785
    %v2791 = vlaneseq
    %v2792 = vshrl.u32 %v2791, 7
    %v2793 = vsub.s32 %v557, %v2792
    %v2794 = vrot.slane %v2443, %v2793
    %v2795 = vsel %vm562, %v2794, %v2790
    %v2796 = vlaneseq
    %v2797 = vshrl.u32 %v2796, 7
    %v2798 = vsub.s32 %v564, %v2797
    %v2799 = vrot.slane %v2446, %v2798
    %v2800 = vsel %vm569, %v2799, %v2795
    %v2801 = vlaneseq
    %v2802 = vshrl.u32 %v2801, 7
    %v2803 = vsub.s32 %v571, %v2802
    %v2804 = vrot.slane %v2449, %v2803
    %v2805 = vsel %vm576, %v2804, %v2800
    %v2806 = vlaneseq
    %v2807 = vshrl.u32 %v2806, 7
    %v2808 = vsub.s32 %v578, %v2807
    %v2809 = vrot.slane %v2452, %v2808
    %v2810 = vsel %vm583, %v2809, %v2805
    %v2811 = vlaneseq
    %v2812 = vshrl.u32 %v2811, 7
    %v2813 = vsub.s32 %v517, %v2812
    %v2814 = vrot.slane %v2455, %v2813
    %v2815 = vlaneseq
    %v2816 = vshrl.u32 %v2815, 7
    %v2817 = vsub.s32 %v522, %v2816
    %v2818 = vrot.slane %v2458, %v2817
    %v2819 = vsel %vm527, %v2818, %v2814
    %v2820 = vlaneseq
    %v2821 = vshrl.u32 %v2820, 7
    %v2822 = vsub.s32 %v529, %v2821
    %v2823 = vrot.slane %v2461, %v2822
    %v2824 = vsel %vm534, %v2823, %v2819
    %v2825 = vlaneseq
    %v2826 = vshrl.u32 %v2825, 7
    %v2827 = vsub.s32 %v536, %v2826
    %v2828 = vrot.slane %v2464, %v2827
    %v2829 = vsel %vm541, %v2828, %v2824
    %v2830 = vlaneseq
    %v2831 = vshrl.u32 %v2830, 7
    %v2832 = vsub.s32 %v543, %v2831
    %v2833 = vrot.slane %v2467, %v2832
    %v2834 = vsel %vm548, %v2833, %v2829
    %v2835 = vlaneseq
    %v2836 = vshrl.u32 %v2835, 7
    %v2837 = vsub.s32 %v550, %v2836
    %v2838 = vrot.slane %v2470, %v2837
    %v2839 = vsel %vm555, %v2838, %v2834
    %v2840 = vlaneseq
    %v2841 = vshrl.u32 %v2840, 7
    %v2842 = vsub.s32 %v557, %v2841
    %v2843 = vrot.slane %v2473, %v2842
    %v2844 = vsel %vm562, %v2843, %v2839
    %v2845 = vlaneseq
    %v2846 = vshrl.u32 %v2845, 7
    %v2847 = vsub.s32 %v564, %v2846
    %v2848 = vrot.slane %v2476, %v2847
    %v2849 = vsel %vm569, %v2848, %v2844
    %v2850 = vlaneseq
    %v2851 = vshrl.u32 %v2850, 7
    %v2852 = vsub.s32 %v571, %v2851
    %v2853 = vrot.slane %v2479, %v2852
    %v2854 = vsel %vm576, %v2853, %v2849
    %v2855 = vlaneseq
    %v2856 = vshrl.u32 %v2855, 7
    %v2857 = vsub.s32 %v578, %v2856
    %v2858 = vrot.slane %v2482, %v2857
    %v2859 = vsel %vm583, %v2858, %v2854
    %v2860 = vlaneseq
    %v2861 = vshrl.u32 %v2860, 7
    %v2862 = vsub.s32 %v517, %v2861
    %v2863 = vrot.slane %v2485, %v2862
    %v2864 = vlaneseq
    %v2865 = vshrl.u32 %v2864, 7
    %v2866 = vsub.s32 %v522, %v2865
    %v2867 = vrot.slane %v2488, %v2866
    %v2868 = vsel %vm527, %v2867, %v2863
    %v2869 = vlaneseq
    %v2870 = vshrl.u32 %v2869, 7
    %v2871 = vsub.s32 %v529, %v2870
    %v2872 = vrot.slane %v2491, %v2871
    %v2873 = vsel %vm534, %v2872, %v2868
    %v2874 = vlaneseq
    %v2875 = vshrl.u32 %v2874, 7
    %v2876 = vsub.s32 %v536, %v2875
    %v2877 = vrot.slane %v2494, %v2876
    %v2878 = vsel %vm541, %v2877, %v2873
    %v2879 = vlaneseq
    %v2880 = vshrl.u32 %v2879, 7
    %v2881 = vsub.s32 %v543, %v2880
    %v2882 = vrot.slane %v2497, %v2881
    %v2883 = vsel %vm548, %v2882, %v2878
    %v2884 = vlaneseq
    %v2885 = vshrl.u32 %v2884, 7
    %v2886 = vsub.s32 %v550, %v2885
    %v2887 = vrot.slane %v2500, %v2886
    %v2888 = vsel %vm555, %v2887, %v2883
    %v2889 = vlaneseq
    %v2890 = vshrl.u32 %v2889, 7
    %v2891 = vsub.s32 %v557, %v2890
    %v2892 = vrot.slane %v2503, %v2891
    %v2893 = vsel %vm562, %v2892, %v2888
    %v2894 = vlaneseq
    %v2895 = vshrl.u32 %v2894, 7
    %v2896 = vsub.s32 %v564, %v2895
    %v2897 = vrot.slane %v2506, %v2896
    %v2898 = vsel %vm569, %v2897, %v2893
    %v2899 = vlaneseq
    %v2900 = vshrl.u32 %v2899, 7
    %v2901 = vsub.s32 %v571, %v2900
    %v2902 = vrot.slane %v2509, %v2901
    %v2903 = vsel %vm576, %v2902, %v2898
    %v2904 = vlaneseq
    %v2905 = vshrl.u32 %v2904, 7
    %v2906 = vsub.s32 %v578, %v2905
    %v2907 = vrot.slane %v2512, %v2906
    %v2908 = vsel %vm583, %v2907, %v2903
    %v2909 = vlaneseq
    %v2910 = vshrl.u32 %v2909, 7
    %v2911 = vsub.s32 %v517, %v2910
    %v2912 = vrot.slane %v2515, %v2911
    %v2913 = vlaneseq
    %v2914 = vshrl.u32 %v2913, 7
    %v2915 = vsub.s32 %v522, %v2914
    %v2916 = vrot.slane %v2518, %v2915
    %v2917 = vsel %vm527, %v2916, %v2912
    %v2918 = vlaneseq
    %v2919 = vshrl.u32 %v2918, 7
    %v2920 = vsub.s32 %v529, %v2919
    %v2921 = vrot.slane %v2521, %v2920
    %v2922 = vsel %vm534, %v2921, %v2917
    %v2923 = vlaneseq
    %v2924 = vshrl.u32 %v2923, 7
    %v2925 = vsub.s32 %v536, %v2924
    %v2926 = vrot.slane %v2524, %v2925
    %v2927 = vsel %vm541, %v2926, %v2922
    %v2928 = vlaneseq
    %v2929 = vshrl.u32 %v2928, 7
    %v2930 = vsub.s32 %v543, %v2929
    %v2931 = vrot.slane %v2527, %v2930
    %v2932 = vsel %vm548, %v2931, %v2927
    %v2933 = vlaneseq
    %v2934 = vshrl.u32 %v2933, 7
    %v2935 = vsub.s32 %v550, %v2934
    %v2936 = vrot.slane %v2530, %v2935
    %v2937 = vsel %vm555, %v2936, %v2932
    %v2938 = vlaneseq
    %v2939 = vshrl.u32 %v2938, 7
    %v2940 = vsub.s32 %v557, %v2939
    %v2941 = vrot.slane %v2533, %v2940
    %v2942 = vsel %vm562, %v2941, %v2937
    %v2943 = vlaneseq
    %v2944 = vshrl.u32 %v2943, 7
    %v2945 = vsub.s32 %v564, %v2944
    %v2946 = vrot.slane %v2536, %v2945
    %v2947 = vsel %vm569, %v2946, %v2942
    %v2948 = vlaneseq
    %v2949 = vshrl.u32 %v2948, 7
    %v2950 = vsub.s32 %v571, %v2949
    %v2951 = vrot.slane %v2539, %v2950
    %v2952 = vsel %vm576, %v2951, %v2947
    %v2953 = vlaneseq
    %v2954 = vshrl.u32 %v2953, 7
    %v2955 = vsub.s32 %v578, %v2954
    %v2956 = vrot.slane %v2542, %v2955
    %v2957 = vsel %vm583, %v2956, %v2952
    %v2958 = vlaneseq
    %v2959 = vshrl.u32 %v2958, 7
    %v2960 = vsub.s32 %v517, %v2959
    %v2961 = vrot.slane %v2545, %v2960
    %v2962 = vlaneseq
    %v2963 = vshrl.u32 %v2962, 7
    %v2964 = vsub.s32 %v522, %v2963
    %v2965 = vrot.slane %v2548, %v2964
    %v2966 = vsel %vm527, %v2965, %v2961
    %v2967 = vlaneseq
    %v2968 = vshrl.u32 %v2967, 7
    %v2969 = vsub.s32 %v529, %v2968
    %v2970 = vrot.slane %v2551, %v2969
    %v2971 = vsel %vm534, %v2970, %v2966
    %v2972 = vlaneseq
    %v2973 = vshrl.u32 %v2972, 7
    %v2974 = vsub.s32 %v536, %v2973
    %v2975 = vrot.slane %v2554, %v2974
    %v2976 = vsel %vm541, %v2975, %v2971
    %v2977 = vlaneseq
    %v2978 = vshrl.u32 %v2977, 7
    %v2979 = vsub.s32 %v543, %v2978
    %v2980 = vrot.slane %v2557, %v2979
    %v2981 = vsel %vm548, %v2980, %v2976
    %v2982 = vlaneseq
    %v2983 = vshrl.u32 %v2982, 7
    %v2984 = vsub.s32 %v550, %v2983
    %v2985 = vrot.slane %v2560, %v2984
    %v2986 = vsel %vm555, %v2985, %v2981
    %v2987 = vlaneseq
    %v2988 = vshrl.u32 %v2987, 7
    %v2989 = vsub.s32 %v557, %v2988
    %v2990 = vrot.slane %v2563, %v2989
    %v2991 = vsel %vm562, %v2990, %v2986
    %v2992 = vlaneseq
    %v2993 = vshrl.u32 %v2992, 7
    %v2994 = vsub.s32 %v564, %v2993
    %v2995 = vrot.slane %v2566, %v2994
    %v2996 = vsel %vm569, %v2995, %v2991
    %v2997 = vlaneseq
    %v2998 = vshrl.u32 %v2997, 7
    %v2999 = vsub.s32 %v571, %v2998
    %v3000 = vrot.slane %v2569, %v2999
    %v3001 = vsel %vm576, %v3000, %v2996
    %v3002 = vlaneseq
    %v3003 = vshrl.u32 %v3002, 7
    %v3004 = vsub.s32 %v578, %v3003
    %v3005 = vrot.slane %v2572, %v3004
    %v3006 = vsel %vm583, %v3005, %v3001
    %v3007 = vlaneseq
    %v3008 = vshrl.u32 %v3007, 7
    %v3009 = vsub.s32 %v517, %v3008
    %v3010 = vrot.slane %v2575, %v3009
    %v3011 = vlaneseq
    %v3012 = vshrl.u32 %v3011, 7
    %v3013 = vsub.s32 %v522, %v3012
    %v3014 = vrot.slane %v2578, %v3013
    %v3015 = vsel %vm527, %v3014, %v3010
    %v3016 = vlaneseq
    %v3017 = vshrl.u32 %v3016, 7
    %v3018 = vsub.s32 %v529, %v3017
    %v3019 = vrot.slane %v2581, %v3018
    %v3020 = vsel %vm534, %v3019, %v3015
    %v3021 = vlaneseq
    %v3022 = vshrl.u32 %v3021, 7
    %v3023 = vsub.s32 %v536, %v3022
    %v3024 = vrot.slane %v2584, %v3023
    %v3025 = vsel %vm541, %v3024, %v3020
    %v3026 = vlaneseq
    %v3027 = vshrl.u32 %v3026, 7
    %v3028 = vsub.s32 %v543, %v3027
    %v3029 = vrot.slane %v2587, %v3028
    %v3030 = vsel %vm548, %v3029, %v3025
    %v3031 = vlaneseq
    %v3032 = vshrl.u32 %v3031, 7
    %v3033 = vsub.s32 %v550, %v3032
    %v3034 = vrot.slane %v2590, %v3033
    %v3035 = vsel %vm555, %v3034, %v3030
    %v3036 = vlaneseq
    %v3037 = vshrl.u32 %v3036, 7
    %v3038 = vsub.s32 %v557, %v3037
    %v3039 = vrot.slane %v2593, %v3038
    %v3040 = vsel %vm562, %v3039, %v3035
    %v3041 = vlaneseq
    %v3042 = vshrl.u32 %v3041, 7
    %v3043 = vsub.s32 %v564, %v3042
    %v3044 = vrot.slane %v2596, %v3043
    %v3045 = vsel %vm569, %v3044, %v3040
    %v3046 = vlaneseq
    %v3047 = vshrl.u32 %v3046, 7
    %v3048 = vsub.s32 %v571, %v3047
    %v3049 = vrot.slane %v2599, %v3048
    %v3050 = vsel %vm576, %v3049, %v3045
    %v3051 = vlaneseq
    %v3052 = vshrl.u32 %v3051, 7
    %v3053 = vsub.s32 %v578, %v3052
    %v3054 = vrot.slane %v2602, %v3053
    %v3055 = vsel %vm583, %v3054, %v3050
    %v3056 = vlaneseq
    %v3057 = vshrl.u32 %v3056, 7
    %v3058 = vsub.s32 %v517, %v3057
    %v3059 = vrot.slane %v2605, %v3058
    %v3060 = vlaneseq
    %v3061 = vshrl.u32 %v3060, 7
    %v3062 = vsub.s32 %v522, %v3061
    %v3063 = vrot.slane %v2608, %v3062
    %v3064 = vsel %vm527, %v3063, %v3059
    %v3065 = vlaneseq
    %v3066 = vshrl.u32 %v3065, 7
    %v3067 = vsub.s32 %v529, %v3066
    %v3068 = vrot.slane %v2611, %v3067
    %v3069 = vsel %vm534, %v3068, %v3064
    %v3070 = vlaneseq
    %v3071 = vshrl.u32 %v3070, 7
    %v3072 = vsub.s32 %v536, %v3071
    %v3073 = vrot.slane %v2614, %v3072
    %v3074 = vsel %vm541, %v3073, %v3069
    %v3075 = vlaneseq
    %v3076 = vshrl.u32 %v3075, 7
    %v3077 = vsub.s32 %v543, %v3076
    %v3078 = vrot.slane %v2617, %v3077
    %v3079 = vsel %vm548, %v3078, %v3074
    %v3080 = vlaneseq
    %v3081 = vshrl.u32 %v3080, 7
    %v3082 = vsub.s32 %v550, %v3081
    %v3083 = vrot.slane %v2620, %v3082
    %v3084 = vsel %vm555, %v3083, %v3079
    %v3085 = vlaneseq
    %v3086 = vshrl.u32 %v3085, 7
    %v3087 = vsub.s32 %v557, %v3086
    %v3088 = vrot.slane %v2623, %v3087
    %v3089 = vsel %vm562, %v3088, %v3084
    %v3090 = vlaneseq
    %v3091 = vshrl.u32 %v3090, 7
    %v3092 = vsub.s32 %v564, %v3091
    %v3093 = vrot.slane %v2626, %v3092
    %v3094 = vsel %vm569, %v3093, %v3089
    %v3095 = vlaneseq
    %v3096 = vshrl.u32 %v3095, 7
    %v3097 = vsub.s32 %v571, %v3096
    %v3098 = vrot.slane %v2629, %v3097
    %v3099 = vsel %vm576, %v3098, %v3094
    %v3100 = vlaneseq
    %v3101 = vshrl.u32 %v3100, 7
    %v3102 = vsub.s32 %v578, %v3101
    %v3103 = vrot.slane %v2632, %v3102
    %v3104 = vsel %vm583, %v3103, %v3099
    %v3105 = vsel %vm928, %v2810, %v2761
    %v3106 = vsel %vm930, %v2859, %v3105
    %v3107 = vsel %vm932, %v2908, %v3106
    %v3108 = vsel %vm934, %v2957, %v3107
    %v3109 = vsel %vm936, %v3006, %v3108
    %v3110 = vsel %vm938, %v3055, %v3109
    %v3111 = vsel %vm940, %v3104, %v3110
    %v3113 = vmax.f32 %v2392, %v3111
    %3114 = vst.msk [vmem:[#allocation5] sm:$0xff] %vm944, %v3113
    // Predicated region
    $region30: #{tpu_custom_call.1} parent=1 // pred_check
      %p3115 = pneg %p24
    $region31: #{tpu_custom_call.1} parent=1 // pred_check_branch
      %3117 = sbr.rel (%p3115) target = $region33
    $region32: #{tpu_custom_call.1} parent=1 // pred_region
      %v3118 = vld [vmem:[#allocation2] sm:$0xff]
      %v3119 = vmul.f32 %v3118, 0.0625
      %v3120 = vld [vmem:[#allocation4] sm:$0xff]
      %v3121 = vmul.f32 %v3120, 0.0625
      %v3122 = vld [vmem:[%s2] sm:$0xff]
      %v3123 = vld [vmem:[%s2 + $0x8] sm:$0xff]
      %v3124 = vld [vmem:[%s2 + $0x10] sm:$0xff]
      %v3125 = vld [vmem:[%s2 + $0x18] sm:$0xff]
      %v3126 = vld [vmem:[%s2 + $0x20] sm:$0xff]
      %v3127 = vld [vmem:[%s2 + $0x28] sm:$0xff]
      %v3128 = vld [vmem:[%s2 + $0x30] sm:$0xff]
      %v3129 = vld [vmem:[%s2 + $0x38] sm:$0xff]
      %v3130 = vld [vmem:[%s2 + $0x40] sm:$0xff]
      %v3131 = vld [vmem:[%s2 + $0x48] sm:$0x3f]
      %v3132 = vld [vmem:[#allocation3] sm:$0xff]
      %s3133 = scalar_lea.vmem %s2, 80
      %v3134 = vld [vmem:[%s3133] sm:$0xff]
      %v3135 = vld [vmem:[%s3133 + $0x8] sm:$0xff]
      %v3136 = vld [vmem:[%s3133 + $0x10] sm:$0xff]
      %v3137 = vld [vmem:[%s3133 + $0x18] sm:$0xff]
      %v3138 = vld [vmem:[%s3133 + $0x20] sm:$0xff]
      %v3139 = vld [vmem:[%s3133 + $0x28] sm:$0xff]
      %v3140 = vld [vmem:[%s3133 + $0x30] sm:$0xff]
      %v3141 = vld [vmem:[%s3133 + $0x38] sm:$0xff]
      %v3142 = vld [vmem:[%s3133 + $0x40] sm:$0xff]
      %v3143 = vld [vmem:[%s3133 + $0x48] sm:$0x3f]
      %v3145 = vsel %vm944, %v3132, 0
      %vm3147 = vcmask 1045504
      %v3149 = vsel %vm3147, %v3143, 0
      %3151 = vmatprep.subr.mxu0 0.0
      %3152 = vmatpush1.msra.mxu0 0.0
      %3153 = vmatprep.subr.mxu0 0.0
      %3154 = vmatpush1.msra.mxu0 0.0
      %3155 = vmatprep.subr.mxu0 0.0
      %3156 = vmatpush1.msra.mxu0 0.0
      %3157 = vmatprep.subr.mxu0 0.0
      %3158 = vmatpush1.msra.mxu0 0.0
      %3159 = vmatprep.subr.mxu0 0.0
      %3160 = vmatpush1.msra.mxu0 0.0
      %3161 = vmatprep.subr.mxu0 0.0
      %3162 = vmatpush1.msra.mxu0 0.0
      %3163 = vmatprep.subr.mxu0 0.0
      %3164 = vmatpush1.msra.mxu0 %v3149
      %3165 = vmatprep.subr.mxu0 0.0
      %3166 = vmatpush1.msra.mxu0 %v3142
      %3167 = vmatprep.subr.mxu0 0.0
      %3168 = vmatpush1.msra.mxu0 %v3141
      %3169 = vmatprep.subr.mxu0 0.0
      %3170 = vmatpush1.msra.mxu0 %v3140
      %3171 = vmatprep.subr.mxu0 0.0
      %3172 = vmatpush1.msra.mxu0 %v3139
      %3173 = vmatprep.subr.mxu0 0.0
      %3174 = vmatpush1.msra.mxu0 %v3138
      %3175 = vmatprep.subr.mxu0 0.0
      %3176 = vmatpush1.msra.mxu0 %v3137
      %3177 = vmatprep.subr.mxu0 0.0
      %3178 = vmatpush1.msra.mxu0 %v3136
      %3179 = vmatprep.subr.mxu0 0.0
      %3180 = vmatpush1.msra.mxu0 %v3135
      %3181 = vmatprep.subr.mxu0 0.0
      %3182 = vmatpush1.msra.mxu0 %v3134
      %3183 = vmatprep.subr.mxu0 0.0
      %3184 = vmatpush2.msra.mxu0 0.0
      %3185 = vmatprep.subr.mxu0 0.0
      %3186 = vmatpush2.msra.mxu0 0.0
      %3187 = vmatprep.subr.mxu0 0.0
      %3188 = vmatpush2.msra.mxu0 0.0
      %3189 = vmatprep.subr.mxu0 0.0
      %3190 = vmatpush2.msra.mxu0 0.0
      %3191 = vmatprep.subr.mxu0 0.0
      %3192 = vmatpush2.msra.mxu0 0.0
      %3193 = vmatprep.subr.mxu0 0.0
      %3194 = vmatpush2.msra.mxu0 0.0
      %3195 = vmatprep.subr.mxu0 0.0
      %3196 = vmatpush2.msra.mxu0 0.0
      %3197 = vmatprep.subr.mxu0 0.0
      %3198 = vmatpush2.msra.mxu0 0.0
      %3199 = vmatprep.subr.mxu0 0.0
      %3200 = vmatpush2.msra.mxu0 0.0
      %3201 = vmatprep.subr.mxu0 0.0
      %3202 = vmatpush2.msra.mxu0 0.0
      %3203 = vmatprep.subr.mxu0 0.0
      %3204 = vmatpush2.msra.mxu0 0.0
      %3205 = vmatprep.subr.mxu0 0.0
      %3206 = vmatpush2.msra.mxu0 0.0
      %3207 = vmatprep.subr.mxu0 0.0
      %3208 = vmatpush2.msra.mxu0 0.0
      %3209 = vmatprep.subr.mxu0 0.0
      %3210 = vmatpush2.msra.mxu0 0.0
      %3211 = vmatprep.subr.mxu0 0.0
      %3212 = vmatpush2.msra.mxu0 0.0
      %3213 = vmatprep.subr.mxu0 0.0
      %3214 = vmatpush2.msra.mxu0 0.0
      %3215 = vmatprep.mubr.f32.mxu0 0.0
      %3216 = vmatmul.mubr.f32.gmra.mxu0 %v3145
      %v3217 = vpop.f32.mrf.mxu0
      %v3218 = vadd.f32 0.0, %v3217
      %v3219 = vpop.f32.mrf.mxu0
      %3220 = vdwg.mxu0
      %v3222 = vsel %vm944, %v3119, 0
      %v3225 = vsel %vm3147, %v3131, 0
      %3227 = vmatprep.subr.mxu0 0.0
      %3228 = vmatpush1.msra.mxu0 0.0
      %3229 = vmatprep.subr.mxu0 0.0
      %3230 = vmatpush1.msra.mxu0 0.0
      %3231 = vmatprep.subr.mxu0 0.0
      %3232 = vmatpush1.msra.mxu0 0.0
      %3233 = vmatprep.subr.mxu0 0.0
      %3234 = vmatpush1.msra.mxu0 0.0
      %3235 = vmatprep.subr.mxu0 0.0
      %3236 = vmatpush1.msra.mxu0 0.0
      %3237 = vmatprep.subr.mxu0 0.0
      %3238 = vmatpush1.msra.mxu0 0.0
      %3239 = vmatprep.subr.mxu0 0.0
      %3240 = vmatpush1.msra.mxu0 %v3225
      %3241 = vmatprep.subr.mxu0 0.0
      %3242 = vmatpush1.msra.mxu0 %v3130
      %3243 = vmatprep.subr.mxu0 0.0
      %3244 = vmatpush1.msra.mxu0 %v3129
      %3245 = vmatprep.subr.mxu0 0.0
      %3246 = vmatpush1.msra.mxu0 %v3128
      %3247 = vmatprep.subr.mxu0 0.0
      %3248 = vmatpush1.msra.mxu0 %v3127
      %3249 = vmatprep.subr.mxu0 0.0
      %3250 = vmatpush1.msra.mxu0 %v3126
      %3251 = vmatprep.subr.mxu0 0.0
      %3252 = vmatpush1.msra.mxu0 %v3125
      %3253 = vmatprep.subr.mxu0 0.0
      %3254 = vmatpush1.msra.mxu0 %v3124
      %3255 = vmatprep.subr.mxu0 0.0
      %3256 = vmatpush1.msra.mxu0 %v3123
      %3257 = vmatprep.subr.mxu0 0.0
      %3258 = vmatpush1.msra.mxu0 %v3122
      %3259 = vmatprep.subr.mxu0 0.0
      %3260 = vmatpush2.msra.mxu0 0.0
      %3261 = vmatprep.subr.mxu0 0.0
      %3262 = vmatpush2.msra.mxu0 0.0
      %3263 = vmatprep.subr.mxu0 0.0
      %3264 = vmatpush2.msra.mxu0 0.0
      %3265 = vmatprep.subr.mxu0 0.0
      %3266 = vmatpush2.msra.mxu0 0.0
      %3267 = vmatprep.subr.mxu0 0.0
      %3268 = vmatpush2.msra.mxu0 0.0
      %3269 = vmatprep.subr.mxu0 0.0
      %3270 = vmatpush2.msra.mxu0 0.0
      %3271 = vmatprep.subr.mxu0 0.0
      %3272 = vmatpush2.msra.mxu0 0.0
      %3273 = vmatprep.subr.mxu0 0.0
      %3274 = vmatpush2.msra.mxu0 0.0
      %3275 = vmatprep.subr.mxu0 0.0
      %3276 = vmatpush2.msra.mxu0 0.0
      %3277 = vmatprep.subr.mxu0 0.0
      %3278 = vmatpush2.msra.mxu0 0.0
      %3279 = vmatprep.subr.mxu0 0.0
      %3280 = vmatpush2.msra.mxu0 0.0
      %3281 = vmatprep.subr.mxu0 0.0
      %3282 = vmatpush2.msra.mxu0 0.0
      %3283 = vmatprep.subr.mxu0 0.0
      %3284 = vmatpush2.msra.mxu0 0.0
      %3285 = vmatprep.subr.mxu0 0.0
      %3286 = vmatpush2.msra.mxu0 0.0
      %3287 = vmatprep.subr.mxu0 0.0
      %3288 = vmatpush2.msra.mxu0 0.0
      %3289 = vmatprep.subr.mxu0 0.0
      %3290 = vmatpush2.msra.mxu0 0.0
      %3291 = vmatprep.mubr.f32.mxu0 0.0
      %3292 = vmatmul.mubr.f32.gmra.mxu0 %v3222
      %v3293 = vpop.f32.mrf.mxu0
      %v3294 = vadd.f32 %v3218, %v3293
      %v3295 = vpop.f32.mrf.mxu0
      %3296 = vdwg.mxu0
      %s3297 = scalar_lea.vmem %s2, 160
      %v3298 = vld [vmem:[%s3297] sm:$0xff]
      %v3299 = vld [vmem:[%s3297 + $0x8] sm:$0xff]
      %v3300 = vld [vmem:[%s3297 + $0x10] sm:$0xff]
      %v3301 = vld [vmem:[%s3297 + $0x18] sm:$0xff]
      %v3302 = vld [vmem:[%s3297 + $0x20] sm:$0xff]
      %v3303 = vld [vmem:[%s3297 + $0x28] sm:$0xff]
      %v3304 = vld [vmem:[%s3297 + $0x30] sm:$0xff]
      %v3305 = vld [vmem:[%s3297 + $0x38] sm:$0xff]
      %v3306 = vld [vmem:[%s3297 + $0x40] sm:$0xff]
      %v3307 = vld [vmem:[%s3297 + $0x48] sm:$0x3f]
      %v3309 = vsel %vm944, %v3121, 0
      %v3312 = vsel %vm3147, %v3307, 0
      %3314 = vmatprep.subr.mxu0 0.0
      %3315 = vmatpush1.msra.mxu0 0.0
      %3316 = vmatprep.subr.mxu0 0.0
      %3317 = vmatpush1.msra.mxu0 0.0
      %3318 = vmatprep.subr.mxu0 0.0
      %3319 = vmatpush1.msra.mxu0 0.0
      %3320 = vmatprep.subr.mxu0 0.0
      %3321 = vmatpush1.msra.mxu0 0.0
      %3322 = vmatprep.subr.mxu0 0.0
      %3323 = vmatpush1.msra.mxu0 0.0
      %3324 = vmatprep.subr.mxu0 0.0
      %3325 = vmatpush1.msra.mxu0 0.0
      %3326 = vmatprep.subr.mxu0 0.0
      %3327 = vmatpush1.msra.mxu0 %v3312
      %3328 = vmatprep.subr.mxu0 0.0
      %3329 = vmatpush1.msra.mxu0 %v3306
      %3330 = vmatprep.subr.mxu0 0.0
      %3331 = vmatpush1.msra.mxu0 %v3305
      %3332 = vmatprep.subr.mxu0 0.0
      %3333 = vmatpush1.msra.mxu0 %v3304
      %3334 = vmatprep.subr.mxu0 0.0
      %3335 = vmatpush1.msra.mxu0 %v3303
      %3336 = vmatprep.subr.mxu0 0.0
      %3337 = vmatpush1.msra.mxu0 %v3302
      %3338 = vmatprep.subr.mxu0 0.0
      %3339 = vmatpush1.msra.mxu0 %v3301
      %3340 = vmatprep.subr.mxu0 0.0
      %3341 = vmatpush1.msra.mxu0 %v3300
      %3342 = vmatprep.subr.mxu0 0.0
      %3343 = vmatpush1.msra.mxu0 %v3299
      %3344 = vmatprep.subr.mxu0 0.0
      %3345 = vmatpush1.msra.mxu0 %v3298
      %3346 = vmatprep.subr.mxu0 0.0
      %3347 = vmatpush2.msra.mxu0 0.0
      %3348 = vmatprep.subr.mxu0 0.0
      %3349 = vmatpush2.msra.mxu0 0.0
      %3350 = vmatprep.subr.mxu0 0.0
      %3351 = vmatpush2.msra.mxu0 0.0
      %3352 = vmatprep.subr.mxu0 0.0
      %3353 = vmatpush2.msra.mxu0 0.0
      %3354 = vmatprep.subr.mxu0 0.0
      %3355 = vmatpush2.msra.mxu0 0.0
      %3356 = vmatprep.subr.mxu0 0.0
      %3357 = vmatpush2.msra.mxu0 0.0
      %3358 = vmatprep.subr.mxu0 0.0
      %3359 = vmatpush2.msra.mxu0 0.0
      %3360 = vmatprep.subr.mxu0 0.0
      %3361 = vmatpush2.msra.mxu0 0.0
      %3362 = vmatprep.subr.mxu0 0.0
      %3363 = vmatpush2.msra.mxu0 0.0
      %3364 = vmatprep.subr.mxu0 0.0
      %3365 = vmatpush2.msra.mxu0 0.0
      %3366 = vmatprep.subr.mxu0 0.0
      %3367 = vmatpush2.msra.mxu0 0.0
      %3368 = vmatprep.subr.mxu0 0.0
      %3369 = vmatpush2.msra.mxu0 0.0
      %3370 = vmatprep.subr.mxu0 0.0
      %3371 = vmatpush2.msra.mxu0 0.0
      %3372 = vmatprep.subr.mxu0 0.0
      %3373 = vmatpush2.msra.mxu0 0.0
      %3374 = vmatprep.subr.mxu0 0.0
      %3375 = vmatpush2.msra.mxu0 0.0
      %3376 = vmatprep.subr.mxu0 0.0
      %3377 = vmatpush2.msra.mxu0 0.0
      %3378 = vmatprep.mubr.f32.mxu0 0.0
      %3379 = vmatmul.mubr.f32.gmra.mxu0 %v3309
      %v3380 = vpop.f32.mrf.mxu0
      %v3381 = vadd.f32 0.0, %v3380
      %v3382 = vpop.f32.mrf.mxu0
      %3383 = vdwg.mxu0
      %v3384 = vadd.f32 %v3294, %v3381
      %v3385 = vld [vmem:[#allocation5] sm:$0xff]
      %s3386 = scalar_lea.vmem %s2, 240
      %v3387 = vld [vmem:[%s3386] sm:$0xff]
      %v3388 = vld [vmem:[%s3386 + $0x8] sm:$0xff]
      %v3389 = vld [vmem:[%s3386 + $0x10] sm:$0xff]
      %v3390 = vld [vmem:[%s3386 + $0x18] sm:$0xff]
      %v3391 = vld [vmem:[%s3386 + $0x20] sm:$0xff]
      %v3392 = vld [vmem:[%s3386 + $0x28] sm:$0xff]
      %v3393 = vld [vmem:[%s3386 + $0x30] sm:$0xff]
      %v3394 = vld [vmem:[%s3386 + $0x38] sm:$0xff]
      %v3395 = vld [vmem:[%s3386 + $0x40] sm:$0xff]
      %v3396 = vld [vmem:[%s3386 + $0x48] sm:$0x3f]
      %v3398 = vsel %vm944, %v3385, 0
      %v3401 = vsel %vm3147, %v3396, 0
      %3403 = vmatprep.subr.mxu0 0.0
      %3404 = vmatpush1.msra.mxu0 0.0
      %3405 = vmatprep.subr.mxu0 0.0
      %3406 = vmatpush1.msra.mxu0 0.0
      %3407 = vmatprep.subr.mxu0 0.0
      %3408 = vmatpush1.msra.mxu0 0.0
      %3409 = vmatprep.subr.mxu0 0.0
      %3410 = vmatpush1.msra.mxu0 0.0
      %3411 = vmatprep.subr.mxu0 0.0
      %3412 = vmatpush1.msra.mxu0 0.0
      %3413 = vmatprep.subr.mxu0 0.0
      %3414 = vmatpush1.msra.mxu0 0.0
      %3415 = vmatprep.subr.mxu0 0.0
      %3416 = vmatpush1.msra.mxu0 %v3401
      %3417 = vmatprep.subr.mxu0 0.0
      %3418 = vmatpush1.msra.mxu0 %v3395
      %3419 = vmatprep.subr.mxu0 0.0
      %3420 = vmatpush1.msra.mxu0 %v3394
      %3421 = vmatprep.subr.mxu0 0.0
      %3422 = vmatpush1.msra.mxu0 %v3393
      %3423 = vmatprep.subr.mxu0 0.0
      %3424 = vmatpush1.msra.mxu0 %v3392
      %3425 = vmatprep.subr.mxu0 0.0
      %3426 = vmatpush1.msra.mxu0 %v3391
      %3427 = vmatprep.subr.mxu0 0.0
      %3428 = vmatpush1.msra.mxu0 %v3390
      %3429 = vmatprep.subr.mxu0 0.0
      %3430 = vmatpush1.msra.mxu0 %v3389
      %3431 = vmatprep.subr.mxu0 0.0
      %3432 = vmatpush1.msra.mxu0 %v3388
      %3433 = vmatprep.subr.mxu0 0.0
      %3434 = vmatpush1.msra.mxu0 %v3387
      %3435 = vmatprep.subr.mxu0 0.0
      %3436 = vmatpush2.msra.mxu0 0.0
      %3437 = vmatprep.subr.mxu0 0.0
      %3438 = vmatpush2.msra.mxu0 0.0
      %3439 = vmatprep.subr.mxu0 0.0
      %3440 = vmatpush2.msra.mxu0 0.0
      %3441 = vmatprep.subr.mxu0 0.0
      %3442 = vmatpush2.msra.mxu0 0.0
      %3443 = vmatprep.subr.mxu0 0.0
      %3444 = vmatpush2.msra.mxu0 0.0
      %3445 = vmatprep.subr.mxu0 0.0
      %3446 = vmatpush2.msra.mxu0 0.0
      %3447 = vmatprep.subr.mxu0 0.0
      %3448 = vmatpush2.msra.mxu0 0.0
      %3449 = vmatprep.subr.mxu0 0.0
      %3450 = vmatpush2.msra.mxu0 0.0
      %3451 = vmatprep.subr.mxu0 0.0
      %3452 = vmatpush2.msra.mxu0 0.0
      %3453 = vmatprep.subr.mxu0 0.0
      %3454 = vmatpush2.msra.mxu0 0.0
      %3455 = vmatprep.subr.mxu0 0.0
      %3456 = vmatpush2.msra.mxu0 0.0
      %3457 = vmatprep.subr.mxu0 0.0
      %3458 = vmatpush2.msra.mxu0 0.0
      %3459 = vmatprep.subr.mxu0 0.0
      %3460 = vmatpush2.msra.mxu0 0.0
      %3461 = vmatprep.subr.mxu0 0.0
      %3462 = vmatpush2.msra.mxu0 0.0
      %3463 = vmatprep.subr.mxu0 0.0
      %3464 = vmatpush2.msra.mxu0 0.0
      %3465 = vmatprep.subr.mxu0 0.0
      %3466 = vmatpush2.msra.mxu0 0.0
      %3467 = vmatprep.mubr.f32.mxu0 0.0
      %3468 = vmatmul.mubr.f32.gmra.mxu0 %v3398
      %v3469 = vpop.f32.mrf.mxu0
      %v3470 = vadd.f32 0.0, %v3469
      %v3471 = vpop.f32.mrf.mxu0
      %3472 = vdwg.mxu0
      %v3473 = vadd.f32 %v3384, %v3470
      %v3474 = vld [vmem:[%s3] sm:$0x1]
      %v3476 = vlaneseq
      %v3477 = vshrl.u32 %v3476, 7
      %v3478 = vsub.s32 0, %v3477
      %v3479 = vrot.slane %v3474, %v3478
      %v3481 = vadd.f32 %v3473, %v3479
      %v3482 = vtanh.pop %v3481
      %v3483 = vld [vmem:[%s4] sm:$0xff]
      %v3484 = vld [vmem:[%s4 + $0x8] sm:$0xff]
      %v3485 = vld [vmem:[%s4 + $0x10] sm:$0xff]
      %v3486 = vld [vmem:[%s4 + $0x18] sm:$0xff]
      %v3487 = vld [vmem:[%s4 + $0x20] sm:$0xff]
      %v3488 = vld [vmem:[%s4 + $0x28] sm:$0xff]
      %v3489 = vld [vmem:[%s4 + $0x30] sm:$0xff]
      %v3490 = vld [vmem:[%s4 + $0x38] sm:$0xff]
      %v3491 = vld [vmem:[%s4 + $0x40] sm:$0xff]
      %v3492 = vld [vmem:[%s4 + $0x48] sm:$0xff]
      %v3493 = vld [vmem:[%s4 + $0x50] sm:$0xff]
      %v3494 = vld [vmem:[%s4 + $0x58] sm:$0xff]
      %v3495 = vld [vmem:[%s4 + $0x60] sm:$0xff]
      %v3496 = vld [vmem:[%s4 + $0x68] sm:$0xff]
      %v3497 = vld [vmem:[%s4 + $0x70] sm:$0xff]
      %v3498 = vld [vmem:[%s4 + $0x78] sm:$0xff]
      %v3499 = vld [vmem:[%s5] sm:$0x1]
      %v3501 = vlaneseq
      %v3502 = vshrl.u32 %v3501, 7
      %v3503 = vsub.s32 0, %v3502
      %v3504 = vrot.slane %v3499, %v3503
      %3506 = vmatprep.subr.mxu0 0.0
      %3507 = vmatpush1.msra.mxu0 %v3498
      %3508 = vmatprep.subr.mxu0 0.0
      %3509 = vmatpush1.msra.mxu0 %v3497
      %3510 = vmatprep.subr.mxu0 0.0
      %3511 = vmatpush1.msra.mxu0 %v3496
      %3512 = vmatprep.subr.mxu0 0.0
      %3513 = vmatpush1.msra.mxu0 %v3495
      %3514 = vmatprep.subr.mxu0 0.0
      %3515 = vmatpush1.msra.mxu0 %v3494
      %3516 = vmatprep.subr.mxu0 0.0
      %3517 = vmatpush1.msra.mxu0 %v3493
      %3518 = vmatprep.subr.mxu0 0.0
      %3519 = vmatpush1.msra.mxu0 %v3492
      %3520 = vmatprep.subr.mxu0 0.0
      %3521 = vmatpush1.msra.mxu0 %v3491
      %3522 = vmatprep.subr.mxu0 0.0
      %3523 = vmatpush1.msra.mxu0 %v3490
      %3524 = vmatprep.subr.mxu0 0.0
      %3525 = vmatpush1.msra.mxu0 %v3489
      %3526 = vmatprep.subr.mxu0 0.0
      %3527 = vmatpush1.msra.mxu0 %v3488
      %3528 = vmatprep.subr.mxu0 0.0
      %3529 = vmatpush1.msra.mxu0 %v3487
      %3530 = vmatprep.subr.mxu0 0.0
      %3531 = vmatpush1.msra.mxu0 %v3486
      %3532 = vmatprep.subr.mxu0 0.0
      %3533 = vmatpush1.msra.mxu0 %v3485
      %3534 = vmatprep.subr.mxu0 0.0
      %3535 = vmatpush1.msra.mxu0 %v3484
      %3536 = vmatprep.subr.mxu0 0.0
      %3537 = vmatpush1.msra.mxu0 %v3483
      %3538 = vmatprep.subr.mxu0 0.0
      %3539 = vmatpush2.msra.mxu0 0.0
      %3540 = vmatprep.subr.mxu0 0.0
      %3541 = vmatpush2.msra.mxu0 0.0
      %3542 = vmatprep.subr.mxu0 0.0
      %3543 = vmatpush2.msra.mxu0 0.0
      %3544 = vmatprep.subr.mxu0 0.0
      %3545 = vmatpush2.msra.mxu0 0.0
      %3546 = vmatprep.subr.mxu0 0.0
      %3547 = vmatpush2.msra.mxu0 0.0
      %3548 = vmatprep.subr.mxu0 0.0
      %3549 = vmatpush2.msra.mxu0 0.0
      %3550 = vmatprep.subr.mxu0 0.0
      %3551 = vmatpush2.msra.mxu0 0.0
      %3552 = vmatprep.subr.mxu0 0.0
      %3553 = vmatpush2.msra.mxu0 0.0
      %3554 = vmatprep.subr.mxu0 0.0
      %3555 = vmatpush2.msra.mxu0 0.0
      %3556 = vmatprep.subr.mxu0 0.0
      %3557 = vmatpush2.msra.mxu0 0.0
      %3558 = vmatprep.subr.mxu0 0.0
      %3559 = vmatpush2.msra.mxu0 0.0
      %3560 = vmatprep.subr.mxu0 0.0
      %3561 = vmatpush2.msra.mxu0 0.0
      %3562 = vmatprep.subr.mxu0 0.0
      %3563 = vmatpush2.msra.mxu0 0.0
      %3564 = vmatprep.subr.mxu0 0.0
      %3565 = vmatpush2.msra.mxu0 0.0
      %3566 = vmatprep.subr.mxu0 0.0
      %3567 = vmatpush2.msra.mxu0 0.0
      %3568 = vmatprep.subr.mxu0 0.0
      %3569 = vmatpush2.msra.mxu0 0.0
      %3570 = vmatprep.mubr.f32.mxu0 0.0
      %3571 = vmatmul.mubr.f32.gmra.mxu0 %v3482
      %v3572 = vpop.f32.mrf.mxu0
      %v3573 = vadd.f32 %v3504, %v3572
      %v3574 = vpop.f32.mrf.mxu0
      %3575 = vdwg.mxu0
      %3576 = vst [vmem:[#allocation6] sm:$0xff] %v3573
    $region33: #{tpu_custom_call.1} parent=1 // pred_fallthru
      _
    // Predicated region
    $region34: #{tpu_custom_call.1} parent=1 // pred_check
      _
    $region35: #{tpu_custom_call.1} parent=1 // pred_check_branch
      %3578 = sbr.rel (0) target = $region37
    $region36: #{tpu_custom_call.1} parent=1 // pred_region
      %s3580 = ssub.s32 128, 128
      %3581 = vsyncadd [#allocation7], %s3580
      %s3583 = sshll.u32 [#allocation6], 4
      %s3584 = int_to_ptr.vmem [resolvable:$true] %s3583
      %3586 = dma.vmem_to_hbm [thread:$0]  %s3584, 128, %s6, [#allocation7]
    $region37: #{tpu_custom_call.1} parent=1 // pred_fallthru
      _
    // Predicated region
    $region38: #{tpu_custom_call.1} parent=1 // pred_check
      _
    $region39: #{tpu_custom_call.1} parent=1 // pred_check_branch
      %3588 = sbr.rel (0) target = $region41
    $region40: #{tpu_custom_call.1} parent=1 // pred_region
      %3589 = dma.done [#allocation7], 128
    $region41: #{tpu_custom_call.1} parent=1 // pred_fallthru
      _
    %3590 = vsyncpa [#allocation7], 1

</llo_original>
